<compile_context>
chip_gen: v7x
topology: tpu7x:2x2x1
jax: 0.10.0
libtpu: 0.0.40
codegen_flags: <defaults>
</compile_context>

<pallas_src>
import jax
import jax.numpy as jnp
from jax import lax
from jax.experimental import pallas as pl
from jax.experimental.pallas import tpu as pltpu


def tower_kernel(ids_ref, emb_ref, w1_ref, b1_ref, w2_ref, b2_ref, out_ref):
    """One batch tile: histogram-matmul embedding pool, FFN, L2-normalize."""
    ids = ids_ref[...]                                   # (TB, S) int32
    tb, seq = ids.shape
    vp = emb_ref.shape[0]                                # lane-padded vocab

    valid = ids > 0                                      # (TB, S) padding mask

    # ---- 1) Token histogram: counts[b, v] = #{s : ids[b,s] == v, v > 0} -----
    # Small static unroll over S (cheap VPU compares on (TB, Vp) tiles); the
    # padding token (id 0) is excluded so correctness never depends on emb[0].
    v_row = lax.broadcasted_iota(jnp.int32, (tb, vp), 1)       # (TB, Vp)
    counts = jnp.zeros((tb, vp), jnp.float32)
    for s in range(seq):                                       # S is small (8)
        tok = ids[:, s:s + 1]                                  # (TB, 1)
        hit = jnp.logical_and(v_row == tok, tok > 0)           # (TB, Vp)
        counts = counts + hit.astype(jnp.float32)

    # ---- 2) Masked mean pooling: sum_s emb[ids[b,s]]*mask == counts @ emb ---
    num = jnp.dot(counts, emb_ref[...], preferred_element_type=jnp.float32,
                  precision=lax.Precision.HIGHEST)             # (TB, Ep)
    den = jnp.sum(valid.astype(jnp.float32), axis=1, keepdims=True) + 1e-9
    pooled = num * pl.reciprocal(den, approx=False)            # (TB, Ep)

    # ---- 3) Linear -> ReLU -> Linear -> L2 normalize ------------------------
    h = jnp.dot(pooled, w1_ref[...], preferred_element_type=jnp.float32,
                precision=lax.Precision.HIGHEST) + b1_ref[...]
    h = jnp.maximum(h, 0.0)
    o = jnp.dot(h, w2_ref[...], preferred_element_type=jnp.float32,
                precision=lax.Precision.HIGHEST) + b2_ref[...]

    ss = jnp.sum(o * o, axis=-1, keepdims=True)                # (TB, 1)
    # F.normalize: o / max(||o||, 1e-12)  ==  o * rsqrt(max(ss, 1e-24))
    out_ref[...] = o * lax.rsqrt(jnp.maximum(ss, 1e-24))       # lane-dense store


def tower_forward(input_ids, emb, w1, b1, w2, b2, *, batch_tile=128):
    B, S = input_ids.shape
    V, E = emb.shape
    H = w2.shape[1]

    pad128 = lambda n: ((n + 127) // 128) * 128
    Vp, Ep, Hp = pad128(V), pad128(E), pad128(H)

    # Zero-pad every parameter to lane-dense shapes (exact: pads are zero).
    embp = jnp.zeros((Vp, Ep), jnp.float32).at[:V, :E].set(emb.astype(jnp.float32))
    w1p = jnp.zeros((Ep, Hp), jnp.float32).at[:E, :H].set(w1.astype(jnp.float32))
    b1p = jnp.zeros((1, Hp), jnp.float32).at[:, :H].set(
        jnp.asarray(b1, jnp.float32).reshape(1, H))
    w2p = jnp.zeros((Hp, Hp), jnp.float32).at[:H, :H].set(w2.astype(jnp.float32))
    b2p = jnp.zeros((1, Hp), jnp.float32).at[:, :H].set(
        jnp.asarray(b2, jnp.float32).reshape(1, H))

    # Pad batch to whole tiles (pad rows are all-zero ids -> sliced off below).
    num_tiles = -(-B // batch_tile)
    B_pad = num_tiles * batch_tile
    ids = jnp.clip(input_ids.astype(jnp.int32), 0, V - 1)   # bounds-safe lookup
    if B_pad != B:
        ids = jnp.pad(ids, ((0, B_pad - B), (0, 0)))

    grid_spec = pltpu.PrefetchScalarGridSpec(
        num_scalar_prefetch=0,
        grid=(num_tiles,),
        in_specs=[
            pl.BlockSpec((batch_tile, S), lambda i: (i, 0)),   # ids (VMEM)
            pl.BlockSpec((Vp, Ep), lambda i: (0, 0)),          # emb: VMEM-resident
            pl.BlockSpec((Ep, Hp), lambda i: (0, 0)),          # w1 (resident)
            pl.BlockSpec((1, Hp), lambda i: (0, 0)),           # b1
            pl.BlockSpec((Hp, Hp), lambda i: (0, 0)),          # w2
            pl.BlockSpec((1, Hp), lambda i: (0, 0)),           # b2
        ],
        out_specs=pl.BlockSpec((batch_tile, Hp), lambda i: (i, 0)),
    )

    out = pl.pallas_call(
        tower_kernel,
        out_shape=jax.ShapeDtypeStruct((B_pad, Hp), jnp.float32),
        grid_spec=grid_spec,
        compiler_params=pltpu.CompilerParams(
            dimension_semantics=("parallel",)),
    )(ids, embp, w1p, b1p, w2p, b2p)

    # Drop batch padding and lane padding.
    return out[:B, :H]


def tower_ref(ids, emb, w1, b1, w2, b2):
    """Pure-JAX reference of the PyTorch forward (f32-exact matmuls)."""
    mask = (ids > 0).astype(jnp.float32)[..., None]
    e = emb[ids] * mask
    pooled = e.sum(1) / (mask.sum(1) + 1e-9)
    h = jnp.maximum(
        jnp.dot(pooled, w1, precision=lax.Precision.HIGHEST) + b1, 0.0)
    o = jnp.dot(h, w2, precision=lax.Precision.HIGHEST) + b2
    n = jnp.sqrt(jnp.sum(o * o, axis=-1, keepdims=True))
    return o / jnp.maximum(n, 1e-12)


if __name__ == "__main__":
    # Small shapes consistent with the module.  B=200 exercises the multi-tile
    # grid (2 tiles of 128) and the batch-padding path (200 -> 256).
    B, S = 200, 8          # batch, seq
    V = 64                 # vocab_size
    E = 32                 # embedding_dim
    H = 32                 # hidden_dim

    key = jax.random.PRNGKey(0)
    k_ids, k_emb, k_w1, k_b1, k_w2, k_b2 = jax.random.split(key, 6)

    # Deterministic parameter init (shapes follow nn.Embedding / nn.Linear).
    emb = jax.random.normal(k_emb, (V, E), jnp.float32)
    emb = emb.at[0].set(0.0)                                  # padding_idx=0 row
    bound1 = 1.0 / (E ** 0.5)
    w1 = jax.random.uniform(k_w1, (E, H), jnp.float32, -bound1, bound1)
    b1 = jax.random.uniform(k_b1, (H,), jnp.float32, -bound1, bound1)
    bound2 = 1.0 / (H ** 0.5)
    w2 = jax.random.uniform(k_w2, (H, H), jnp.float32, -bound2, bound2)
    b2 = jax.random.uniform(k_b2, (H,), jnp.float32, -bound2, bound2)

    # input_ids with some padding zeros.
    input_ids = jax.random.randint(k_ids, (B, S), 0, V, jnp.int32)

    out = tower_forward(input_ids, emb, w1, b1, w2, b2)
    out = jax.block_until_ready(out)

    ref = tower_ref(input_ids, emb, w1, b1, w2, b2)
    assert out.shape == (B, H)
    assert jnp.allclose(out, ref, atol=2e-5, rtol=2e-5), "mismatch vs reference"

    print("KERNEL_OK")
</pallas_src>

<mosaic_0001>
module attributes {stable_mosaic.version = 11 : i64} {
  func.func @tower_kernel(%arg0: i32, %arg1: memref<128x8xi32, #tpu.memory_space<vmem>>, %arg2: memref<128x128xf32, #tpu.memory_space<vmem>>, %arg3: memref<128x128xf32, #tpu.memory_space<vmem>>, %arg4: memref<1x128xf32, #tpu.memory_space<vmem>>, %arg5: memref<128x128xf32, #tpu.memory_space<vmem>>, %arg6: memref<1x128xf32, #tpu.memory_space<vmem>>, %arg7: memref<128x128xf32, #tpu.memory_space<vmem>>) attributes {dimension_semantics = [#tpu.dimension_semantics<parallel>], iteration_bounds = array<i64: 2>, scalar_prefetch = 0 : i64, scratch_operands = 0 : i64, tpu.core_type = #tpu.core_type<tc>, window_params = [{transform_indices = @transform_0, window_bounds = array<i64: 128, 8>}, {pipeline_mode = #tpu.pipeline_mode<synchronous>, transform_indices = @transform_1, window_bounds = array<i64: 128, 128>}, {pipeline_mode = #tpu.pipeline_mode<synchronous>, transform_indices = @transform_2, window_bounds = array<i64: 128, 128>}, {pipeline_mode = #tpu.pipeline_mode<synchronous>, transform_indices = @transform_3, window_bounds = array<i64: 1, 128>}, {pipeline_mode = #tpu.pipeline_mode<synchronous>, transform_indices = @transform_4, window_bounds = array<i64: 128, 128>}, {pipeline_mode = #tpu.pipeline_mode<synchronous>, transform_indices = @transform_5, window_bounds = array<i64: 1, 128>}, {transform_indices = @transform_6, window_bounds = array<i64: 128, 128>}]} {
    %c0 = arith.constant 0 : index
    %c0_0 = arith.constant 0 : index
    %0 = vector.load %arg1[%c0, %c0_0] : memref<128x8xi32, #tpu.memory_space<vmem>>, vector<128x8xi32>
    %c0_i32 = arith.constant 0 : i32
    %1 = vector.broadcast %c0_i32 : i32 to vector<128x8xi32>
    %2 = arith.cmpi sgt, %0, %1 : vector<128x8xi32>
    %3 = tpu.iota {dimensions = array<i32: 1>} : vector<128x128xi32>
    %cst = arith.constant 0.000000e+00 : f32
    %4 = vector.broadcast %cst : f32 to vector<128x128xf32>
    %5 = vector.extract_strided_slice %0 {offsets = [0, 0], sizes = [128, 1], strides = [1, 1]} : vector<128x8xi32> to vector<128x1xi32>
    %6 = vector.broadcast %5 : vector<128x1xi32> to vector<128x128xi32>
    %7 = arith.cmpi eq, %3, %6 : vector<128x128xi32>
    %c0_i32_1 = arith.constant 0 : i32
    %8 = vector.broadcast %c0_i32_1 : i32 to vector<128x1xi32>
    %9 = arith.cmpi sgt, %5, %8 : vector<128x1xi32>
    %10 = vector.broadcast %9 : vector<128x1xi1> to vector<128x128xi1>
    %11 = arith.andi %7, %10 : vector<128x128xi1>
    %12 = arith.extui %11 : vector<128x128xi1> to vector<128x128xi32>
    %13 = arith.sitofp %12 : vector<128x128xi32> to vector<128x128xf32>
    %14 = arith.addf %4, %13 : vector<128x128xf32>
    %15 = vector.extract_strided_slice %0 {offsets = [0, 1], sizes = [128, 1], strides = [1, 1]} : vector<128x8xi32> to vector<128x1xi32>
    %16 = vector.broadcast %15 : vector<128x1xi32> to vector<128x128xi32>
    %17 = arith.cmpi eq, %3, %16 : vector<128x128xi32>
    %c0_i32_2 = arith.constant 0 : i32
    %18 = vector.broadcast %c0_i32_2 : i32 to vector<128x1xi32>
    %19 = arith.cmpi sgt, %15, %18 : vector<128x1xi32>
    %20 = vector.broadcast %19 : vector<128x1xi1> to vector<128x128xi1>
    %21 = arith.andi %17, %20 : vector<128x128xi1>
    %22 = arith.extui %21 : vector<128x128xi1> to vector<128x128xi32>
    %23 = arith.sitofp %22 : vector<128x128xi32> to vector<128x128xf32>
    %24 = arith.addf %14, %23 : vector<128x128xf32>
    %25 = vector.extract_strided_slice %0 {offsets = [0, 2], sizes = [128, 1], strides = [1, 1]} : vector<128x8xi32> to vector<128x1xi32>
    %26 = vector.broadcast %25 : vector<128x1xi32> to vector<128x128xi32>
    %27 = arith.cmpi eq, %3, %26 : vector<128x128xi32>
    %c0_i32_3 = arith.constant 0 : i32
    %28 = vector.broadcast %c0_i32_3 : i32 to vector<128x1xi32>
    %29 = arith.cmpi sgt, %25, %28 : vector<128x1xi32>
    %30 = vector.broadcast %29 : vector<128x1xi1> to vector<128x128xi1>
    %31 = arith.andi %27, %30 : vector<128x128xi1>
    %32 = arith.extui %31 : vector<128x128xi1> to vector<128x128xi32>
    %33 = arith.sitofp %32 : vector<128x128xi32> to vector<128x128xf32>
    %34 = arith.addf %24, %33 : vector<128x128xf32>
    %35 = vector.extract_strided_slice %0 {offsets = [0, 3], sizes = [128, 1], strides = [1, 1]} : vector<128x8xi32> to vector<128x1xi32>
    %36 = vector.broadcast %35 : vector<128x1xi32> to vector<128x128xi32>
    %37 = arith.cmpi eq, %3, %36 : vector<128x128xi32>
    %c0_i32_4 = arith.constant 0 : i32
    %38 = vector.broadcast %c0_i32_4 : i32 to vector<128x1xi32>
    %39 = arith.cmpi sgt, %35, %38 : vector<128x1xi32>
    %40 = vector.broadcast %39 : vector<128x1xi1> to vector<128x128xi1>
    %41 = arith.andi %37, %40 : vector<128x128xi1>
    %42 = arith.extui %41 : vector<128x128xi1> to vector<128x128xi32>
    %43 = arith.sitofp %42 : vector<128x128xi32> to vector<128x128xf32>
    %44 = arith.addf %34, %43 : vector<128x128xf32>
    %45 = vector.extract_strided_slice %0 {offsets = [0, 4], sizes = [128, 1], strides = [1, 1]} : vector<128x8xi32> to vector<128x1xi32>
    %46 = vector.broadcast %45 : vector<128x1xi32> to vector<128x128xi32>
    %47 = arith.cmpi eq, %3, %46 : vector<128x128xi32>
    %c0_i32_5 = arith.constant 0 : i32
    %48 = vector.broadcast %c0_i32_5 : i32 to vector<128x1xi32>
    %49 = arith.cmpi sgt, %45, %48 : vector<128x1xi32>
    %50 = vector.broadcast %49 : vector<128x1xi1> to vector<128x128xi1>
    %51 = arith.andi %47, %50 : vector<128x128xi1>
    %52 = arith.extui %51 : vector<128x128xi1> to vector<128x128xi32>
    %53 = arith.sitofp %52 : vector<128x128xi32> to vector<128x128xf32>
    %54 = arith.addf %44, %53 : vector<128x128xf32>
    %55 = vector.extract_strided_slice %0 {offsets = [0, 5], sizes = [128, 1], strides = [1, 1]} : vector<128x8xi32> to vector<128x1xi32>
    %56 = vector.broadcast %55 : vector<128x1xi32> to vector<128x128xi32>
    %57 = arith.cmpi eq, %3, %56 : vector<128x128xi32>
    %c0_i32_6 = arith.constant 0 : i32
    %58 = vector.broadcast %c0_i32_6 : i32 to vector<128x1xi32>
    %59 = arith.cmpi sgt, %55, %58 : vector<128x1xi32>
    %60 = vector.broadcast %59 : vector<128x1xi1> to vector<128x128xi1>
    %61 = arith.andi %57, %60 : vector<128x128xi1>
    %62 = arith.extui %61 : vector<128x128xi1> to vector<128x128xi32>
    %63 = arith.sitofp %62 : vector<128x128xi32> to vector<128x128xf32>
    %64 = arith.addf %54, %63 : vector<128x128xf32>
    %65 = vector.extract_strided_slice %0 {offsets = [0, 6], sizes = [128, 1], strides = [1, 1]} : vector<128x8xi32> to vector<128x1xi32>
    %66 = vector.broadcast %65 : vector<128x1xi32> to vector<128x128xi32>
    %67 = arith.cmpi eq, %3, %66 : vector<128x128xi32>
    %c0_i32_7 = arith.constant 0 : i32
    %68 = vector.broadcast %c0_i32_7 : i32 to vector<128x1xi32>
    %69 = arith.cmpi sgt, %65, %68 : vector<128x1xi32>
    %70 = vector.broadcast %69 : vector<128x1xi1> to vector<128x128xi1>
    %71 = arith.andi %67, %70 : vector<128x128xi1>
    %72 = arith.extui %71 : vector<128x128xi1> to vector<128x128xi32>
    %73 = arith.sitofp %72 : vector<128x128xi32> to vector<128x128xf32>
    %74 = arith.addf %64, %73 : vector<128x128xf32>
    %75 = vector.extract_strided_slice %0 {offsets = [0, 7], sizes = [128, 1], strides = [1, 1]} : vector<128x8xi32> to vector<128x1xi32>
    %76 = vector.broadcast %75 : vector<128x1xi32> to vector<128x128xi32>
    %77 = arith.cmpi eq, %3, %76 : vector<128x128xi32>
    %c0_i32_8 = arith.constant 0 : i32
    %78 = vector.broadcast %c0_i32_8 : i32 to vector<128x1xi32>
    %79 = arith.cmpi sgt, %75, %78 : vector<128x1xi32>
    %80 = vector.broadcast %79 : vector<128x1xi1> to vector<128x128xi1>
    %81 = arith.andi %77, %80 : vector<128x128xi1>
    %82 = arith.extui %81 : vector<128x128xi1> to vector<128x128xi32>
    %83 = arith.sitofp %82 : vector<128x128xi32> to vector<128x128xf32>
    %84 = arith.addf %74, %83 : vector<128x128xf32>
    %c0_9 = arith.constant 0 : index
    %c0_10 = arith.constant 0 : index
    %85 = vector.load %arg2[%c0_9, %c0_10] : memref<128x128xf32, #tpu.memory_space<vmem>>, vector<128x128xf32>
    %cst_11 = arith.constant dense<0.000000e+00> : vector<128x128xf32>
    %86 = tpu.matmul %84, %85, %cst_11 {dimension_numbers = #tpu.dot_dimension_numbers<[1], [0], [0], [1], [0, 0, 1, 1], [], []>, precision = #tpu.contract_precision<fp32>} : vector<128x128xf32>, vector<128x128xf32>, vector<128x128xf32> -> vector<128x128xf32>
    %87 = arith.extui %2 : vector<128x8xi1> to vector<128x8xi32>
    %88 = arith.sitofp %87 : vector<128x8xi32> to vector<128x8xf32>
    %cst_12 = arith.constant dense<0.000000e+00> : vector<128xf32>
    %89 = vector.multi_reduction <add>, %88, %cst_12 [1] : vector<128x8xf32> to vector<128xf32>
    %90 = vector.shape_cast %89 : vector<128xf32> to vector<128x1xf32>
    %cst_13 = arith.constant 9.99999971E-10 : f32
    %91 = vector.broadcast %cst_13 : f32 to vector<128x1xf32>
    %92 = arith.addf %90, %91 : vector<128x1xf32>
    %93 = tpu.reciprocal %92 : vector<128x1xf32> -> vector<128x1xf32>
    %94 = vector.broadcast %93 : vector<128x1xf32> to vector<128x128xf32>
    %95 = arith.mulf %86, %94 : vector<128x128xf32>
    %c0_14 = arith.constant 0 : index
    %c0_15 = arith.constant 0 : index
    %96 = vector.load %arg3[%c0_14, %c0_15] : memref<128x128xf32, #tpu.memory_space<vmem>>, vector<128x128xf32>
    %cst_16 = arith.constant dense<0.000000e+00> : vector<128x128xf32>
    %97 = tpu.matmul %95, %96, %cst_16 {dimension_numbers = #tpu.dot_dimension_numbers<[1], [0], [0], [1], [0, 0, 1, 1], [], []>, precision = #tpu.contract_precision<fp32>} : vector<128x128xf32>, vector<128x128xf32>, vector<128x128xf32> -> vector<128x128xf32>
    %c0_17 = arith.constant 0 : index
    %c0_18 = arith.constant 0 : index
    %98 = vector.load %arg4[%c0_17, %c0_18] : memref<1x128xf32, #tpu.memory_space<vmem>>, vector<1x128xf32>
    %99 = vector.broadcast %98 : vector<1x128xf32> to vector<128x128xf32>
    %100 = arith.addf %97, %99 : vector<128x128xf32>
    %cst_19 = arith.constant 0.000000e+00 : f32
    %101 = vector.broadcast %cst_19 : f32 to vector<128x128xf32>
    %102 = arith.maximumf %100, %101 : vector<128x128xf32>
    %c0_20 = arith.constant 0 : index
    %c0_21 = arith.constant 0 : index
    %103 = vector.load %arg5[%c0_20, %c0_21] : memref<128x128xf32, #tpu.memory_space<vmem>>, vector<128x128xf32>
    %cst_22 = arith.constant dense<0.000000e+00> : vector<128x128xf32>
    %104 = tpu.matmul %102, %103, %cst_22 {dimension_numbers = #tpu.dot_dimension_numbers<[1], [0], [0], [1], [0, 0, 1, 1], [], []>, precision = #tpu.contract_precision<fp32>} : vector<128x128xf32>, vector<128x128xf32>, vector<128x128xf32> -> vector<128x128xf32>
    %c0_23 = arith.constant 0 : index
    %c0_24 = arith.constant 0 : index
    %105 = vector.load %arg6[%c0_23, %c0_24] : memref<1x128xf32, #tpu.memory_space<vmem>>, vector<1x128xf32>
    %106 = vector.broadcast %105 : vector<1x128xf32> to vector<128x128xf32>
    %107 = arith.addf %104, %106 : vector<128x128xf32>
    %108 = arith.mulf %107, %107 : vector<128x128xf32>
    %cst_25 = arith.constant dense<0.000000e+00> : vector<128xf32>
    %109 = vector.multi_reduction <add>, %108, %cst_25 [1] : vector<128x128xf32> to vector<128xf32>
    %110 = vector.shape_cast %109 : vector<128xf32> to vector<128x1xf32>
    %cst_26 = arith.constant 1.000000e-24 : f32
    %111 = vector.broadcast %cst_26 : f32 to vector<128x1xf32>
    %112 = arith.maximumf %110, %111 : vector<128x1xf32>
    %113 = math.rsqrt %112 : vector<128x1xf32>
    %114 = vector.broadcast %113 : vector<128x1xf32> to vector<128x128xf32>
    %115 = arith.mulf %107, %114 : vector<128x128xf32>
    %c0_27 = arith.constant 0 : index
    %c0_28 = arith.constant 0 : index
    %116 = vector.load %arg7[%c0_27, %c0_28] : memref<128x128xf32, #tpu.memory_space<vmem>>, vector<128x128xf32>
    tpu.vector_store %arg7[%c0_27, %c0_28], %115 {strides = array<i32>} : memref<128x128xf32, #tpu.memory_space<vmem>>, vector<128x128xf32>,
    return
  }
  func.func @transform_0(%arg0: i32) -> (i32, i32) {
    %c0_i32 = arith.constant 0 : i32
    %c0_i32_0 = arith.constant 0 : i32
    return %arg0, %c0_i32 : i32, i32
  }
  func.func @transform_1(%arg0: i32) -> (i32, i32) {
    %c0_i32 = arith.constant 0 : i32
    %c0_i32_0 = arith.constant 0 : i32
    %c0_i32_1 = arith.constant 0 : i32
    return %c0_i32, %c0_i32_0 : i32, i32
  }
  func.func @transform_2(%arg0: i32) -> (i32, i32) {
    %c0_i32 = arith.constant 0 : i32
    %c0_i32_0 = arith.constant 0 : i32
    %c0_i32_1 = arith.constant 0 : i32
    return %c0_i32, %c0_i32_0 : i32, i32
  }
  func.func @transform_3(%arg0: i32) -> (i32, i32) {
    %c0_i32 = arith.constant 0 : i32
    %c0_i32_0 = arith.constant 0 : i32
    %c0_i32_1 = arith.constant 0 : i32
    return %c0_i32, %c0_i32_0 : i32, i32
  }
  func.func @transform_4(%arg0: i32) -> (i32, i32) {
    %c0_i32 = arith.constant 0 : i32
    %c0_i32_0 = arith.constant 0 : i32
    %c0_i32_1 = arith.constant 0 : i32
    return %c0_i32, %c0_i32_0 : i32, i32
  }
  func.func @transform_5(%arg0: i32) -> (i32, i32) {
    %c0_i32 = arith.constant 0 : i32
    %c0_i32_0 = arith.constant 0 : i32
    %c0_i32_1 = arith.constant 0 : i32
    return %c0_i32, %c0_i32_0 : i32, i32
  }
  func.func @transform_6(%arg0: i32) -> (i32, i32) {
    %c0_i32 = arith.constant 0 : i32
    %c0_i32_0 = arith.constant 0 : i32
    return %arg0, %c0_i32 : i32, i32
  }
}

</mosaic_0001>

<llo_original>
// kernel: tpu_custom_call.1
$region0: #{tpu_custom_call.1}
  #allocation0 [shape = 'u32[]', space=smem, size = 0x4, offset = 0x4, fixed_abs, tag = 'smem constant byte address 0x4 - core index']
  #allocation1 [shape = 'u32[144,128]{1,0:T(1,128)}', space=vmem, size = 0x12000, scoped, tag = 'internal scratch']
  %s0 = inlined_call_operand.vmem [shape: s32[256,8], index: 0, kind: input, shape index: {}]
  %s1 = inlined_call_operand.vmem [shape: f32[128,128], index: 1, kind: input, shape index: {}]
  %s2 = inlined_call_operand.vmem [shape: f32[128,128], index: 2, kind: input, shape index: {}]
  %s3 = inlined_call_operand.vmem [shape: f32[1,128], index: 3, kind: input, shape index: {}]
  %s4 = inlined_call_operand.hbm [shape: f32[128,128], index: 4, kind: input, shape index: {}]
  %s5 = inlined_call_operand.vmem [shape: f32[1,128], index: 5, kind: input, shape index: {}]
  %s6 = inlined_call_operand.hbm [shape: f32[256,128], index: 6, kind: output, shape index: {}]
  %s7 = sld [smem:[#allocation0]]
  $region61: #{tpu_custom_call.1} parent=0
    _
  %s9 = ssub.s32 1, %s7
  %s10 = scalar_select 0, %s9, %s7
  $region1: #{tpu_custom_call.1} parent=0
    #allocation2 [shape = 'u8[65536]{0}', space=vmem, size = 0x10000, scoped, tag = 'input window, operand 4, single buffered']
    #allocation3 [shape = 's32[2]{0}', space=sflag, size = 0x8, scoped, tag = 'scoped memory for tpu_custom_call.1']
    #allocation4 [shape = 's32[2]{0}', space=sflag, size = 0x8, scoped, tag = 'scoped memory for tpu_custom_call.1']
    #allocation5 [shape = 'u8[131072]{0}', space=vmem, size = 0x20000, scoped, tag = 'output window, operand 0']
    %11 = vsyncpa [#allocation3], 0
    %12 = vsyncpa [#allocation4], 0
    %s13 = scalar_lea.sflag [#allocation4], 1
    %14 = vsyncpa %s13, 0
    loop: start=0, step=1, limit=4
    $region2: #{tpu_custom_call.1} parent=1 // loop_pre_header
      _
    $region3: #{tpu_custom_call.1} parent=1 // loop_header
      %s16 = sphi 0, %s20
      %p17 = scmp.ge.s32.totalorder %s16, 4
      %s26 = sphi 0, %s28
      %s29 = sphi 0, %s26
      %s30 = sphi 0, %s29
      %s46 = sphi 0, %s30
      %s50 = sphi 0, %s50
      %s52 = sphi 0, %s50
      %s53 = sphi 0, %s52
      %s67 = sphi 0, %s53
      %s71 = sphi 0, %s71
      %s73 = sphi 0, %s71
      %s74 = sphi 0, %s73
      %s88 = sphi 0, %s74
      %s92 = sphi 0, %s92
      %s94 = sphi 0, %s92
      %s95 = sphi 0, %s94
      %s109 = sphi 0, %s95
      %s113 = sphi 0, %s113
      %s115 = sphi 0, %s113
      %s116 = sphi 0, %s115
      %s130 = sphi 0, %s116
      %s134 = sphi 0, %s134
      %s136 = sphi 0, %s134
      %s137 = sphi 0, %s136
      %s151 = sphi 0, %s137
      %s157 = sphi 0, %s159
      %s160 = sphi 0, %s157
      %s161 = sphi 0, %s160
      %s177 = sphi 0, %s161
    $region4: #{tpu_custom_call.1} parent=1 // loop_header_branch
      %19 = sbr.rel (%p17) target = $region8
    $region5: #{tpu_custom_call.1} parent=1 // loop_body
      %s21 = ssub.s32 %s16, 1
      %s22 = ssub.s32 %s16, 2
      %s23 = sadd.s32 %s16, 1
      %s24 = ssub.s32 %s16, %s23
      %p25 = scmp.eq.s32.totalorder %s24, 0
      %s27 = sadd.s32 %s26, 1
      %s28 = scalar_select %p25, %s26, %s27
      %p31 = pneg %p25
      %p32 = scmp.eq.s32.totalorder %s16, 1
      %p33 = por %p31, %p32
      %p34 = scmp.ne.s32.totalorder %s26, %s29
      %p35 = scmp.eq.s32.totalorder %s16, 0
      %p36 = por %p34, %p35
      %p37 = scmp.ne.s32.totalorder %s26, %s29
      %p38 = scmp.eq.s32.totalorder %s21, 1
      %p39 = por %p37, %p38
      %p40 = scmp.ne.s32.totalorder %s29, %s30
      %p41 = scmp.eq.s32.totalorder %s21, 0
      %p42 = por %p40, %p41
      %p43 = scmp.ne.s32.totalorder %s29, %s30
      %p44 = scmp.eq.s32.totalorder %s22, 1
      %p45 = por %p43, %p44
      %p47 = scmp.ne.s32.totalorder %s30, %s46
      %p48 = scmp.eq.s32.totalorder %s22, 0
      %p49 = por %p47, %p48
      %s51 = sadd.s32 %s50, 1
      %p54 = scmp.eq.s32.totalorder %s16, 1
      %p55 = scmp.ne.s32.totalorder %s50, %s52
      %p56 = scmp.eq.s32.totalorder %s16, 0
      %p57 = por %p55, %p56
      %p58 = scmp.ne.s32.totalorder %s50, %s52
      %p59 = scmp.eq.s32.totalorder %s21, 1
      %p60 = por %p58, %p59
      %p61 = scmp.ne.s32.totalorder %s52, %s53
      %p62 = scmp.eq.s32.totalorder %s21, 0
      %p63 = por %p61, %p62
      %p64 = scmp.ne.s32.totalorder %s52, %s53
      %p65 = scmp.eq.s32.totalorder %s22, 1
      %p66 = por %p64, %p65
      %p68 = scmp.ne.s32.totalorder %s53, %s67
      %p69 = scmp.eq.s32.totalorder %s22, 0
      %p70 = por %p68, %p69
      %s72 = sadd.s32 %s71, 1
      %p75 = scmp.eq.s32.totalorder %s16, 1
      %p76 = scmp.ne.s32.totalorder %s71, %s73
      %p77 = scmp.eq.s32.totalorder %s16, 0
      %p78 = por %p76, %p77
      %p79 = scmp.ne.s32.totalorder %s71, %s73
      %p80 = scmp.eq.s32.totalorder %s21, 1
      %p81 = por %p79, %p80
      %p82 = scmp.ne.s32.totalorder %s73, %s74
      %p83 = scmp.eq.s32.totalorder %s21, 0
      %p84 = por %p82, %p83
      %p85 = scmp.ne.s32.totalorder %s73, %s74
      %p86 = scmp.eq.s32.totalorder %s22, 1
      %p87 = por %p85, %p86
      %p89 = scmp.ne.s32.totalorder %s74, %s88
      %p90 = scmp.eq.s32.totalorder %s22, 0
      %p91 = por %p89, %p90
      %s93 = sadd.s32 %s92, 1
      %p96 = scmp.eq.s32.totalorder %s16, 1
      %p97 = scmp.ne.s32.totalorder %s92, %s94
      %p98 = scmp.eq.s32.totalorder %s16, 0
      %p99 = por %p97, %p98
      %p100 = scmp.ne.s32.totalorder %s92, %s94
      %p101 = scmp.eq.s32.totalorder %s21, 1
      %p102 = por %p100, %p101
      %p103 = scmp.ne.s32.totalorder %s94, %s95
      %p104 = scmp.eq.s32.totalorder %s21, 0
      %p105 = por %p103, %p104
      %p106 = scmp.ne.s32.totalorder %s94, %s95
      %p107 = scmp.eq.s32.totalorder %s22, 1
      %p108 = por %p106, %p107
      %p110 = scmp.ne.s32.totalorder %s95, %s109
      %p111 = scmp.eq.s32.totalorder %s22, 0
      %p112 = por %p110, %p111
      %s114 = sadd.s32 %s113, 1
      %p117 = scmp.eq.s32.totalorder %s16, 1
      %p118 = scmp.ne.s32.totalorder %s113, %s115
      %p119 = scmp.eq.s32.totalorder %s16, 0
      %p120 = por %p118, %p119
      %p121 = scmp.ne.s32.totalorder %s113, %s115
      %p122 = scmp.eq.s32.totalorder %s21, 1
      %p123 = por %p121, %p122
      %p124 = scmp.ne.s32.totalorder %s115, %s116
      %p125 = scmp.eq.s32.totalorder %s21, 0
      %p126 = por %p124, %p125
      %p127 = scmp.ne.s32.totalorder %s115, %s116
      %p128 = scmp.eq.s32.totalorder %s22, 1
      %p129 = por %p127, %p128
      %p131 = scmp.ne.s32.totalorder %s116, %s130
      %p132 = scmp.eq.s32.totalorder %s22, 0
      %p133 = por %p131, %p132
      %s135 = sadd.s32 %s134, 1
      %p138 = scmp.eq.s32.totalorder %s16, 1
      %p139 = scmp.ne.s32.totalorder %s134, %s136
      %p140 = scmp.eq.s32.totalorder %s16, 0
      %p141 = por %p139, %p140
      %p142 = scmp.ne.s32.totalorder %s134, %s136
      %p143 = scmp.eq.s32.totalorder %s21, 1
      %p144 = por %p142, %p143
      %p145 = scmp.ne.s32.totalorder %s136, %s137
      %p146 = scmp.eq.s32.totalorder %s21, 0
      %p147 = por %p145, %p146
      %p148 = scmp.ne.s32.totalorder %s136, %s137
      %p149 = scmp.eq.s32.totalorder %s22, 1
      %p150 = por %p148, %p149
      %p152 = scmp.ne.s32.totalorder %s137, %s151
      %p153 = scmp.eq.s32.totalorder %s22, 0
      %p154 = por %p152, %p153
      %s155 = ssub.s32 %s16, %s23
      %p156 = scmp.eq.s32.totalorder %s155, 0
      %s158 = sadd.s32 %s157, 1
      %s159 = scalar_select %p156, %s157, %s158
      %p162 = pneg %p156
      %p163 = scmp.eq.s32.totalorder %s16, 1
      %p164 = por %p162, %p163
      %p165 = scmp.ne.s32.totalorder %s157, %s160
      %p166 = scmp.eq.s32.totalorder %s16, 0
      %p167 = por %p165, %p166
      %p168 = scmp.ne.s32.totalorder %s157, %s160
      %p169 = scmp.eq.s32.totalorder %s21, 1
      %p170 = por %p168, %p169
      %p171 = scmp.ne.s32.totalorder %s160, %s161
      %p172 = scmp.eq.s32.totalorder %s21, 0
      %p173 = por %p171, %p172
      %p174 = scmp.ne.s32.totalorder %s160, %s161
      %p175 = scmp.eq.s32.totalorder %s22, 1
      %p176 = por %p174, %p175
      %p178 = scmp.ne.s32.totalorder %s161, %s177
      %p179 = scmp.eq.s32.totalorder %s22, 0
      %p180 = por %p178, %p179
      %p181 = scmp.le.s32.totalorder 1, %s16
      %p182 = scmp.lt.s32.totalorder %s16, 3
      %p183 = pnand %p181, %p182
      %p184 = pneg %p183
      // Predicated region
      $region9: #{tpu_custom_call.1} parent=5 // pred_check
        _
      $region10: #{tpu_custom_call.1} parent=5 // pred_check_branch
        %186 = sbr.rel (%p183) target = $region12
      $region11: #{tpu_custom_call.1} parent=5 // pred_region
        %s187 = ssub.s32 %s16, 1
        // Predicated region
        $region13: #{tpu_custom_call.1} parent=11 // pred_check
          %p188 = pneg %p63
        $region14: #{tpu_custom_call.1} parent=11 // pred_check_branch
          %190 = sbr.rel (%p188) target = $region16
        $region15: #{tpu_custom_call.1} parent=11 // pred_region
          _
        $region16: #{tpu_custom_call.1} parent=11 // pred_fallthru
          _
        // Predicated region
        $region17: #{tpu_custom_call.1} parent=11 // pred_check
          %p191 = pneg %p84
        $region18: #{tpu_custom_call.1} parent=11 // pred_check_branch
          %193 = sbr.rel (%p191) target = $region20
        $region19: #{tpu_custom_call.1} parent=11 // pred_region
          _
        $region20: #{tpu_custom_call.1} parent=11 // pred_fallthru
          _
        // Predicated region
        $region21: #{tpu_custom_call.1} parent=11 // pred_check
          %p194 = pneg %p105
        $region22: #{tpu_custom_call.1} parent=11 // pred_check_branch
          %196 = sbr.rel (%p194) target = $region24
        $region23: #{tpu_custom_call.1} parent=11 // pred_region
          _
        $region24: #{tpu_custom_call.1} parent=11 // pred_fallthru
          _
        // Predicated region
        $region25: #{tpu_custom_call.1} parent=11 // pred_check
          %p197 = pneg %p126
        $region26: #{tpu_custom_call.1} parent=11 // pred_check_branch
          %199 = sbr.rel (%p197) target = $region28
        $region27: #{tpu_custom_call.1} parent=11 // pred_region
          %s201 = ssub.s32 2048, 2048
          %202 = vsyncadd [#allocation3], %s201
          %s203 = sshll.u32 [#allocation2], 4
          %s204 = int_to_ptr.vmem [resolvable:$true] %s203
          %209 = dma.hbm_to_vmem [thread:$0]  %s4, 2048, %s204, [#allocation3], 128, 128, 8
        $region28: #{tpu_custom_call.1} parent=11 // pred_fallthru
          _
        // Predicated region
        $region29: #{tpu_custom_call.1} parent=11 // pred_check
          %p210 = pneg %p147
        $region30: #{tpu_custom_call.1} parent=11 // pred_check_branch
          %212 = sbr.rel (%p210) target = $region32
        $region31: #{tpu_custom_call.1} parent=11 // pred_region
          _
        $region32: #{tpu_custom_call.1} parent=11 // pred_fallthru
          _
      $region12: #{tpu_custom_call.1} parent=5 // pred_fallthru
        _
      %p213 = scmp.lt.s32.totalorder %s16, 2
      // Predicated region
      $region33: #{tpu_custom_call.1} parent=5 // pred_check
        %p214 = pneg %p213
      $region34: #{tpu_custom_call.1} parent=5 // pred_check_branch
        %216 = sbr.rel (%p214) target = $region36
      $region35: #{tpu_custom_call.1} parent=5 // pred_region
        // Predicated region
        $region37: #{tpu_custom_call.1} parent=35 // pred_check
          %p217 = pneg %p36
        $region38: #{tpu_custom_call.1} parent=35 // pred_check_branch
          %219 = sbr.rel (%p217) target = $region40
        $region39: #{tpu_custom_call.1} parent=35 // pred_region
          %s220 = smul.u32 16, %s16
          %p221 = scmp.lt.s32.totalorder %s220, 31
          %s222 = scalar_select %p221, %s220, 31
          %s223 = smul.addr %s222, 8
          %s224 = scalar_lea.vmem %s0, %s223
          %s225 = smul.u32 16, %s16
        $region40: #{tpu_custom_call.1} parent=35 // pred_fallthru
          _
      $region36: #{tpu_custom_call.1} parent=5 // pred_fallthru
        _
      %p226 = scmp.le.s32.totalorder 1, %s16
      %p227 = scmp.lt.s32.totalorder %s16, 3
      %p228 = pnand %p226, %p227
      %p229 = pneg %p228
      // Predicated region
      $region41: #{tpu_custom_call.1} parent=5 // pred_check
        _
      $region42: #{tpu_custom_call.1} parent=5 // pred_check_branch
        %231 = sbr.rel (%p228) target = $region44
      $region43: #{tpu_custom_call.1} parent=5 // pred_region
        %s232 = ssub.s32 %s16, 1
        // Predicated region
        $region45: #{tpu_custom_call.1} parent=43 // pred_check
          %p233 = pneg %p126
        $region46: #{tpu_custom_call.1} parent=43 // pred_check_branch
          %235 = sbr.rel (%p233) target = $region48
        $region47: #{tpu_custom_call.1} parent=43 // pred_region
          %236 = dma.done [#allocation3], 2048
        $region48: #{tpu_custom_call.1} parent=43 // pred_fallthru
          _
        %s237 = smul.u32 16, %s21
        %p238 = scmp.lt.s32.totalorder %s237, 31
        %s239 = scalar_select %p238, %s237, 31
        %s240 = smul.addr %s239, 8
        %s241 = scalar_lea.vmem %s0, %s240
        %p242 = pneg %p42
        %p243 = pneg %p39
        %p244 = pneg %p63
        %p245 = pneg %p60
        %p246 = pneg %p84
        %p247 = pneg %p81
        %p248 = pneg %p105
        %p249 = pneg %p102
        %p250 = pneg %p126
        %p251 = pneg %p123
        %p252 = pneg %p147
        %p253 = pneg %p144
        %p254 = pneg %p173
        %p255 = pneg %p170
        %s256 = sand.u32 %s160, 1
        %s257 = scalar_lea.sflag [#allocation4], %s256
        %s258 = sand.u32 %s160, 1
        %s259 = smul.addr %s258, 128
        %s260 = scalar_lea.vmem [#allocation5], %s259
        %s261 = smul.u32 16, %s21
        %p262 = scmp.lt.s32.totalorder %s261, 31
        %s263 = scalar_select %p262, %s261, 31
        %s264 = smul.addr %s263, 8
        %s265 = scalar_lea.vmem %s0, %s264
        %s266 = smul.u32 16, %s21
        %s267 = smul.u32 16, %s21
        %v268 = vld [vmem:[%s265] sm:$0xff]
        %v269 = vld [vmem:[%s265 + $0x8] sm:$0xff]
        %v270 = vld [vmem:[%s265 + $0x10] sm:$0xff]
        %v271 = vld [vmem:[%s265 + $0x18] sm:$0xff]
        %v272 = vld [vmem:[%s265 + $0x20] sm:$0xff]
        %v273 = vld [vmem:[%s265 + $0x28] sm:$0xff]
        %v274 = vld [vmem:[%s265 + $0x30] sm:$0xff]
        %v275 = vld [vmem:[%s265 + $0x38] sm:$0xff]
        %v276 = vld [vmem:[%s265 + $0x40] sm:$0xff]
        %v277 = vld [vmem:[%s265 + $0x48] sm:$0xff]
        %v278 = vld [vmem:[%s265 + $0x50] sm:$0xff]
        %v279 = vld [vmem:[%s265 + $0x58] sm:$0xff]
        %v280 = vld [vmem:[%s265 + $0x60] sm:$0xff]
        %v281 = vld [vmem:[%s265 + $0x68] sm:$0xff]
        %v282 = vld [vmem:[%s265 + $0x70] sm:$0xff]
        %v283 = vld [vmem:[%s265 + $0x78] sm:$0xff]
        %vm284 = vcmp.gt.s32.totalorder %v268, 0
        %vm285 = vcmp.gt.s32.totalorder %v269, 0
        %vm286 = vcmp.gt.s32.totalorder %v270, 0
        %vm287 = vcmp.gt.s32.totalorder %v271, 0
        %vm288 = vcmp.gt.s32.totalorder %v272, 0
        %vm289 = vcmp.gt.s32.totalorder %v273, 0
        %vm290 = vcmp.gt.s32.totalorder %v274, 0
        %vm291 = vcmp.gt.s32.totalorder %v275, 0
        %vm292 = vcmp.gt.s32.totalorder %v276, 0
        %vm293 = vcmp.gt.s32.totalorder %v277, 0
        %vm294 = vcmp.gt.s32.totalorder %v278, 0
        %vm295 = vcmp.gt.s32.totalorder %v279, 0
        %vm296 = vcmp.gt.s32.totalorder %v280, 0
        %vm297 = vcmp.gt.s32.totalorder %v281, 0
        %vm298 = vcmp.gt.s32.totalorder %v282, 0
        %vm299 = vcmp.gt.s32.totalorder %v283, 0
        %v300 = vlaneseq
        %v301 = vand.u32 %v300, 127
        %302 = vset.pattern.permute.xlu0 0
        %303 = vperm.xlu0 %302, %v268
        %v304 = vpop.permute.xlu0 %303
        %305 = vset.pattern.permute.xlu0 0
        %306 = vperm.xlu0 %305, %v269
        %v307 = vpop.permute.xlu0 %306
        %308 = vset.pattern.permute.xlu0 0
        %309 = vperm.xlu0 %308, %v270
        %v310 = vpop.permute.xlu0 %309
        %311 = vset.pattern.permute.xlu0 0
        %312 = vperm.xlu0 %311, %v271
        %v313 = vpop.permute.xlu0 %312
        %314 = vset.pattern.permute.xlu0 0
        %315 = vperm.xlu0 %314, %v272
        %v316 = vpop.permute.xlu0 %315
        %317 = vset.pattern.permute.xlu0 0
        %318 = vperm.xlu0 %317, %v273
        %v319 = vpop.permute.xlu0 %318
        %320 = vset.pattern.permute.xlu0 0
        %321 = vperm.xlu0 %320, %v274
        %v322 = vpop.permute.xlu0 %321
        %323 = vset.pattern.permute.xlu0 0
        %324 = vperm.xlu0 %323, %v275
        %v325 = vpop.permute.xlu0 %324
        %326 = vset.pattern.permute.xlu0 0
        %327 = vperm.xlu0 %326, %v276
        %v328 = vpop.permute.xlu0 %327
        %329 = vset.pattern.permute.xlu0 0
        %330 = vperm.xlu0 %329, %v277
        %v331 = vpop.permute.xlu0 %330
        %332 = vset.pattern.permute.xlu0 0
        %333 = vperm.xlu0 %332, %v278
        %v334 = vpop.permute.xlu0 %333
        %335 = vset.pattern.permute.xlu0 0
        %336 = vperm.xlu0 %335, %v279
        %v337 = vpop.permute.xlu0 %336
        %338 = vset.pattern.permute.xlu0 0
        %339 = vperm.xlu0 %338, %v280
        %v340 = vpop.permute.xlu0 %339
        %341 = vset.pattern.permute.xlu0 0
        %342 = vperm.xlu0 %341, %v281
        %v343 = vpop.permute.xlu0 %342
        %344 = vset.pattern.permute.xlu0 0
        %345 = vperm.xlu0 %344, %v282
        %v346 = vpop.permute.xlu0 %345
        %347 = vset.pattern.permute.xlu0 0
        %348 = vperm.xlu0 %347, %v283
        %v349 = vpop.permute.xlu0 %348
        %vm350 = vcmp.eq.s32.totalorder %v301, %v304
        %vm351 = vcmp.eq.s32.totalorder %v301, %v307
        %vm352 = vcmp.eq.s32.totalorder %v301, %v310
        %vm353 = vcmp.eq.s32.totalorder %v301, %v313
        %vm354 = vcmp.eq.s32.totalorder %v301, %v316
        %vm355 = vcmp.eq.s32.totalorder %v301, %v319
        %vm356 = vcmp.eq.s32.totalorder %v301, %v322
        %vm357 = vcmp.eq.s32.totalorder %v301, %v325
        %vm358 = vcmp.eq.s32.totalorder %v301, %v328
        %vm359 = vcmp.eq.s32.totalorder %v301, %v331
        %vm360 = vcmp.eq.s32.totalorder %v301, %v334
        %vm361 = vcmp.eq.s32.totalorder %v301, %v337
        %vm362 = vcmp.eq.s32.totalorder %v301, %v340
        %vm363 = vcmp.eq.s32.totalorder %v301, %v343
        %vm364 = vcmp.eq.s32.totalorder %v301, %v346
        %vm365 = vcmp.eq.s32.totalorder %v301, %v349
        %v366 = vsel %vm284, 1, 0
        %v367 = vsel %vm285, 1, 0
        %v368 = vsel %vm286, 1, 0
        %v369 = vsel %vm287, 1, 0
        %v370 = vsel %vm288, 1, 0
        %v371 = vsel %vm289, 1, 0
        %v372 = vsel %vm290, 1, 0
        %v373 = vsel %vm291, 1, 0
        %v374 = vsel %vm292, 1, 0
        %v375 = vsel %vm293, 1, 0
        %v376 = vsel %vm294, 1, 0
        %v377 = vsel %vm295, 1, 0
        %v378 = vsel %vm296, 1, 0
        %v379 = vsel %vm297, 1, 0
        %v380 = vsel %vm298, 1, 0
        %v381 = vsel %vm299, 1, 0
        %382 = vset.pattern.permute.xlu0 0
        %383 = vperm.xlu0 %382, %v366
        %v384 = vpop.permute.xlu0 %383
        %385 = vset.pattern.permute.xlu0 0
        %386 = vperm.xlu0 %385, %v367
        %v387 = vpop.permute.xlu0 %386
        %388 = vset.pattern.permute.xlu0 0
        %389 = vperm.xlu0 %388, %v368
        %v390 = vpop.permute.xlu0 %389
        %391 = vset.pattern.permute.xlu0 0
        %392 = vperm.xlu0 %391, %v369
        %v393 = vpop.permute.xlu0 %392
        %394 = vset.pattern.permute.xlu0 0
        %395 = vperm.xlu0 %394, %v370
        %v396 = vpop.permute.xlu0 %395
        %397 = vset.pattern.permute.xlu0 0
        %398 = vperm.xlu0 %397, %v371
        %v399 = vpop.permute.xlu0 %398
        %400 = vset.pattern.permute.xlu0 0
        %401 = vperm.xlu0 %400, %v372
        %v402 = vpop.permute.xlu0 %401
        %403 = vset.pattern.permute.xlu0 0
        %404 = vperm.xlu0 %403, %v373
        %v405 = vpop.permute.xlu0 %404
        %406 = vset.pattern.permute.xlu0 0
        %407 = vperm.xlu0 %406, %v374
        %v408 = vpop.permute.xlu0 %407
        %409 = vset.pattern.permute.xlu0 0
        %410 = vperm.xlu0 %409, %v375
        %v411 = vpop.permute.xlu0 %410
        %412 = vset.pattern.permute.xlu0 0
        %413 = vperm.xlu0 %412, %v376
        %v414 = vpop.permute.xlu0 %413
        %415 = vset.pattern.permute.xlu0 0
        %416 = vperm.xlu0 %415, %v377
        %v417 = vpop.permute.xlu0 %416
        %418 = vset.pattern.permute.xlu0 0
        %419 = vperm.xlu0 %418, %v378
        %v420 = vpop.permute.xlu0 %419
        %421 = vset.pattern.permute.xlu0 0
        %422 = vperm.xlu0 %421, %v379
        %v423 = vpop.permute.xlu0 %422
        %424 = vset.pattern.permute.xlu0 0
        %425 = vperm.xlu0 %424, %v380
        %v426 = vpop.permute.xlu0 %425
        %427 = vset.pattern.permute.xlu0 0
        %428 = vperm.xlu0 %427, %v381
        %v429 = vpop.permute.xlu0 %428
        %vm430 = vcmp.eq.s32.totalorder %v384, 1
        %vm431 = vcmp.eq.s32.totalorder %v387, 1
        %vm432 = vcmp.eq.s32.totalorder %v390, 1
        %vm433 = vcmp.eq.s32.totalorder %v393, 1
        %vm434 = vcmp.eq.s32.totalorder %v396, 1
        %vm435 = vcmp.eq.s32.totalorder %v399, 1
        %vm436 = vcmp.eq.s32.totalorder %v402, 1
        %vm437 = vcmp.eq.s32.totalorder %v405, 1
        %vm438 = vcmp.eq.s32.totalorder %v408, 1
        %vm439 = vcmp.eq.s32.totalorder %v411, 1
        %vm440 = vcmp.eq.s32.totalorder %v414, 1
        %vm441 = vcmp.eq.s32.totalorder %v417, 1
        %vm442 = vcmp.eq.s32.totalorder %v420, 1
        %vm443 = vcmp.eq.s32.totalorder %v423, 1
        %vm444 = vcmp.eq.s32.totalorder %v426, 1
        %vm445 = vcmp.eq.s32.totalorder %v429, 1
        %vm446 = vmand %vm350, %vm430
        %vm447 = vmand %vm351, %vm431
        %vm448 = vmand %vm352, %vm432
        %vm449 = vmand %vm353, %vm433
        %vm450 = vmand %vm354, %vm434
        %vm451 = vmand %vm355, %vm435
        %vm452 = vmand %vm356, %vm436
        %vm453 = vmand %vm357, %vm437
        %vm454 = vmand %vm358, %vm438
        %vm455 = vmand %vm359, %vm439
        %vm456 = vmand %vm360, %vm440
        %vm457 = vmand %vm361, %vm441
        %vm458 = vmand %vm362, %vm442
        %vm459 = vmand %vm363, %vm443
        %vm460 = vmand %vm364, %vm444
        %vm461 = vmand %vm365, %vm445
        %v462 = vsel %vm446, 1, 0
        %v463 = vsel %vm447, 1, 0
        %v464 = vsel %vm448, 1, 0
        %v465 = vsel %vm449, 1, 0
        %v466 = vsel %vm450, 1, 0
        %v467 = vsel %vm451, 1, 0
        %v468 = vsel %vm452, 1, 0
        %v469 = vsel %vm453, 1, 0
        %v470 = vsel %vm454, 1, 0
        %v471 = vsel %vm455, 1, 0
        %v472 = vsel %vm456, 1, 0
        %v473 = vsel %vm457, 1, 0
        %v474 = vsel %vm458, 1, 0
        %v475 = vsel %vm459, 1, 0
        %v476 = vsel %vm460, 1, 0
        %v477 = vsel %vm461, 1, 0
        %v478 = vcvt.s32.f32 %v462
        %v479 = vcvt.s32.f32 %v463
        %v480 = vcvt.s32.f32 %v464
        %v481 = vcvt.s32.f32 %v465
        %v482 = vcvt.s32.f32 %v466
        %v483 = vcvt.s32.f32 %v467
        %v484 = vcvt.s32.f32 %v468
        %v485 = vcvt.s32.f32 %v469
        %v486 = vcvt.s32.f32 %v470
        %v487 = vcvt.s32.f32 %v471
        %v488 = vcvt.s32.f32 %v472
        %v489 = vcvt.s32.f32 %v473
        %v490 = vcvt.s32.f32 %v474
        %v491 = vcvt.s32.f32 %v475
        %v492 = vcvt.s32.f32 %v476
        %v493 = vcvt.s32.f32 %v477
        %v494 = vadd.f32 %v478, 0.0
        %v495 = vadd.f32 %v479, 0.0
        %v496 = vadd.f32 %v480, 0.0
        %v497 = vadd.f32 %v481, 0.0
        %v498 = vadd.f32 %v482, 0.0
        %v499 = vadd.f32 %v483, 0.0
        %v500 = vadd.f32 %v484, 0.0
        %v501 = vadd.f32 %v485, 0.0
        %v502 = vadd.f32 %v486, 0.0
        %v503 = vadd.f32 %v487, 0.0
        %v504 = vadd.f32 %v488, 0.0
        %v505 = vadd.f32 %v489, 0.0
        %v506 = vadd.f32 %v490, 0.0
        %v507 = vadd.f32 %v491, 0.0
        %v508 = vadd.f32 %v492, 0.0
        %v509 = vadd.f32 %v493, 0.0
        %510 = vset.pattern.permute.xlu0 1
        %511 = vperm.xlu0 %510, %v268
        %v512 = vpop.permute.xlu0 %511
        %513 = vset.pattern.permute.xlu0 1
        %514 = vperm.xlu0 %513, %v269
        %v515 = vpop.permute.xlu0 %514
        %516 = vset.pattern.permute.xlu0 1
        %517 = vperm.xlu0 %516, %v270
        %v518 = vpop.permute.xlu0 %517
        %519 = vset.pattern.permute.xlu0 1
        %520 = vperm.xlu0 %519, %v271
        %v521 = vpop.permute.xlu0 %520
        %522 = vset.pattern.permute.xlu0 1
        %523 = vperm.xlu0 %522, %v272
        %v524 = vpop.permute.xlu0 %523
        %525 = vset.pattern.permute.xlu0 1
        %526 = vperm.xlu0 %525, %v273
        %v527 = vpop.permute.xlu0 %526
        %528 = vset.pattern.permute.xlu0 1
        %529 = vperm.xlu0 %528, %v274
        %v530 = vpop.permute.xlu0 %529
        %531 = vset.pattern.permute.xlu0 1
        %532 = vperm.xlu0 %531, %v275
        %v533 = vpop.permute.xlu0 %532
        %534 = vset.pattern.permute.xlu0 1
        %535 = vperm.xlu0 %534, %v276
        %v536 = vpop.permute.xlu0 %535
        %537 = vset.pattern.permute.xlu0 1
        %538 = vperm.xlu0 %537, %v277
        %v539 = vpop.permute.xlu0 %538
        %540 = vset.pattern.permute.xlu0 1
        %541 = vperm.xlu0 %540, %v278
        %v542 = vpop.permute.xlu0 %541
        %543 = vset.pattern.permute.xlu0 1
        %544 = vperm.xlu0 %543, %v279
        %v545 = vpop.permute.xlu0 %544
        %546 = vset.pattern.permute.xlu0 1
        %547 = vperm.xlu0 %546, %v280
        %v548 = vpop.permute.xlu0 %547
        %549 = vset.pattern.permute.xlu0 1
        %550 = vperm.xlu0 %549, %v281
        %v551 = vpop.permute.xlu0 %550
        %552 = vset.pattern.permute.xlu0 1
        %553 = vperm.xlu0 %552, %v282
        %v554 = vpop.permute.xlu0 %553
        %555 = vset.pattern.permute.xlu0 1
        %556 = vperm.xlu0 %555, %v283
        %v557 = vpop.permute.xlu0 %556
        %vm558 = vcmp.eq.s32.totalorder %v301, %v512
        %vm559 = vcmp.eq.s32.totalorder %v301, %v515
        %vm560 = vcmp.eq.s32.totalorder %v301, %v518
        %vm561 = vcmp.eq.s32.totalorder %v301, %v521
        %vm562 = vcmp.eq.s32.totalorder %v301, %v524
        %vm563 = vcmp.eq.s32.totalorder %v301, %v527
        %vm564 = vcmp.eq.s32.totalorder %v301, %v530
        %vm565 = vcmp.eq.s32.totalorder %v301, %v533
        %vm566 = vcmp.eq.s32.totalorder %v301, %v536
        %vm567 = vcmp.eq.s32.totalorder %v301, %v539
        %vm568 = vcmp.eq.s32.totalorder %v301, %v542
        %vm569 = vcmp.eq.s32.totalorder %v301, %v545
        %vm570 = vcmp.eq.s32.totalorder %v301, %v548
        %vm571 = vcmp.eq.s32.totalorder %v301, %v551
        %vm572 = vcmp.eq.s32.totalorder %v301, %v554
        %vm573 = vcmp.eq.s32.totalorder %v301, %v557
        %574 = vset.pattern.permute.xlu0 1
        %575 = vperm.xlu0 %574, %v366
        %v576 = vpop.permute.xlu0 %575
        %577 = vset.pattern.permute.xlu0 1
        %578 = vperm.xlu0 %577, %v367
        %v579 = vpop.permute.xlu0 %578
        %580 = vset.pattern.permute.xlu0 1
        %581 = vperm.xlu0 %580, %v368
        %v582 = vpop.permute.xlu0 %581
        %583 = vset.pattern.permute.xlu0 1
        %584 = vperm.xlu0 %583, %v369
        %v585 = vpop.permute.xlu0 %584
        %586 = vset.pattern.permute.xlu0 1
        %587 = vperm.xlu0 %586, %v370
        %v588 = vpop.permute.xlu0 %587
        %589 = vset.pattern.permute.xlu0 1
        %590 = vperm.xlu0 %589, %v371
        %v591 = vpop.permute.xlu0 %590
        %592 = vset.pattern.permute.xlu0 1
        %593 = vperm.xlu0 %592, %v372
        %v594 = vpop.permute.xlu0 %593
        %595 = vset.pattern.permute.xlu0 1
        %596 = vperm.xlu0 %595, %v373
        %v597 = vpop.permute.xlu0 %596
        %598 = vset.pattern.permute.xlu0 1
        %599 = vperm.xlu0 %598, %v374
        %v600 = vpop.permute.xlu0 %599
        %601 = vset.pattern.permute.xlu0 1
        %602 = vperm.xlu0 %601, %v375
        %v603 = vpop.permute.xlu0 %602
        %604 = vset.pattern.permute.xlu0 1
        %605 = vperm.xlu0 %604, %v376
        %v606 = vpop.permute.xlu0 %605
        %607 = vset.pattern.permute.xlu0 1
        %608 = vperm.xlu0 %607, %v377
        %v609 = vpop.permute.xlu0 %608
        %610 = vset.pattern.permute.xlu0 1
        %611 = vperm.xlu0 %610, %v378
        %v612 = vpop.permute.xlu0 %611
        %613 = vset.pattern.permute.xlu0 1
        %614 = vperm.xlu0 %613, %v379
        %v615 = vpop.permute.xlu0 %614
        %616 = vset.pattern.permute.xlu0 1
        %617 = vperm.xlu0 %616, %v380
        %v618 = vpop.permute.xlu0 %617
        %619 = vset.pattern.permute.xlu0 1
        %620 = vperm.xlu0 %619, %v381
        %v621 = vpop.permute.xlu0 %620
        %vm622 = vcmp.eq.s32.totalorder %v576, 1
        %vm623 = vcmp.eq.s32.totalorder %v579, 1
        %vm624 = vcmp.eq.s32.totalorder %v582, 1
        %vm625 = vcmp.eq.s32.totalorder %v585, 1
        %vm626 = vcmp.eq.s32.totalorder %v588, 1
        %vm627 = vcmp.eq.s32.totalorder %v591, 1
        %vm628 = vcmp.eq.s32.totalorder %v594, 1
        %vm629 = vcmp.eq.s32.totalorder %v597, 1
        %vm630 = vcmp.eq.s32.totalorder %v600, 1
        %vm631 = vcmp.eq.s32.totalorder %v603, 1
        %vm632 = vcmp.eq.s32.totalorder %v606, 1
        %vm633 = vcmp.eq.s32.totalorder %v609, 1
        %vm634 = vcmp.eq.s32.totalorder %v612, 1
        %vm635 = vcmp.eq.s32.totalorder %v615, 1
        %vm636 = vcmp.eq.s32.totalorder %v618, 1
        %vm637 = vcmp.eq.s32.totalorder %v621, 1
        %vm638 = vmand %vm558, %vm622
        %vm639 = vmand %vm559, %vm623
        %vm640 = vmand %vm560, %vm624
        %vm641 = vmand %vm561, %vm625
        %vm642 = vmand %vm562, %vm626
        %vm643 = vmand %vm563, %vm627
        %vm644 = vmand %vm564, %vm628
        %vm645 = vmand %vm565, %vm629
        %vm646 = vmand %vm566, %vm630
        %vm647 = vmand %vm567, %vm631
        %vm648 = vmand %vm568, %vm632
        %vm649 = vmand %vm569, %vm633
        %vm650 = vmand %vm570, %vm634
        %vm651 = vmand %vm571, %vm635
        %vm652 = vmand %vm572, %vm636
        %vm653 = vmand %vm573, %vm637
        %v654 = vsel %vm638, 1, 0
        %v655 = vsel %vm639, 1, 0
        %v656 = vsel %vm640, 1, 0
        %v657 = vsel %vm641, 1, 0
        %v658 = vsel %vm642, 1, 0
        %v659 = vsel %vm643, 1, 0
        %v660 = vsel %vm644, 1, 0
        %v661 = vsel %vm645, 1, 0
        %v662 = vsel %vm646, 1, 0
        %v663 = vsel %vm647, 1, 0
        %v664 = vsel %vm648, 1, 0
        %v665 = vsel %vm649, 1, 0
        %v666 = vsel %vm650, 1, 0
        %v667 = vsel %vm651, 1, 0
        %v668 = vsel %vm652, 1, 0
        %v669 = vsel %vm653, 1, 0
        %v670 = vcvt.s32.f32 %v654
        %v671 = vcvt.s32.f32 %v655
        %v672 = vcvt.s32.f32 %v656
        %v673 = vcvt.s32.f32 %v657
        %v674 = vcvt.s32.f32 %v658
        %v675 = vcvt.s32.f32 %v659
        %v676 = vcvt.s32.f32 %v660
        %v677 = vcvt.s32.f32 %v661
        %v678 = vcvt.s32.f32 %v662
        %v679 = vcvt.s32.f32 %v663
        %v680 = vcvt.s32.f32 %v664
        %v681 = vcvt.s32.f32 %v665
        %v682 = vcvt.s32.f32 %v666
        %v683 = vcvt.s32.f32 %v667
        %v684 = vcvt.s32.f32 %v668
        %v685 = vcvt.s32.f32 %v669
        %v686 = vadd.f32 %v494, %v670
        %v687 = vadd.f32 %v495, %v671
        %v688 = vadd.f32 %v496, %v672
        %v689 = vadd.f32 %v497, %v673
        %v690 = vadd.f32 %v498, %v674
        %v691 = vadd.f32 %v499, %v675
        %v692 = vadd.f32 %v500, %v676
        %v693 = vadd.f32 %v501, %v677
        %v694 = vadd.f32 %v502, %v678
        %v695 = vadd.f32 %v503, %v679
        %v696 = vadd.f32 %v504, %v680
        %v697 = vadd.f32 %v505, %v681
        %v698 = vadd.f32 %v506, %v682
        %v699 = vadd.f32 %v507, %v683
        %v700 = vadd.f32 %v508, %v684
        %v701 = vadd.f32 %v509, %v685
        %702 = vset.pattern.permute.xlu0 2
        %703 = vperm.xlu0 %702, %v268
        %v704 = vpop.permute.xlu0 %703
        %705 = vset.pattern.permute.xlu0 2
        %706 = vperm.xlu0 %705, %v269
        %v707 = vpop.permute.xlu0 %706
        %708 = vset.pattern.permute.xlu0 2
        %709 = vperm.xlu0 %708, %v270
        %v710 = vpop.permute.xlu0 %709
        %711 = vset.pattern.permute.xlu0 2
        %712 = vperm.xlu0 %711, %v271
        %v713 = vpop.permute.xlu0 %712
        %714 = vset.pattern.permute.xlu0 2
        %715 = vperm.xlu0 %714, %v272
        %v716 = vpop.permute.xlu0 %715
        %717 = vset.pattern.permute.xlu0 2
        %718 = vperm.xlu0 %717, %v273
        %v719 = vpop.permute.xlu0 %718
        %720 = vset.pattern.permute.xlu0 2
        %721 = vperm.xlu0 %720, %v274
        %v722 = vpop.permute.xlu0 %721
        %723 = vset.pattern.permute.xlu0 2
        %724 = vperm.xlu0 %723, %v275
        %v725 = vpop.permute.xlu0 %724
        %726 = vset.pattern.permute.xlu0 2
        %727 = vperm.xlu0 %726, %v276
        %v728 = vpop.permute.xlu0 %727
        %729 = vset.pattern.permute.xlu0 2
        %730 = vperm.xlu0 %729, %v277
        %v731 = vpop.permute.xlu0 %730
        %732 = vset.pattern.permute.xlu0 2
        %733 = vperm.xlu0 %732, %v278
        %v734 = vpop.permute.xlu0 %733
        %735 = vset.pattern.permute.xlu0 2
        %736 = vperm.xlu0 %735, %v279
        %v737 = vpop.permute.xlu0 %736
        %738 = vset.pattern.permute.xlu0 2
        %739 = vperm.xlu0 %738, %v280
        %v740 = vpop.permute.xlu0 %739
        %741 = vset.pattern.permute.xlu0 2
        %742 = vperm.xlu0 %741, %v281
        %v743 = vpop.permute.xlu0 %742
        %744 = vset.pattern.permute.xlu0 2
        %745 = vperm.xlu0 %744, %v282
        %v746 = vpop.permute.xlu0 %745
        %747 = vset.pattern.permute.xlu0 2
        %748 = vperm.xlu0 %747, %v283
        %v749 = vpop.permute.xlu0 %748
        %vm750 = vcmp.eq.s32.totalorder %v301, %v704
        %vm751 = vcmp.eq.s32.totalorder %v301, %v707
        %vm752 = vcmp.eq.s32.totalorder %v301, %v710
        %vm753 = vcmp.eq.s32.totalorder %v301, %v713
        %vm754 = vcmp.eq.s32.totalorder %v301, %v716
        %vm755 = vcmp.eq.s32.totalorder %v301, %v719
        %vm756 = vcmp.eq.s32.totalorder %v301, %v722
        %vm757 = vcmp.eq.s32.totalorder %v301, %v725
        %vm758 = vcmp.eq.s32.totalorder %v301, %v728
        %vm759 = vcmp.eq.s32.totalorder %v301, %v731
        %vm760 = vcmp.eq.s32.totalorder %v301, %v734
        %vm761 = vcmp.eq.s32.totalorder %v301, %v737
        %vm762 = vcmp.eq.s32.totalorder %v301, %v740
        %vm763 = vcmp.eq.s32.totalorder %v301, %v743
        %vm764 = vcmp.eq.s32.totalorder %v301, %v746
        %vm765 = vcmp.eq.s32.totalorder %v301, %v749
        %766 = vset.pattern.permute.xlu0 2
        %767 = vperm.xlu0 %766, %v366
        %v768 = vpop.permute.xlu0 %767
        %769 = vset.pattern.permute.xlu0 2
        %770 = vperm.xlu0 %769, %v367
        %v771 = vpop.permute.xlu0 %770
        %772 = vset.pattern.permute.xlu0 2
        %773 = vperm.xlu0 %772, %v368
        %v774 = vpop.permute.xlu0 %773
        %775 = vset.pattern.permute.xlu0 2
        %776 = vperm.xlu0 %775, %v369
        %v777 = vpop.permute.xlu0 %776
        %778 = vset.pattern.permute.xlu0 2
        %779 = vperm.xlu0 %778, %v370
        %v780 = vpop.permute.xlu0 %779
        %781 = vset.pattern.permute.xlu0 2
        %782 = vperm.xlu0 %781, %v371
        %v783 = vpop.permute.xlu0 %782
        %784 = vset.pattern.permute.xlu0 2
        %785 = vperm.xlu0 %784, %v372
        %v786 = vpop.permute.xlu0 %785
        %787 = vset.pattern.permute.xlu0 2
        %788 = vperm.xlu0 %787, %v373
        %v789 = vpop.permute.xlu0 %788
        %790 = vset.pattern.permute.xlu0 2
        %791 = vperm.xlu0 %790, %v374
        %v792 = vpop.permute.xlu0 %791
        %793 = vset.pattern.permute.xlu0 2
        %794 = vperm.xlu0 %793, %v375
        %v795 = vpop.permute.xlu0 %794
        %796 = vset.pattern.permute.xlu0 2
        %797 = vperm.xlu0 %796, %v376
        %v798 = vpop.permute.xlu0 %797
        %799 = vset.pattern.permute.xlu0 2
        %800 = vperm.xlu0 %799, %v377
        %v801 = vpop.permute.xlu0 %800
        %802 = vset.pattern.permute.xlu0 2
        %803 = vperm.xlu0 %802, %v378
        %v804 = vpop.permute.xlu0 %803
        %805 = vset.pattern.permute.xlu0 2
        %806 = vperm.xlu0 %805, %v379
        %v807 = vpop.permute.xlu0 %806
        %808 = vset.pattern.permute.xlu0 2
        %809 = vperm.xlu0 %808, %v380
        %v810 = vpop.permute.xlu0 %809
        %811 = vset.pattern.permute.xlu0 2
        %812 = vperm.xlu0 %811, %v381
        %v813 = vpop.permute.xlu0 %812
        %vm814 = vcmp.eq.s32.totalorder %v768, 1
        %vm815 = vcmp.eq.s32.totalorder %v771, 1
        %vm816 = vcmp.eq.s32.totalorder %v774, 1
        %vm817 = vcmp.eq.s32.totalorder %v777, 1
        %vm818 = vcmp.eq.s32.totalorder %v780, 1
        %vm819 = vcmp.eq.s32.totalorder %v783, 1
        %vm820 = vcmp.eq.s32.totalorder %v786, 1
        %vm821 = vcmp.eq.s32.totalorder %v789, 1
        %vm822 = vcmp.eq.s32.totalorder %v792, 1
        %vm823 = vcmp.eq.s32.totalorder %v795, 1
        %vm824 = vcmp.eq.s32.totalorder %v798, 1
        %vm825 = vcmp.eq.s32.totalorder %v801, 1
        %vm826 = vcmp.eq.s32.totalorder %v804, 1
        %vm827 = vcmp.eq.s32.totalorder %v807, 1
        %vm828 = vcmp.eq.s32.totalorder %v810, 1
        %vm829 = vcmp.eq.s32.totalorder %v813, 1
        %vm830 = vmand %vm750, %vm814
        %vm831 = vmand %vm751, %vm815
        %vm832 = vmand %vm752, %vm816
        %vm833 = vmand %vm753, %vm817
        %vm834 = vmand %vm754, %vm818
        %vm835 = vmand %vm755, %vm819
        %vm836 = vmand %vm756, %vm820
        %vm837 = vmand %vm757, %vm821
        %vm838 = vmand %vm758, %vm822
        %vm839 = vmand %vm759, %vm823
        %vm840 = vmand %vm760, %vm824
        %vm841 = vmand %vm761, %vm825
        %vm842 = vmand %vm762, %vm826
        %vm843 = vmand %vm763, %vm827
        %vm844 = vmand %vm764, %vm828
        %vm845 = vmand %vm765, %vm829
        %v846 = vsel %vm830, 1, 0
        %v847 = vsel %vm831, 1, 0
        %v848 = vsel %vm832, 1, 0
        %v849 = vsel %vm833, 1, 0
        %v850 = vsel %vm834, 1, 0
        %v851 = vsel %vm835, 1, 0
        %v852 = vsel %vm836, 1, 0
        %v853 = vsel %vm837, 1, 0
        %v854 = vsel %vm838, 1, 0
        %v855 = vsel %vm839, 1, 0
        %v856 = vsel %vm840, 1, 0
        %v857 = vsel %vm841, 1, 0
        %v858 = vsel %vm842, 1, 0
        %v859 = vsel %vm843, 1, 0
        %v860 = vsel %vm844, 1, 0
        %v861 = vsel %vm845, 1, 0
        %v862 = vcvt.s32.f32 %v846
        %v863 = vcvt.s32.f32 %v847
        %v864 = vcvt.s32.f32 %v848
        %v865 = vcvt.s32.f32 %v849
        %v866 = vcvt.s32.f32 %v850
        %v867 = vcvt.s32.f32 %v851
        %v868 = vcvt.s32.f32 %v852
        %v869 = vcvt.s32.f32 %v853
        %v870 = vcvt.s32.f32 %v854
        %v871 = vcvt.s32.f32 %v855
        %v872 = vcvt.s32.f32 %v856
        %v873 = vcvt.s32.f32 %v857
        %v874 = vcvt.s32.f32 %v858
        %v875 = vcvt.s32.f32 %v859
        %v876 = vcvt.s32.f32 %v860
        %v877 = vcvt.s32.f32 %v861
        %v878 = vadd.f32 %v686, %v862
        %v879 = vadd.f32 %v687, %v863
        %v880 = vadd.f32 %v688, %v864
        %v881 = vadd.f32 %v689, %v865
        %v882 = vadd.f32 %v690, %v866
        %v883 = vadd.f32 %v691, %v867
        %v884 = vadd.f32 %v692, %v868
        %v885 = vadd.f32 %v693, %v869
        %v886 = vadd.f32 %v694, %v870
        %v887 = vadd.f32 %v695, %v871
        %v888 = vadd.f32 %v696, %v872
        %v889 = vadd.f32 %v697, %v873
        %v890 = vadd.f32 %v698, %v874
        %v891 = vadd.f32 %v699, %v875
        %v892 = vadd.f32 %v700, %v876
        %v893 = vadd.f32 %v701, %v877
        %894 = vset.pattern.permute.xlu0 3
        %895 = vperm.xlu0 %894, %v268
        %v896 = vpop.permute.xlu0 %895
        %897 = vset.pattern.permute.xlu0 3
        %898 = vperm.xlu0 %897, %v269
        %v899 = vpop.permute.xlu0 %898
        %900 = vset.pattern.permute.xlu0 3
        %901 = vperm.xlu0 %900, %v270
        %v902 = vpop.permute.xlu0 %901
        %903 = vset.pattern.permute.xlu0 3
        %904 = vperm.xlu0 %903, %v271
        %v905 = vpop.permute.xlu0 %904
        %906 = vset.pattern.permute.xlu0 3
        %907 = vperm.xlu0 %906, %v272
        %v908 = vpop.permute.xlu0 %907
        %909 = vset.pattern.permute.xlu0 3
        %910 = vperm.xlu0 %909, %v273
        %v911 = vpop.permute.xlu0 %910
        %912 = vset.pattern.permute.xlu0 3
        %913 = vperm.xlu0 %912, %v274
        %v914 = vpop.permute.xlu0 %913
        %915 = vset.pattern.permute.xlu0 3
        %916 = vperm.xlu0 %915, %v275
        %v917 = vpop.permute.xlu0 %916
        %918 = vset.pattern.permute.xlu0 3
        %919 = vperm.xlu0 %918, %v276
        %v920 = vpop.permute.xlu0 %919
        %921 = vset.pattern.permute.xlu0 3
        %922 = vperm.xlu0 %921, %v277
        %v923 = vpop.permute.xlu0 %922
        %924 = vset.pattern.permute.xlu0 3
        %925 = vperm.xlu0 %924, %v278
        %v926 = vpop.permute.xlu0 %925
        %927 = vset.pattern.permute.xlu0 3
        %928 = vperm.xlu0 %927, %v279
        %v929 = vpop.permute.xlu0 %928
        %930 = vset.pattern.permute.xlu0 3
        %931 = vperm.xlu0 %930, %v280
        %v932 = vpop.permute.xlu0 %931
        %933 = vset.pattern.permute.xlu0 3
        %934 = vperm.xlu0 %933, %v281
        %v935 = vpop.permute.xlu0 %934
        %936 = vset.pattern.permute.xlu0 3
        %937 = vperm.xlu0 %936, %v282
        %v938 = vpop.permute.xlu0 %937
        %939 = vset.pattern.permute.xlu0 3
        %940 = vperm.xlu0 %939, %v283
        %v941 = vpop.permute.xlu0 %940
        %vm942 = vcmp.eq.s32.totalorder %v301, %v896
        %vm943 = vcmp.eq.s32.totalorder %v301, %v899
        %vm944 = vcmp.eq.s32.totalorder %v301, %v902
        %vm945 = vcmp.eq.s32.totalorder %v301, %v905
        %vm946 = vcmp.eq.s32.totalorder %v301, %v908
        %vm947 = vcmp.eq.s32.totalorder %v301, %v911
        %vm948 = vcmp.eq.s32.totalorder %v301, %v914
        %vm949 = vcmp.eq.s32.totalorder %v301, %v917
        %vm950 = vcmp.eq.s32.totalorder %v301, %v920
        %vm951 = vcmp.eq.s32.totalorder %v301, %v923
        %vm952 = vcmp.eq.s32.totalorder %v301, %v926
        %vm953 = vcmp.eq.s32.totalorder %v301, %v929
        %vm954 = vcmp.eq.s32.totalorder %v301, %v932
        %vm955 = vcmp.eq.s32.totalorder %v301, %v935
        %vm956 = vcmp.eq.s32.totalorder %v301, %v938
        %vm957 = vcmp.eq.s32.totalorder %v301, %v941
        %958 = vset.pattern.permute.xlu0 3
        %959 = vperm.xlu0 %958, %v366
        %v960 = vpop.permute.xlu0 %959
        %961 = vset.pattern.permute.xlu0 3
        %962 = vperm.xlu0 %961, %v367
        %v963 = vpop.permute.xlu0 %962
        %964 = vset.pattern.permute.xlu0 3
        %965 = vperm.xlu0 %964, %v368
        %v966 = vpop.permute.xlu0 %965
        %967 = vset.pattern.permute.xlu0 3
        %968 = vperm.xlu0 %967, %v369
        %v969 = vpop.permute.xlu0 %968
        %970 = vset.pattern.permute.xlu0 3
        %971 = vperm.xlu0 %970, %v370
        %v972 = vpop.permute.xlu0 %971
        %973 = vset.pattern.permute.xlu0 3
        %974 = vperm.xlu0 %973, %v371
        %v975 = vpop.permute.xlu0 %974
        %976 = vset.pattern.permute.xlu0 3
        %977 = vperm.xlu0 %976, %v372
        %v978 = vpop.permute.xlu0 %977
        %979 = vset.pattern.permute.xlu0 3
        %980 = vperm.xlu0 %979, %v373
        %v981 = vpop.permute.xlu0 %980
        %982 = vset.pattern.permute.xlu0 3
        %983 = vperm.xlu0 %982, %v374
        %v984 = vpop.permute.xlu0 %983
        %985 = vset.pattern.permute.xlu0 3
        %986 = vperm.xlu0 %985, %v375
        %v987 = vpop.permute.xlu0 %986
        %988 = vset.pattern.permute.xlu0 3
        %989 = vperm.xlu0 %988, %v376
        %v990 = vpop.permute.xlu0 %989
        %991 = vset.pattern.permute.xlu0 3
        %992 = vperm.xlu0 %991, %v377
        %v993 = vpop.permute.xlu0 %992
        %994 = vset.pattern.permute.xlu0 3
        %995 = vperm.xlu0 %994, %v378
        %v996 = vpop.permute.xlu0 %995
        %997 = vset.pattern.permute.xlu0 3
        %998 = vperm.xlu0 %997, %v379
        %v999 = vpop.permute.xlu0 %998
        %1000 = vset.pattern.permute.xlu0 3
        %1001 = vperm.xlu0 %1000, %v380
        %v1002 = vpop.permute.xlu0 %1001
        %1003 = vset.pattern.permute.xlu0 3
        %1004 = vperm.xlu0 %1003, %v381
        %v1005 = vpop.permute.xlu0 %1004
        %vm1006 = vcmp.eq.s32.totalorder %v960, 1
        %vm1007 = vcmp.eq.s32.totalorder %v963, 1
        %vm1008 = vcmp.eq.s32.totalorder %v966, 1
        %vm1009 = vcmp.eq.s32.totalorder %v969, 1
        %vm1010 = vcmp.eq.s32.totalorder %v972, 1
        %vm1011 = vcmp.eq.s32.totalorder %v975, 1
        %vm1012 = vcmp.eq.s32.totalorder %v978, 1
        %vm1013 = vcmp.eq.s32.totalorder %v981, 1
        %vm1014 = vcmp.eq.s32.totalorder %v984, 1
        %vm1015 = vcmp.eq.s32.totalorder %v987, 1
        %vm1016 = vcmp.eq.s32.totalorder %v990, 1
        %vm1017 = vcmp.eq.s32.totalorder %v993, 1
        %vm1018 = vcmp.eq.s32.totalorder %v996, 1
        %vm1019 = vcmp.eq.s32.totalorder %v999, 1
        %vm1020 = vcmp.eq.s32.totalorder %v1002, 1
        %vm1021 = vcmp.eq.s32.totalorder %v1005, 1
        %vm1022 = vmand %vm942, %vm1006
        %vm1023 = vmand %vm943, %vm1007
        %vm1024 = vmand %vm944, %vm1008
        %vm1025 = vmand %vm945, %vm1009
        %vm1026 = vmand %vm946, %vm1010
        %vm1027 = vmand %vm947, %vm1011
        %vm1028 = vmand %vm948, %vm1012
        %vm1029 = vmand %vm949, %vm1013
        %vm1030 = vmand %vm950, %vm1014
        %vm1031 = vmand %vm951, %vm1015
        %vm1032 = vmand %vm952, %vm1016
        %vm1033 = vmand %vm953, %vm1017
        %vm1034 = vmand %vm954, %vm1018
        %vm1035 = vmand %vm955, %vm1019
        %vm1036 = vmand %vm956, %vm1020
        %vm1037 = vmand %vm957, %vm1021
        %v1038 = vsel %vm1022, 1, 0
        %v1039 = vsel %vm1023, 1, 0
        %v1040 = vsel %vm1024, 1, 0
        %v1041 = vsel %vm1025, 1, 0
        %v1042 = vsel %vm1026, 1, 0
        %v1043 = vsel %vm1027, 1, 0
        %v1044 = vsel %vm1028, 1, 0
        %v1045 = vsel %vm1029, 1, 0
        %v1046 = vsel %vm1030, 1, 0
        %v1047 = vsel %vm1031, 1, 0
        %v1048 = vsel %vm1032, 1, 0
        %v1049 = vsel %vm1033, 1, 0
        %v1050 = vsel %vm1034, 1, 0
        %v1051 = vsel %vm1035, 1, 0
        %v1052 = vsel %vm1036, 1, 0
        %v1053 = vsel %vm1037, 1, 0
        %v1054 = vcvt.s32.f32 %v1038
        %v1055 = vcvt.s32.f32 %v1039
        %v1056 = vcvt.s32.f32 %v1040
        %v1057 = vcvt.s32.f32 %v1041
        %v1058 = vcvt.s32.f32 %v1042
        %v1059 = vcvt.s32.f32 %v1043
        %v1060 = vcvt.s32.f32 %v1044
        %v1061 = vcvt.s32.f32 %v1045
        %v1062 = vcvt.s32.f32 %v1046
        %v1063 = vcvt.s32.f32 %v1047
        %v1064 = vcvt.s32.f32 %v1048
        %v1065 = vcvt.s32.f32 %v1049
        %v1066 = vcvt.s32.f32 %v1050
        %v1067 = vcvt.s32.f32 %v1051
        %v1068 = vcvt.s32.f32 %v1052
        %v1069 = vcvt.s32.f32 %v1053
        %v1070 = vadd.f32 %v878, %v1054
        %v1071 = vadd.f32 %v879, %v1055
        %v1072 = vadd.f32 %v880, %v1056
        %v1073 = vadd.f32 %v881, %v1057
        %v1074 = vadd.f32 %v882, %v1058
        %v1075 = vadd.f32 %v883, %v1059
        %v1076 = vadd.f32 %v884, %v1060
        %v1077 = vadd.f32 %v885, %v1061
        %v1078 = vadd.f32 %v886, %v1062
        %v1079 = vadd.f32 %v887, %v1063
        %v1080 = vadd.f32 %v888, %v1064
        %v1081 = vadd.f32 %v889, %v1065
        %v1082 = vadd.f32 %v890, %v1066
        %v1083 = vadd.f32 %v891, %v1067
        %v1084 = vadd.f32 %v892, %v1068
        %v1085 = vadd.f32 %v893, %v1069
        %1086 = vset.pattern.permute.xlu0 4
        %1087 = vperm.xlu0 %1086, %v268
        %v1088 = vpop.permute.xlu0 %1087
        %1089 = vset.pattern.permute.xlu0 4
        %1090 = vperm.xlu0 %1089, %v269
        %v1091 = vpop.permute.xlu0 %1090
        %1092 = vset.pattern.permute.xlu0 4
        %1093 = vperm.xlu0 %1092, %v270
        %v1094 = vpop.permute.xlu0 %1093
        %1095 = vset.pattern.permute.xlu0 4
        %1096 = vperm.xlu0 %1095, %v271
        %v1097 = vpop.permute.xlu0 %1096
        %1098 = vset.pattern.permute.xlu0 4
        %1099 = vperm.xlu0 %1098, %v272
        %v1100 = vpop.permute.xlu0 %1099
        %1101 = vset.pattern.permute.xlu0 4
        %1102 = vperm.xlu0 %1101, %v273
        %v1103 = vpop.permute.xlu0 %1102
        %1104 = vset.pattern.permute.xlu0 4
        %1105 = vperm.xlu0 %1104, %v274
        %v1106 = vpop.permute.xlu0 %1105
        %1107 = vset.pattern.permute.xlu0 4
        %1108 = vperm.xlu0 %1107, %v275
        %v1109 = vpop.permute.xlu0 %1108
        %1110 = vset.pattern.permute.xlu0 4
        %1111 = vperm.xlu0 %1110, %v276
        %v1112 = vpop.permute.xlu0 %1111
        %1113 = vset.pattern.permute.xlu0 4
        %1114 = vperm.xlu0 %1113, %v277
        %v1115 = vpop.permute.xlu0 %1114
        %1116 = vset.pattern.permute.xlu0 4
        %1117 = vperm.xlu0 %1116, %v278
        %v1118 = vpop.permute.xlu0 %1117
        %1119 = vset.pattern.permute.xlu0 4
        %1120 = vperm.xlu0 %1119, %v279
        %v1121 = vpop.permute.xlu0 %1120
        %1122 = vset.pattern.permute.xlu0 4
        %1123 = vperm.xlu0 %1122, %v280
        %v1124 = vpop.permute.xlu0 %1123
        %1125 = vset.pattern.permute.xlu0 4
        %1126 = vperm.xlu0 %1125, %v281
        %v1127 = vpop.permute.xlu0 %1126
        %1128 = vset.pattern.permute.xlu0 4
        %1129 = vperm.xlu0 %1128, %v282
        %v1130 = vpop.permute.xlu0 %1129
        %1131 = vset.pattern.permute.xlu0 4
        %1132 = vperm.xlu0 %1131, %v283
        %v1133 = vpop.permute.xlu0 %1132
        %vm1134 = vcmp.eq.s32.totalorder %v301, %v1088
        %vm1135 = vcmp.eq.s32.totalorder %v301, %v1091
        %vm1136 = vcmp.eq.s32.totalorder %v301, %v1094
        %vm1137 = vcmp.eq.s32.totalorder %v301, %v1097
        %vm1138 = vcmp.eq.s32.totalorder %v301, %v1100
        %vm1139 = vcmp.eq.s32.totalorder %v301, %v1103
        %vm1140 = vcmp.eq.s32.totalorder %v301, %v1106
        %vm1141 = vcmp.eq.s32.totalorder %v301, %v1109
        %vm1142 = vcmp.eq.s32.totalorder %v301, %v1112
        %vm1143 = vcmp.eq.s32.totalorder %v301, %v1115
        %vm1144 = vcmp.eq.s32.totalorder %v301, %v1118
        %vm1145 = vcmp.eq.s32.totalorder %v301, %v1121
        %vm1146 = vcmp.eq.s32.totalorder %v301, %v1124
        %vm1147 = vcmp.eq.s32.totalorder %v301, %v1127
        %vm1148 = vcmp.eq.s32.totalorder %v301, %v1130
        %vm1149 = vcmp.eq.s32.totalorder %v301, %v1133
        %1150 = vset.pattern.permute.xlu0 4
        %1151 = vperm.xlu0 %1150, %v366
        %v1152 = vpop.permute.xlu0 %1151
        %1153 = vset.pattern.permute.xlu0 4
        %1154 = vperm.xlu0 %1153, %v367
        %v1155 = vpop.permute.xlu0 %1154
        %1156 = vset.pattern.permute.xlu0 4
        %1157 = vperm.xlu0 %1156, %v368
        %v1158 = vpop.permute.xlu0 %1157
        %1159 = vset.pattern.permute.xlu0 4
        %1160 = vperm.xlu0 %1159, %v369
        %v1161 = vpop.permute.xlu0 %1160
        %1162 = vset.pattern.permute.xlu0 4
        %1163 = vperm.xlu0 %1162, %v370
        %v1164 = vpop.permute.xlu0 %1163
        %1165 = vset.pattern.permute.xlu0 4
        %1166 = vperm.xlu0 %1165, %v371
        %v1167 = vpop.permute.xlu0 %1166
        %1168 = vset.pattern.permute.xlu0 4
        %1169 = vperm.xlu0 %1168, %v372
        %v1170 = vpop.permute.xlu0 %1169
        %1171 = vset.pattern.permute.xlu0 4
        %1172 = vperm.xlu0 %1171, %v373
        %v1173 = vpop.permute.xlu0 %1172
        %1174 = vset.pattern.permute.xlu0 4
        %1175 = vperm.xlu0 %1174, %v374
        %v1176 = vpop.permute.xlu0 %1175
        %1177 = vset.pattern.permute.xlu0 4
        %1178 = vperm.xlu0 %1177, %v375
        %v1179 = vpop.permute.xlu0 %1178
        %1180 = vset.pattern.permute.xlu0 4
        %1181 = vperm.xlu0 %1180, %v376
        %v1182 = vpop.permute.xlu0 %1181
        %1183 = vset.pattern.permute.xlu0 4
        %1184 = vperm.xlu0 %1183, %v377
        %v1185 = vpop.permute.xlu0 %1184
        %1186 = vset.pattern.permute.xlu0 4
        %1187 = vperm.xlu0 %1186, %v378
        %v1188 = vpop.permute.xlu0 %1187
        %1189 = vset.pattern.permute.xlu0 4
        %1190 = vperm.xlu0 %1189, %v379
        %v1191 = vpop.permute.xlu0 %1190
        %1192 = vset.pattern.permute.xlu0 4
        %1193 = vperm.xlu0 %1192, %v380
        %v1194 = vpop.permute.xlu0 %1193
        %1195 = vset.pattern.permute.xlu0 4
        %1196 = vperm.xlu0 %1195, %v381
        %v1197 = vpop.permute.xlu0 %1196
        %vm1198 = vcmp.eq.s32.totalorder %v1152, 1
        %vm1199 = vcmp.eq.s32.totalorder %v1155, 1
        %vm1200 = vcmp.eq.s32.totalorder %v1158, 1
        %vm1201 = vcmp.eq.s32.totalorder %v1161, 1
        %vm1202 = vcmp.eq.s32.totalorder %v1164, 1
        %vm1203 = vcmp.eq.s32.totalorder %v1167, 1
        %vm1204 = vcmp.eq.s32.totalorder %v1170, 1
        %vm1205 = vcmp.eq.s32.totalorder %v1173, 1
        %vm1206 = vcmp.eq.s32.totalorder %v1176, 1
        %vm1207 = vcmp.eq.s32.totalorder %v1179, 1
        %vm1208 = vcmp.eq.s32.totalorder %v1182, 1
        %vm1209 = vcmp.eq.s32.totalorder %v1185, 1
        %vm1210 = vcmp.eq.s32.totalorder %v1188, 1
        %vm1211 = vcmp.eq.s32.totalorder %v1191, 1
        %vm1212 = vcmp.eq.s32.totalorder %v1194, 1
        %vm1213 = vcmp.eq.s32.totalorder %v1197, 1
        %vm1214 = vmand %vm1134, %vm1198
        %vm1215 = vmand %vm1135, %vm1199
        %vm1216 = vmand %vm1136, %vm1200
        %vm1217 = vmand %vm1137, %vm1201
        %vm1218 = vmand %vm1138, %vm1202
        %vm1219 = vmand %vm1139, %vm1203
        %vm1220 = vmand %vm1140, %vm1204
        %vm1221 = vmand %vm1141, %vm1205
        %vm1222 = vmand %vm1142, %vm1206
        %vm1223 = vmand %vm1143, %vm1207
        %vm1224 = vmand %vm1144, %vm1208
        %vm1225 = vmand %vm1145, %vm1209
        %vm1226 = vmand %vm1146, %vm1210
        %vm1227 = vmand %vm1147, %vm1211
        %vm1228 = vmand %vm1148, %vm1212
        %vm1229 = vmand %vm1149, %vm1213
        %v1230 = vsel %vm1214, 1, 0
        %v1231 = vsel %vm1215, 1, 0
        %v1232 = vsel %vm1216, 1, 0
        %v1233 = vsel %vm1217, 1, 0
        %v1234 = vsel %vm1218, 1, 0
        %v1235 = vsel %vm1219, 1, 0
        %v1236 = vsel %vm1220, 1, 0
        %v1237 = vsel %vm1221, 1, 0
        %v1238 = vsel %vm1222, 1, 0
        %v1239 = vsel %vm1223, 1, 0
        %v1240 = vsel %vm1224, 1, 0
        %v1241 = vsel %vm1225, 1, 0
        %v1242 = vsel %vm1226, 1, 0
        %v1243 = vsel %vm1227, 1, 0
        %v1244 = vsel %vm1228, 1, 0
        %v1245 = vsel %vm1229, 1, 0
        %v1246 = vcvt.s32.f32 %v1230
        %v1247 = vcvt.s32.f32 %v1231
        %v1248 = vcvt.s32.f32 %v1232
        %v1249 = vcvt.s32.f32 %v1233
        %v1250 = vcvt.s32.f32 %v1234
        %v1251 = vcvt.s32.f32 %v1235
        %v1252 = vcvt.s32.f32 %v1236
        %v1253 = vcvt.s32.f32 %v1237
        %v1254 = vcvt.s32.f32 %v1238
        %v1255 = vcvt.s32.f32 %v1239
        %v1256 = vcvt.s32.f32 %v1240
        %v1257 = vcvt.s32.f32 %v1241
        %v1258 = vcvt.s32.f32 %v1242
        %v1259 = vcvt.s32.f32 %v1243
        %v1260 = vcvt.s32.f32 %v1244
        %v1261 = vcvt.s32.f32 %v1245
        %v1262 = vadd.f32 %v1070, %v1246
        %v1263 = vadd.f32 %v1071, %v1247
        %v1264 = vadd.f32 %v1072, %v1248
        %v1265 = vadd.f32 %v1073, %v1249
        %v1266 = vadd.f32 %v1074, %v1250
        %v1267 = vadd.f32 %v1075, %v1251
        %v1268 = vadd.f32 %v1076, %v1252
        %v1269 = vadd.f32 %v1077, %v1253
        %v1270 = vadd.f32 %v1078, %v1254
        %v1271 = vadd.f32 %v1079, %v1255
        %v1272 = vadd.f32 %v1080, %v1256
        %v1273 = vadd.f32 %v1081, %v1257
        %v1274 = vadd.f32 %v1082, %v1258
        %v1275 = vadd.f32 %v1083, %v1259
        %v1276 = vadd.f32 %v1084, %v1260
        %v1277 = vadd.f32 %v1085, %v1261
        %1278 = vset.pattern.permute.xlu0 5
        %1279 = vperm.xlu0 %1278, %v268
        %v1280 = vpop.permute.xlu0 %1279
        %1281 = vset.pattern.permute.xlu0 5
        %1282 = vperm.xlu0 %1281, %v269
        %v1283 = vpop.permute.xlu0 %1282
        %1284 = vset.pattern.permute.xlu0 5
        %1285 = vperm.xlu0 %1284, %v270
        %v1286 = vpop.permute.xlu0 %1285
        %1287 = vset.pattern.permute.xlu0 5
        %1288 = vperm.xlu0 %1287, %v271
        %v1289 = vpop.permute.xlu0 %1288
        %1290 = vset.pattern.permute.xlu0 5
        %1291 = vperm.xlu0 %1290, %v272
        %v1292 = vpop.permute.xlu0 %1291
        %1293 = vset.pattern.permute.xlu0 5
        %1294 = vperm.xlu0 %1293, %v273
        %v1295 = vpop.permute.xlu0 %1294
        %1296 = vset.pattern.permute.xlu0 5
        %1297 = vperm.xlu0 %1296, %v274
        %v1298 = vpop.permute.xlu0 %1297
        %1299 = vset.pattern.permute.xlu0 5
        %1300 = vperm.xlu0 %1299, %v275
        %v1301 = vpop.permute.xlu0 %1300
        %1302 = vset.pattern.permute.xlu0 5
        %1303 = vperm.xlu0 %1302, %v276
        %v1304 = vpop.permute.xlu0 %1303
        %1305 = vset.pattern.permute.xlu0 5
        %1306 = vperm.xlu0 %1305, %v277
        %v1307 = vpop.permute.xlu0 %1306
        %1308 = vset.pattern.permute.xlu0 5
        %1309 = vperm.xlu0 %1308, %v278
        %v1310 = vpop.permute.xlu0 %1309
        %1311 = vset.pattern.permute.xlu0 5
        %1312 = vperm.xlu0 %1311, %v279
        %v1313 = vpop.permute.xlu0 %1312
        %1314 = vset.pattern.permute.xlu0 5
        %1315 = vperm.xlu0 %1314, %v280
        %v1316 = vpop.permute.xlu0 %1315
        %1317 = vset.pattern.permute.xlu0 5
        %1318 = vperm.xlu0 %1317, %v281
        %v1319 = vpop.permute.xlu0 %1318
        %1320 = vset.pattern.permute.xlu0 5
        %1321 = vperm.xlu0 %1320, %v282
        %v1322 = vpop.permute.xlu0 %1321
        %1323 = vset.pattern.permute.xlu0 5
        %1324 = vperm.xlu0 %1323, %v283
        %v1325 = vpop.permute.xlu0 %1324
        %vm1326 = vcmp.eq.s32.totalorder %v301, %v1280
        %vm1327 = vcmp.eq.s32.totalorder %v301, %v1283
        %vm1328 = vcmp.eq.s32.totalorder %v301, %v1286
        %vm1329 = vcmp.eq.s32.totalorder %v301, %v1289
        %vm1330 = vcmp.eq.s32.totalorder %v301, %v1292
        %vm1331 = vcmp.eq.s32.totalorder %v301, %v1295
        %vm1332 = vcmp.eq.s32.totalorder %v301, %v1298
        %vm1333 = vcmp.eq.s32.totalorder %v301, %v1301
        %vm1334 = vcmp.eq.s32.totalorder %v301, %v1304
        %vm1335 = vcmp.eq.s32.totalorder %v301, %v1307
        %vm1336 = vcmp.eq.s32.totalorder %v301, %v1310
        %vm1337 = vcmp.eq.s32.totalorder %v301, %v1313
        %vm1338 = vcmp.eq.s32.totalorder %v301, %v1316
        %vm1339 = vcmp.eq.s32.totalorder %v301, %v1319
        %vm1340 = vcmp.eq.s32.totalorder %v301, %v1322
        %vm1341 = vcmp.eq.s32.totalorder %v301, %v1325
        %1342 = vset.pattern.permute.xlu0 5
        %1343 = vperm.xlu0 %1342, %v366
        %v1344 = vpop.permute.xlu0 %1343
        %1345 = vset.pattern.permute.xlu0 5
        %1346 = vperm.xlu0 %1345, %v367
        %v1347 = vpop.permute.xlu0 %1346
        %1348 = vset.pattern.permute.xlu0 5
        %1349 = vperm.xlu0 %1348, %v368
        %v1350 = vpop.permute.xlu0 %1349
        %1351 = vset.pattern.permute.xlu0 5
        %1352 = vperm.xlu0 %1351, %v369
        %v1353 = vpop.permute.xlu0 %1352
        %1354 = vset.pattern.permute.xlu0 5
        %1355 = vperm.xlu0 %1354, %v370
        %v1356 = vpop.permute.xlu0 %1355
        %1357 = vset.pattern.permute.xlu0 5
        %1358 = vperm.xlu0 %1357, %v371
        %v1359 = vpop.permute.xlu0 %1358
        %1360 = vset.pattern.permute.xlu0 5
        %1361 = vperm.xlu0 %1360, %v372
        %v1362 = vpop.permute.xlu0 %1361
        %1363 = vset.pattern.permute.xlu0 5
        %1364 = vperm.xlu0 %1363, %v373
        %v1365 = vpop.permute.xlu0 %1364
        %1366 = vset.pattern.permute.xlu0 5
        %1367 = vperm.xlu0 %1366, %v374
        %v1368 = vpop.permute.xlu0 %1367
        %1369 = vset.pattern.permute.xlu0 5
        %1370 = vperm.xlu0 %1369, %v375
        %v1371 = vpop.permute.xlu0 %1370
        %1372 = vset.pattern.permute.xlu0 5
        %1373 = vperm.xlu0 %1372, %v376
        %v1374 = vpop.permute.xlu0 %1373
        %1375 = vset.pattern.permute.xlu0 5
        %1376 = vperm.xlu0 %1375, %v377
        %v1377 = vpop.permute.xlu0 %1376
        %1378 = vset.pattern.permute.xlu0 5
        %1379 = vperm.xlu0 %1378, %v378
        %v1380 = vpop.permute.xlu0 %1379
        %1381 = vset.pattern.permute.xlu0 5
        %1382 = vperm.xlu0 %1381, %v379
        %v1383 = vpop.permute.xlu0 %1382
        %1384 = vset.pattern.permute.xlu0 5
        %1385 = vperm.xlu0 %1384, %v380
        %v1386 = vpop.permute.xlu0 %1385
        %1387 = vset.pattern.permute.xlu0 5
        %1388 = vperm.xlu0 %1387, %v381
        %v1389 = vpop.permute.xlu0 %1388
        %vm1390 = vcmp.eq.s32.totalorder %v1344, 1
        %vm1391 = vcmp.eq.s32.totalorder %v1347, 1
        %vm1392 = vcmp.eq.s32.totalorder %v1350, 1
        %vm1393 = vcmp.eq.s32.totalorder %v1353, 1
        %vm1394 = vcmp.eq.s32.totalorder %v1356, 1
        %vm1395 = vcmp.eq.s32.totalorder %v1359, 1
        %vm1396 = vcmp.eq.s32.totalorder %v1362, 1
        %vm1397 = vcmp.eq.s32.totalorder %v1365, 1
        %vm1398 = vcmp.eq.s32.totalorder %v1368, 1
        %vm1399 = vcmp.eq.s32.totalorder %v1371, 1
        %vm1400 = vcmp.eq.s32.totalorder %v1374, 1
        %vm1401 = vcmp.eq.s32.totalorder %v1377, 1
        %vm1402 = vcmp.eq.s32.totalorder %v1380, 1
        %vm1403 = vcmp.eq.s32.totalorder %v1383, 1
        %vm1404 = vcmp.eq.s32.totalorder %v1386, 1
        %vm1405 = vcmp.eq.s32.totalorder %v1389, 1
        %vm1406 = vmand %vm1326, %vm1390
        %vm1407 = vmand %vm1327, %vm1391
        %vm1408 = vmand %vm1328, %vm1392
        %vm1409 = vmand %vm1329, %vm1393
        %vm1410 = vmand %vm1330, %vm1394
        %vm1411 = vmand %vm1331, %vm1395
        %vm1412 = vmand %vm1332, %vm1396
        %vm1413 = vmand %vm1333, %vm1397
        %vm1414 = vmand %vm1334, %vm1398
        %vm1415 = vmand %vm1335, %vm1399
        %vm1416 = vmand %vm1336, %vm1400
        %vm1417 = vmand %vm1337, %vm1401
        %vm1418 = vmand %vm1338, %vm1402
        %vm1419 = vmand %vm1339, %vm1403
        %vm1420 = vmand %vm1340, %vm1404
        %vm1421 = vmand %vm1341, %vm1405
        %v1422 = vsel %vm1406, 1, 0
        %v1423 = vsel %vm1407, 1, 0
        %v1424 = vsel %vm1408, 1, 0
        %v1425 = vsel %vm1409, 1, 0
        %v1426 = vsel %vm1410, 1, 0
        %v1427 = vsel %vm1411, 1, 0
        %v1428 = vsel %vm1412, 1, 0
        %v1429 = vsel %vm1413, 1, 0
        %v1430 = vsel %vm1414, 1, 0
        %v1431 = vsel %vm1415, 1, 0
        %v1432 = vsel %vm1416, 1, 0
        %v1433 = vsel %vm1417, 1, 0
        %v1434 = vsel %vm1418, 1, 0
        %v1435 = vsel %vm1419, 1, 0
        %v1436 = vsel %vm1420, 1, 0
        %v1437 = vsel %vm1421, 1, 0
        %v1438 = vcvt.s32.f32 %v1422
        %v1439 = vcvt.s32.f32 %v1423
        %v1440 = vcvt.s32.f32 %v1424
        %v1441 = vcvt.s32.f32 %v1425
        %v1442 = vcvt.s32.f32 %v1426
        %v1443 = vcvt.s32.f32 %v1427
        %v1444 = vcvt.s32.f32 %v1428
        %v1445 = vcvt.s32.f32 %v1429
        %v1446 = vcvt.s32.f32 %v1430
        %v1447 = vcvt.s32.f32 %v1431
        %v1448 = vcvt.s32.f32 %v1432
        %v1449 = vcvt.s32.f32 %v1433
        %v1450 = vcvt.s32.f32 %v1434
        %v1451 = vcvt.s32.f32 %v1435
        %v1452 = vcvt.s32.f32 %v1436
        %v1453 = vcvt.s32.f32 %v1437
        %v1454 = vadd.f32 %v1262, %v1438
        %v1455 = vadd.f32 %v1263, %v1439
        %v1456 = vadd.f32 %v1264, %v1440
        %v1457 = vadd.f32 %v1265, %v1441
        %v1458 = vadd.f32 %v1266, %v1442
        %v1459 = vadd.f32 %v1267, %v1443
        %v1460 = vadd.f32 %v1268, %v1444
        %v1461 = vadd.f32 %v1269, %v1445
        %v1462 = vadd.f32 %v1270, %v1446
        %v1463 = vadd.f32 %v1271, %v1447
        %v1464 = vadd.f32 %v1272, %v1448
        %v1465 = vadd.f32 %v1273, %v1449
        %v1466 = vadd.f32 %v1274, %v1450
        %v1467 = vadd.f32 %v1275, %v1451
        %v1468 = vadd.f32 %v1276, %v1452
        %v1469 = vadd.f32 %v1277, %v1453
        %1470 = vset.pattern.permute.xlu0 6
        %1471 = vperm.xlu0 %1470, %v268
        %v1472 = vpop.permute.xlu0 %1471
        %1473 = vset.pattern.permute.xlu0 6
        %1474 = vperm.xlu0 %1473, %v269
        %v1475 = vpop.permute.xlu0 %1474
        %1476 = vset.pattern.permute.xlu0 6
        %1477 = vperm.xlu0 %1476, %v270
        %v1478 = vpop.permute.xlu0 %1477
        %1479 = vset.pattern.permute.xlu0 6
        %1480 = vperm.xlu0 %1479, %v271
        %v1481 = vpop.permute.xlu0 %1480
        %1482 = vset.pattern.permute.xlu0 6
        %1483 = vperm.xlu0 %1482, %v272
        %v1484 = vpop.permute.xlu0 %1483
        %1485 = vset.pattern.permute.xlu0 6
        %1486 = vperm.xlu0 %1485, %v273
        %v1487 = vpop.permute.xlu0 %1486
        %1488 = vset.pattern.permute.xlu0 6
        %1489 = vperm.xlu0 %1488, %v274
        %v1490 = vpop.permute.xlu0 %1489
        %1491 = vset.pattern.permute.xlu0 6
        %1492 = vperm.xlu0 %1491, %v275
        %v1493 = vpop.permute.xlu0 %1492
        %1494 = vset.pattern.permute.xlu0 6
        %1495 = vperm.xlu0 %1494, %v276
        %v1496 = vpop.permute.xlu0 %1495
        %1497 = vset.pattern.permute.xlu0 6
        %1498 = vperm.xlu0 %1497, %v277
        %v1499 = vpop.permute.xlu0 %1498
        %1500 = vset.pattern.permute.xlu0 6
        %1501 = vperm.xlu0 %1500, %v278
        %v1502 = vpop.permute.xlu0 %1501
        %1503 = vset.pattern.permute.xlu0 6
        %1504 = vperm.xlu0 %1503, %v279
        %v1505 = vpop.permute.xlu0 %1504
        %1506 = vset.pattern.permute.xlu0 6
        %1507 = vperm.xlu0 %1506, %v280
        %v1508 = vpop.permute.xlu0 %1507
        %1509 = vset.pattern.permute.xlu0 6
        %1510 = vperm.xlu0 %1509, %v281
        %v1511 = vpop.permute.xlu0 %1510
        %1512 = vset.pattern.permute.xlu0 6
        %1513 = vperm.xlu0 %1512, %v282
        %v1514 = vpop.permute.xlu0 %1513
        %1515 = vset.pattern.permute.xlu0 6
        %1516 = vperm.xlu0 %1515, %v283
        %v1517 = vpop.permute.xlu0 %1516
        %vm1518 = vcmp.eq.s32.totalorder %v301, %v1472
        %vm1519 = vcmp.eq.s32.totalorder %v301, %v1475
        %vm1520 = vcmp.eq.s32.totalorder %v301, %v1478
        %vm1521 = vcmp.eq.s32.totalorder %v301, %v1481
        %vm1522 = vcmp.eq.s32.totalorder %v301, %v1484
        %vm1523 = vcmp.eq.s32.totalorder %v301, %v1487
        %vm1524 = vcmp.eq.s32.totalorder %v301, %v1490
        %vm1525 = vcmp.eq.s32.totalorder %v301, %v1493
        %vm1526 = vcmp.eq.s32.totalorder %v301, %v1496
        %vm1527 = vcmp.eq.s32.totalorder %v301, %v1499
        %vm1528 = vcmp.eq.s32.totalorder %v301, %v1502
        %vm1529 = vcmp.eq.s32.totalorder %v301, %v1505
        %vm1530 = vcmp.eq.s32.totalorder %v301, %v1508
        %vm1531 = vcmp.eq.s32.totalorder %v301, %v1511
        %vm1532 = vcmp.eq.s32.totalorder %v301, %v1514
        %vm1533 = vcmp.eq.s32.totalorder %v301, %v1517
        %1534 = vset.pattern.permute.xlu0 6
        %1535 = vperm.xlu0 %1534, %v366
        %v1536 = vpop.permute.xlu0 %1535
        %1537 = vset.pattern.permute.xlu0 6
        %1538 = vperm.xlu0 %1537, %v367
        %v1539 = vpop.permute.xlu0 %1538
        %1540 = vset.pattern.permute.xlu0 6
        %1541 = vperm.xlu0 %1540, %v368
        %v1542 = vpop.permute.xlu0 %1541
        %1543 = vset.pattern.permute.xlu0 6
        %1544 = vperm.xlu0 %1543, %v369
        %v1545 = vpop.permute.xlu0 %1544
        %1546 = vset.pattern.permute.xlu0 6
        %1547 = vperm.xlu0 %1546, %v370
        %v1548 = vpop.permute.xlu0 %1547
        %1549 = vset.pattern.permute.xlu0 6
        %1550 = vperm.xlu0 %1549, %v371
        %v1551 = vpop.permute.xlu0 %1550
        %1552 = vset.pattern.permute.xlu0 6
        %1553 = vperm.xlu0 %1552, %v372
        %v1554 = vpop.permute.xlu0 %1553
        %1555 = vset.pattern.permute.xlu0 6
        %1556 = vperm.xlu0 %1555, %v373
        %v1557 = vpop.permute.xlu0 %1556
        %1558 = vset.pattern.permute.xlu0 6
        %1559 = vperm.xlu0 %1558, %v374
        %v1560 = vpop.permute.xlu0 %1559
        %1561 = vset.pattern.permute.xlu0 6
        %1562 = vperm.xlu0 %1561, %v375
        %v1563 = vpop.permute.xlu0 %1562
        %1564 = vset.pattern.permute.xlu0 6
        %1565 = vperm.xlu0 %1564, %v376
        %v1566 = vpop.permute.xlu0 %1565
        %1567 = vset.pattern.permute.xlu0 6
        %1568 = vperm.xlu0 %1567, %v377
        %v1569 = vpop.permute.xlu0 %1568
        %1570 = vset.pattern.permute.xlu0 6
        %1571 = vperm.xlu0 %1570, %v378
        %v1572 = vpop.permute.xlu0 %1571
        %1573 = vset.pattern.permute.xlu0 6
        %1574 = vperm.xlu0 %1573, %v379
        %v1575 = vpop.permute.xlu0 %1574
        %1576 = vset.pattern.permute.xlu0 6
        %1577 = vperm.xlu0 %1576, %v380
        %v1578 = vpop.permute.xlu0 %1577
        %1579 = vset.pattern.permute.xlu0 6
        %1580 = vperm.xlu0 %1579, %v381
        %v1581 = vpop.permute.xlu0 %1580
        %vm1582 = vcmp.eq.s32.totalorder %v1536, 1
        %vm1583 = vcmp.eq.s32.totalorder %v1539, 1
        %vm1584 = vcmp.eq.s32.totalorder %v1542, 1
        %vm1585 = vcmp.eq.s32.totalorder %v1545, 1
        %vm1586 = vcmp.eq.s32.totalorder %v1548, 1
        %vm1587 = vcmp.eq.s32.totalorder %v1551, 1
        %vm1588 = vcmp.eq.s32.totalorder %v1554, 1
        %vm1589 = vcmp.eq.s32.totalorder %v1557, 1
        %vm1590 = vcmp.eq.s32.totalorder %v1560, 1
        %vm1591 = vcmp.eq.s32.totalorder %v1563, 1
        %vm1592 = vcmp.eq.s32.totalorder %v1566, 1
        %vm1593 = vcmp.eq.s32.totalorder %v1569, 1
        %vm1594 = vcmp.eq.s32.totalorder %v1572, 1
        %vm1595 = vcmp.eq.s32.totalorder %v1575, 1
        %vm1596 = vcmp.eq.s32.totalorder %v1578, 1
        %vm1597 = vcmp.eq.s32.totalorder %v1581, 1
        %vm1598 = vmand %vm1518, %vm1582
        %vm1599 = vmand %vm1519, %vm1583
        %vm1600 = vmand %vm1520, %vm1584
        %vm1601 = vmand %vm1521, %vm1585
        %vm1602 = vmand %vm1522, %vm1586
        %vm1603 = vmand %vm1523, %vm1587
        %vm1604 = vmand %vm1524, %vm1588
        %vm1605 = vmand %vm1525, %vm1589
        %vm1606 = vmand %vm1526, %vm1590
        %vm1607 = vmand %vm1527, %vm1591
        %vm1608 = vmand %vm1528, %vm1592
        %vm1609 = vmand %vm1529, %vm1593
        %vm1610 = vmand %vm1530, %vm1594
        %vm1611 = vmand %vm1531, %vm1595
        %vm1612 = vmand %vm1532, %vm1596
        %vm1613 = vmand %vm1533, %vm1597
        %v1614 = vsel %vm1598, 1, 0
        %v1615 = vsel %vm1599, 1, 0
        %v1616 = vsel %vm1600, 1, 0
        %v1617 = vsel %vm1601, 1, 0
        %v1618 = vsel %vm1602, 1, 0
        %v1619 = vsel %vm1603, 1, 0
        %v1620 = vsel %vm1604, 1, 0
        %v1621 = vsel %vm1605, 1, 0
        %v1622 = vsel %vm1606, 1, 0
        %v1623 = vsel %vm1607, 1, 0
        %v1624 = vsel %vm1608, 1, 0
        %v1625 = vsel %vm1609, 1, 0
        %v1626 = vsel %vm1610, 1, 0
        %v1627 = vsel %vm1611, 1, 0
        %v1628 = vsel %vm1612, 1, 0
        %v1629 = vsel %vm1613, 1, 0
        %v1630 = vcvt.s32.f32 %v1614
        %v1631 = vcvt.s32.f32 %v1615
        %v1632 = vcvt.s32.f32 %v1616
        %v1633 = vcvt.s32.f32 %v1617
        %v1634 = vcvt.s32.f32 %v1618
        %v1635 = vcvt.s32.f32 %v1619
        %v1636 = vcvt.s32.f32 %v1620
        %v1637 = vcvt.s32.f32 %v1621
        %v1638 = vcvt.s32.f32 %v1622
        %v1639 = vcvt.s32.f32 %v1623
        %v1640 = vcvt.s32.f32 %v1624
        %v1641 = vcvt.s32.f32 %v1625
        %v1642 = vcvt.s32.f32 %v1626
        %v1643 = vcvt.s32.f32 %v1627
        %v1644 = vcvt.s32.f32 %v1628
        %v1645 = vcvt.s32.f32 %v1629
        %v1646 = vadd.f32 %v1454, %v1630
        %v1647 = vadd.f32 %v1455, %v1631
        %v1648 = vadd.f32 %v1456, %v1632
        %v1649 = vadd.f32 %v1457, %v1633
        %v1650 = vadd.f32 %v1458, %v1634
        %v1651 = vadd.f32 %v1459, %v1635
        %v1652 = vadd.f32 %v1460, %v1636
        %v1653 = vadd.f32 %v1461, %v1637
        %v1654 = vadd.f32 %v1462, %v1638
        %v1655 = vadd.f32 %v1463, %v1639
        %v1656 = vadd.f32 %v1464, %v1640
        %v1657 = vadd.f32 %v1465, %v1641
        %v1658 = vadd.f32 %v1466, %v1642
        %v1659 = vadd.f32 %v1467, %v1643
        %v1660 = vadd.f32 %v1468, %v1644
        %v1661 = vadd.f32 %v1469, %v1645
        %1662 = vset.pattern.permute.xlu0 7
        %1663 = vperm.xlu0 %1662, %v268
        %v1664 = vpop.permute.xlu0 %1663
        %1665 = vset.pattern.permute.xlu0 7
        %1666 = vperm.xlu0 %1665, %v269
        %v1667 = vpop.permute.xlu0 %1666
        %1668 = vset.pattern.permute.xlu0 7
        %1669 = vperm.xlu0 %1668, %v270
        %v1670 = vpop.permute.xlu0 %1669
        %1671 = vset.pattern.permute.xlu0 7
        %1672 = vperm.xlu0 %1671, %v271
        %v1673 = vpop.permute.xlu0 %1672
        %1674 = vset.pattern.permute.xlu0 7
        %1675 = vperm.xlu0 %1674, %v272
        %v1676 = vpop.permute.xlu0 %1675
        %1677 = vset.pattern.permute.xlu0 7
        %1678 = vperm.xlu0 %1677, %v273
        %v1679 = vpop.permute.xlu0 %1678
        %1680 = vset.pattern.permute.xlu0 7
        %1681 = vperm.xlu0 %1680, %v274
        %v1682 = vpop.permute.xlu0 %1681
        %1683 = vset.pattern.permute.xlu0 7
        %1684 = vperm.xlu0 %1683, %v275
        %v1685 = vpop.permute.xlu0 %1684
        %1686 = vset.pattern.permute.xlu0 7
        %1687 = vperm.xlu0 %1686, %v276
        %v1688 = vpop.permute.xlu0 %1687
        %1689 = vset.pattern.permute.xlu0 7
        %1690 = vperm.xlu0 %1689, %v277
        %v1691 = vpop.permute.xlu0 %1690
        %1692 = vset.pattern.permute.xlu0 7
        %1693 = vperm.xlu0 %1692, %v278
        %v1694 = vpop.permute.xlu0 %1693
        %1695 = vset.pattern.permute.xlu0 7
        %1696 = vperm.xlu0 %1695, %v279
        %v1697 = vpop.permute.xlu0 %1696
        %1698 = vset.pattern.permute.xlu0 7
        %1699 = vperm.xlu0 %1698, %v280
        %v1700 = vpop.permute.xlu0 %1699
        %1701 = vset.pattern.permute.xlu0 7
        %1702 = vperm.xlu0 %1701, %v281
        %v1703 = vpop.permute.xlu0 %1702
        %1704 = vset.pattern.permute.xlu0 7
        %1705 = vperm.xlu0 %1704, %v282
        %v1706 = vpop.permute.xlu0 %1705
        %1707 = vset.pattern.permute.xlu0 7
        %1708 = vperm.xlu0 %1707, %v283
        %v1709 = vpop.permute.xlu0 %1708
        %vm1710 = vcmp.eq.s32.totalorder %v301, %v1664
        %vm1711 = vcmp.eq.s32.totalorder %v301, %v1667
        %vm1712 = vcmp.eq.s32.totalorder %v301, %v1670
        %vm1713 = vcmp.eq.s32.totalorder %v301, %v1673
        %vm1714 = vcmp.eq.s32.totalorder %v301, %v1676
        %vm1715 = vcmp.eq.s32.totalorder %v301, %v1679
        %vm1716 = vcmp.eq.s32.totalorder %v301, %v1682
        %vm1717 = vcmp.eq.s32.totalorder %v301, %v1685
        %vm1718 = vcmp.eq.s32.totalorder %v301, %v1688
        %vm1719 = vcmp.eq.s32.totalorder %v301, %v1691
        %vm1720 = vcmp.eq.s32.totalorder %v301, %v1694
        %vm1721 = vcmp.eq.s32.totalorder %v301, %v1697
        %vm1722 = vcmp.eq.s32.totalorder %v301, %v1700
        %vm1723 = vcmp.eq.s32.totalorder %v301, %v1703
        %vm1724 = vcmp.eq.s32.totalorder %v301, %v1706
        %vm1725 = vcmp.eq.s32.totalorder %v301, %v1709
        %1726 = vset.pattern.permute.xlu0 7
        %1727 = vperm.xlu0 %1726, %v366
        %v1728 = vpop.permute.xlu0 %1727
        %1729 = vset.pattern.permute.xlu0 7
        %1730 = vperm.xlu0 %1729, %v367
        %v1731 = vpop.permute.xlu0 %1730
        %1732 = vset.pattern.permute.xlu0 7
        %1733 = vperm.xlu0 %1732, %v368
        %v1734 = vpop.permute.xlu0 %1733
        %1735 = vset.pattern.permute.xlu0 7
        %1736 = vperm.xlu0 %1735, %v369
        %v1737 = vpop.permute.xlu0 %1736
        %1738 = vset.pattern.permute.xlu0 7
        %1739 = vperm.xlu0 %1738, %v370
        %v1740 = vpop.permute.xlu0 %1739
        %1741 = vset.pattern.permute.xlu0 7
        %1742 = vperm.xlu0 %1741, %v371
        %v1743 = vpop.permute.xlu0 %1742
        %1744 = vset.pattern.permute.xlu0 7
        %1745 = vperm.xlu0 %1744, %v372
        %v1746 = vpop.permute.xlu0 %1745
        %1747 = vset.pattern.permute.xlu0 7
        %1748 = vperm.xlu0 %1747, %v373
        %v1749 = vpop.permute.xlu0 %1748
        %1750 = vset.pattern.permute.xlu0 7
        %1751 = vperm.xlu0 %1750, %v374
        %v1752 = vpop.permute.xlu0 %1751
        %1753 = vset.pattern.permute.xlu0 7
        %1754 = vperm.xlu0 %1753, %v375
        %v1755 = vpop.permute.xlu0 %1754
        %1756 = vset.pattern.permute.xlu0 7
        %1757 = vperm.xlu0 %1756, %v376
        %v1758 = vpop.permute.xlu0 %1757
        %1759 = vset.pattern.permute.xlu0 7
        %1760 = vperm.xlu0 %1759, %v377
        %v1761 = vpop.permute.xlu0 %1760
        %1762 = vset.pattern.permute.xlu0 7
        %1763 = vperm.xlu0 %1762, %v378
        %v1764 = vpop.permute.xlu0 %1763
        %1765 = vset.pattern.permute.xlu0 7
        %1766 = vperm.xlu0 %1765, %v379
        %v1767 = vpop.permute.xlu0 %1766
        %1768 = vset.pattern.permute.xlu0 7
        %1769 = vperm.xlu0 %1768, %v380
        %v1770 = vpop.permute.xlu0 %1769
        %1771 = vset.pattern.permute.xlu0 7
        %1772 = vperm.xlu0 %1771, %v381
        %v1773 = vpop.permute.xlu0 %1772
        %vm1774 = vcmp.eq.s32.totalorder %v1728, 1
        %vm1775 = vcmp.eq.s32.totalorder %v1731, 1
        %vm1776 = vcmp.eq.s32.totalorder %v1734, 1
        %vm1777 = vcmp.eq.s32.totalorder %v1737, 1
        %vm1778 = vcmp.eq.s32.totalorder %v1740, 1
        %vm1779 = vcmp.eq.s32.totalorder %v1743, 1
        %vm1780 = vcmp.eq.s32.totalorder %v1746, 1
        %vm1781 = vcmp.eq.s32.totalorder %v1749, 1
        %vm1782 = vcmp.eq.s32.totalorder %v1752, 1
        %vm1783 = vcmp.eq.s32.totalorder %v1755, 1
        %vm1784 = vcmp.eq.s32.totalorder %v1758, 1
        %vm1785 = vcmp.eq.s32.totalorder %v1761, 1
        %vm1786 = vcmp.eq.s32.totalorder %v1764, 1
        %vm1787 = vcmp.eq.s32.totalorder %v1767, 1
        %vm1788 = vcmp.eq.s32.totalorder %v1770, 1
        %vm1789 = vcmp.eq.s32.totalorder %v1773, 1
        %vm1790 = vmand %vm1710, %vm1774
        %vm1791 = vmand %vm1711, %vm1775
        %vm1792 = vmand %vm1712, %vm1776
        %vm1793 = vmand %vm1713, %vm1777
        %vm1794 = vmand %vm1714, %vm1778
        %vm1795 = vmand %vm1715, %vm1779
        %vm1796 = vmand %vm1716, %vm1780
        %vm1797 = vmand %vm1717, %vm1781
        %vm1798 = vmand %vm1718, %vm1782
        %vm1799 = vmand %vm1719, %vm1783
        %vm1800 = vmand %vm1720, %vm1784
        %vm1801 = vmand %vm1721, %vm1785
        %vm1802 = vmand %vm1722, %vm1786
        %vm1803 = vmand %vm1723, %vm1787
        %vm1804 = vmand %vm1724, %vm1788
        %vm1805 = vmand %vm1725, %vm1789
        %v1806 = vsel %vm1790, 1, 0
        %v1807 = vsel %vm1791, 1, 0
        %v1808 = vsel %vm1792, 1, 0
        %v1809 = vsel %vm1793, 1, 0
        %v1810 = vsel %vm1794, 1, 0
        %v1811 = vsel %vm1795, 1, 0
        %v1812 = vsel %vm1796, 1, 0
        %v1813 = vsel %vm1797, 1, 0
        %v1814 = vsel %vm1798, 1, 0
        %v1815 = vsel %vm1799, 1, 0
        %v1816 = vsel %vm1800, 1, 0
        %v1817 = vsel %vm1801, 1, 0
        %v1818 = vsel %vm1802, 1, 0
        %v1819 = vsel %vm1803, 1, 0
        %v1820 = vsel %vm1804, 1, 0
        %v1821 = vsel %vm1805, 1, 0
        %v1822 = vcvt.s32.f32 %v1806
        %v1823 = vcvt.s32.f32 %v1807
        %v1824 = vcvt.s32.f32 %v1808
        %v1825 = vcvt.s32.f32 %v1809
        %v1826 = vcvt.s32.f32 %v1810
        %v1827 = vcvt.s32.f32 %v1811
        %v1828 = vcvt.s32.f32 %v1812
        %v1829 = vcvt.s32.f32 %v1813
        %v1830 = vcvt.s32.f32 %v1814
        %v1831 = vcvt.s32.f32 %v1815
        %v1832 = vcvt.s32.f32 %v1816
        %v1833 = vcvt.s32.f32 %v1817
        %v1834 = vcvt.s32.f32 %v1818
        %v1835 = vcvt.s32.f32 %v1819
        %v1836 = vcvt.s32.f32 %v1820
        %v1837 = vcvt.s32.f32 %v1821
        %v1838 = vadd.f32 %v1646, %v1822
        %v1839 = vadd.f32 %v1647, %v1823
        %v1840 = vadd.f32 %v1648, %v1824
        %v1841 = vadd.f32 %v1649, %v1825
        %v1842 = vadd.f32 %v1650, %v1826
        %v1843 = vadd.f32 %v1651, %v1827
        %v1844 = vadd.f32 %v1652, %v1828
        %v1845 = vadd.f32 %v1653, %v1829
        %v1846 = vadd.f32 %v1654, %v1830
        %v1847 = vadd.f32 %v1655, %v1831
        %v1848 = vadd.f32 %v1656, %v1832
        %v1849 = vadd.f32 %v1657, %v1833
        %v1850 = vadd.f32 %v1658, %v1834
        %v1851 = vadd.f32 %v1659, %v1835
        %v1852 = vadd.f32 %v1660, %v1836
        %v1853 = vadd.f32 %v1661, %v1837
        %v1854 = vld [vmem:[%s1] sm:$0xff]
        %v1855 = vld [vmem:[%s1 + $0x8] sm:$0xff]
        %v1856 = vld [vmem:[%s1 + $0x10] sm:$0xff]
        %v1857 = vld [vmem:[%s1 + $0x18] sm:$0xff]
        %v1858 = vld [vmem:[%s1 + $0x20] sm:$0xff]
        %v1859 = vld [vmem:[%s1 + $0x28] sm:$0xff]
        %v1860 = vld [vmem:[%s1 + $0x30] sm:$0xff]
        %v1861 = vld [vmem:[%s1 + $0x38] sm:$0xff]
        %v1862 = vld [vmem:[%s1 + $0x40] sm:$0xff]
        %v1863 = vld [vmem:[%s1 + $0x48] sm:$0xff]
        %v1864 = vld [vmem:[%s1 + $0x50] sm:$0xff]
        %v1865 = vld [vmem:[%s1 + $0x58] sm:$0xff]
        %v1866 = vld [vmem:[%s1 + $0x60] sm:$0xff]
        %v1867 = vld [vmem:[%s1 + $0x68] sm:$0xff]
        %v1868 = vld [vmem:[%s1 + $0x70] sm:$0xff]
        %v1869 = vld [vmem:[%s1 + $0x78] sm:$0xff]
        %1870 = vmatprep.subr.mxu0 0.0
        %v1871 = vand.u32 %v1854, 4294901760
        %1872 = vmatpush1.msra.mxu0 %v1871
        %1873 = vmatprep.subr.mxu0 0.0
        %v1874 = vand.u32 %v1855, 4294901760
        %1875 = vmatpush1.msra.mxu0 %v1874
        %1876 = vmatprep.subr.mxu0 0.0
        %v1877 = vand.u32 %v1856, 4294901760
        %1878 = vmatpush1.msra.mxu0 %v1877
        %1879 = vmatprep.subr.mxu0 0.0
        %v1880 = vand.u32 %v1857, 4294901760
        %1881 = vmatpush1.msra.mxu0 %v1880
        %1882 = vmatprep.subr.mxu0 0.0
        %v1883 = vand.u32 %v1858, 4294901760
        %1884 = vmatpush1.msra.mxu0 %v1883
        %1885 = vmatprep.subr.mxu0 0.0
        %v1886 = vand.u32 %v1859, 4294901760
        %1887 = vmatpush1.msra.mxu0 %v1886
        %1888 = vmatprep.subr.mxu0 0.0
        %v1889 = vand.u32 %v1860, 4294901760
        %1890 = vmatpush1.msra.mxu0 %v1889
        %1891 = vmatprep.subr.mxu0 0.0
        %v1892 = vand.u32 %v1861, 4294901760
        %1893 = vmatpush1.msra.mxu0 %v1892
        %1894 = vmatprep.subr.mxu0 0.0
        %v1895 = vand.u32 %v1862, 4294901760
        %1896 = vmatpush1.msra.mxu0 %v1895
        %1897 = vmatprep.subr.mxu0 0.0
        %v1898 = vand.u32 %v1863, 4294901760
        %1899 = vmatpush1.msra.mxu0 %v1898
        %1900 = vmatprep.subr.mxu0 0.0
        %v1901 = vand.u32 %v1864, 4294901760
        %1902 = vmatpush1.msra.mxu0 %v1901
        %1903 = vmatprep.subr.mxu0 0.0
        %v1904 = vand.u32 %v1865, 4294901760
        %1905 = vmatpush1.msra.mxu0 %v1904
        %1906 = vmatprep.subr.mxu0 0.0
        %v1907 = vand.u32 %v1866, 4294901760
        %1908 = vmatpush1.msra.mxu0 %v1907
        %1909 = vmatprep.subr.mxu0 0.0
        %v1910 = vand.u32 %v1867, 4294901760
        %1911 = vmatpush1.msra.mxu0 %v1910
        %1912 = vmatprep.subr.mxu0 0.0
        %v1913 = vand.u32 %v1868, 4294901760
        %1914 = vmatpush1.msra.mxu0 %v1913
        %1915 = vmatprep.subr.mxu0 0.0
        %v1916 = vand.u32 %v1869, 4294901760
        %1917 = vmatpush1.msra.mxu0 %v1916
        %1918 = vmatprep.subr.mxu0 0.0
        %1919 = vmatpush1.msra.mxu0 0.0
        %1920 = vmatprep.subr.mxu0 0.0
        %1921 = vmatpush1.msra.mxu0 0.0
        %1922 = vmatprep.subr.mxu0 0.0
        %1923 = vmatpush1.msra.mxu0 0.0
        %1924 = vmatprep.subr.mxu0 0.0
        %1925 = vmatpush1.msra.mxu0 0.0
        %1926 = vmatprep.subr.mxu0 0.0
        %1927 = vmatpush1.msra.mxu0 0.0
        %1928 = vmatprep.subr.mxu0 0.0
        %1929 = vmatpush1.msra.mxu0 0.0
        %1930 = vmatprep.subr.mxu0 0.0
        %1931 = vmatpush1.msra.mxu0 0.0
        %1932 = vmatprep.subr.mxu0 0.0
        %1933 = vmatpush1.msra.mxu0 0.0
        %1934 = vmatprep.subr.mxu0 0.0
        %1935 = vmatpush1.msra.mxu0 0.0
        %1936 = vmatprep.subr.mxu0 0.0
        %1937 = vmatpush1.msra.mxu0 0.0
        %1938 = vmatprep.subr.mxu0 0.0
        %1939 = vmatpush1.msra.mxu0 0.0
        %1940 = vmatprep.subr.mxu0 0.0
        %1941 = vmatpush1.msra.mxu0 0.0
        %1942 = vmatprep.subr.mxu0 0.0
        %1943 = vmatpush1.msra.mxu0 0.0
        %1944 = vmatprep.subr.mxu0 0.0
        %1945 = vmatpush1.msra.mxu0 0.0
        %1946 = vmatprep.subr.mxu0 0.0
        %1947 = vmatpush1.msra.mxu0 0.0
        %1948 = vmatprep.subr.mxu0 0.0
        %1949 = vmatpush1.msra.mxu0 0.0
        %1950 = vmatprep.mubr.f32.mxu0 0.0
        %v1951 = vand.u32 %v1838, 4294901760
        %v1952 = vsub.f32 %v1838, %v1951
        %v1953 = vand.u32 %v1952, 4294901760
        %v1954 = vsub.f32 %v1952, %v1953
        %v1955 = vand.u32 %v1954, 4294901760
        %1956 = vmatmul.mubr.f32.gmra.mrb[0].mxu0 %v1955
        %v1957 = vpop.f32.mrb[0].mxu0
        %v1958 = vadd.f32 0.0, %v1957
        %v1959 = vpop.f32.mrb[0].mxu0
        %1960 = vmatprep.mubr.f32.mxu0 0.0
        %v1961 = vand.u32 %v1839, 4294901760
        %v1962 = vsub.f32 %v1839, %v1961
        %v1963 = vand.u32 %v1962, 4294901760
        %v1964 = vsub.f32 %v1962, %v1963
        %v1965 = vand.u32 %v1964, 4294901760
        %1966 = vmatmul.mubr.f32.gmra.mrb[0].mxu0 %v1965
        %v1967 = vpop.f32.mrb[0].mxu0
        %v1968 = vadd.f32 0.0, %v1967
        %v1969 = vpop.f32.mrb[0].mxu0
        %1970 = vmatprep.mubr.f32.mxu0 0.0
        %v1971 = vand.u32 %v1840, 4294901760
        %v1972 = vsub.f32 %v1840, %v1971
        %v1973 = vand.u32 %v1972, 4294901760
        %v1974 = vsub.f32 %v1972, %v1973
        %v1975 = vand.u32 %v1974, 4294901760
        %1976 = vmatmul.mubr.f32.gmra.mrb[0].mxu0 %v1975
        %v1977 = vpop.f32.mrb[0].mxu0
        %v1978 = vadd.f32 0.0, %v1977
        %v1979 = vpop.f32.mrb[0].mxu0
        %1980 = vmatprep.mubr.f32.mxu0 0.0
        %v1981 = vand.u32 %v1841, 4294901760
        %v1982 = vsub.f32 %v1841, %v1981
        %v1983 = vand.u32 %v1982, 4294901760
        %v1984 = vsub.f32 %v1982, %v1983
        %v1985 = vand.u32 %v1984, 4294901760
        %1986 = vmatmul.mubr.f32.gmra.mrb[0].mxu0 %v1985
        %v1987 = vpop.f32.mrb[0].mxu0
        %v1988 = vadd.f32 0.0, %v1987
        %v1989 = vpop.f32.mrb[0].mxu0
        %1990 = vmatprep.mubr.f32.mxu0 0.0
        %v1991 = vand.u32 %v1842, 4294901760
        %v1992 = vsub.f32 %v1842, %v1991
        %v1993 = vand.u32 %v1992, 4294901760
        %v1994 = vsub.f32 %v1992, %v1993
        %v1995 = vand.u32 %v1994, 4294901760
        %1996 = vmatmul.mubr.f32.gmra.mrb[0].mxu0 %v1995
        %v1997 = vpop.f32.mrb[0].mxu0
        %v1998 = vadd.f32 0.0, %v1997
        %v1999 = vpop.f32.mrb[0].mxu0
        %2000 = vmatprep.mubr.f32.mxu0 0.0
        %v2001 = vand.u32 %v1843, 4294901760
        %v2002 = vsub.f32 %v1843, %v2001
        %v2003 = vand.u32 %v2002, 4294901760
        %v2004 = vsub.f32 %v2002, %v2003
        %v2005 = vand.u32 %v2004, 4294901760
        %2006 = vmatmul.mubr.f32.gmra.mrb[0].mxu0 %v2005
        %v2007 = vpop.f32.mrb[0].mxu0
        %v2008 = vadd.f32 0.0, %v2007
        %v2009 = vpop.f32.mrb[0].mxu0
        %2010 = vmatprep.mubr.f32.mxu0 0.0
        %v2011 = vand.u32 %v1844, 4294901760
        %v2012 = vsub.f32 %v1844, %v2011
        %v2013 = vand.u32 %v2012, 4294901760
        %v2014 = vsub.f32 %v2012, %v2013
        %v2015 = vand.u32 %v2014, 4294901760
        %2016 = vmatmul.mubr.f32.gmra.mrb[0].mxu0 %v2015
        %v2017 = vpop.f32.mrb[0].mxu0
        %v2018 = vadd.f32 0.0, %v2017
        %v2019 = vpop.f32.mrb[0].mxu0
        %2020 = vmatprep.mubr.f32.mxu0 0.0
        %v2021 = vand.u32 %v1845, 4294901760
        %v2022 = vsub.f32 %v1845, %v2021
        %v2023 = vand.u32 %v2022, 4294901760
        %v2024 = vsub.f32 %v2022, %v2023
        %v2025 = vand.u32 %v2024, 4294901760
        %2026 = vmatmul.mubr.f32.gmra.mrb[0].mxu0 %v2025
        %v2027 = vpop.f32.mrb[0].mxu0
        %v2028 = vadd.f32 0.0, %v2027
        %v2029 = vpop.f32.mrb[0].mxu0
        %2030 = vmatprep.mubr.f32.mxu0 0.0
        %v2031 = vand.u32 %v1846, 4294901760
        %v2032 = vsub.f32 %v1846, %v2031
        %v2033 = vand.u32 %v2032, 4294901760
        %v2034 = vsub.f32 %v2032, %v2033
        %v2035 = vand.u32 %v2034, 4294901760
        %2036 = vmatmul.mubr.f32.gmra.mrb[0].mxu0 %v2035
        %v2037 = vpop.f32.mrb[0].mxu0
        %v2038 = vadd.f32 0.0, %v2037
        %v2039 = vpop.f32.mrb[0].mxu0
        %2040 = vmatprep.mubr.f32.mxu0 0.0
        %v2041 = vand.u32 %v1847, 4294901760
        %v2042 = vsub.f32 %v1847, %v2041
        %v2043 = vand.u32 %v2042, 4294901760
        %v2044 = vsub.f32 %v2042, %v2043
        %v2045 = vand.u32 %v2044, 4294901760
        %2046 = vmatmul.mubr.f32.gmra.mrb[0].mxu0 %v2045
        %v2047 = vpop.f32.mrb[0].mxu0
        %v2048 = vadd.f32 0.0, %v2047
        %v2049 = vpop.f32.mrb[0].mxu0
        %2050 = vmatprep.mubr.f32.mxu0 0.0
        %v2051 = vand.u32 %v1848, 4294901760
        %v2052 = vsub.f32 %v1848, %v2051
        %v2053 = vand.u32 %v2052, 4294901760
        %v2054 = vsub.f32 %v2052, %v2053
        %v2055 = vand.u32 %v2054, 4294901760
        %2056 = vmatmul.mubr.f32.gmra.mrb[0].mxu0 %v2055
        %v2057 = vpop.f32.mrb[0].mxu0
        %v2058 = vadd.f32 0.0, %v2057
        %v2059 = vpop.f32.mrb[0].mxu0
        %2060 = vmatprep.mubr.f32.mxu0 0.0
        %v2061 = vand.u32 %v1849, 4294901760
        %v2062 = vsub.f32 %v1849, %v2061
        %v2063 = vand.u32 %v2062, 4294901760
        %v2064 = vsub.f32 %v2062, %v2063
        %v2065 = vand.u32 %v2064, 4294901760
        %2066 = vmatmul.mubr.f32.gmra.mrb[0].mxu0 %v2065
        %v2067 = vpop.f32.mrb[0].mxu0
        %v2068 = vadd.f32 0.0, %v2067
        %v2069 = vpop.f32.mrb[0].mxu0
        %2070 = vmatprep.mubr.f32.mxu0 0.0
        %v2071 = vand.u32 %v1850, 4294901760
        %v2072 = vsub.f32 %v1850, %v2071
        %v2073 = vand.u32 %v2072, 4294901760
        %v2074 = vsub.f32 %v2072, %v2073
        %v2075 = vand.u32 %v2074, 4294901760
        %2076 = vmatmul.mubr.f32.gmra.mrb[0].mxu0 %v2075
        %v2077 = vpop.f32.mrb[0].mxu0
        %v2078 = vadd.f32 0.0, %v2077
        %v2079 = vpop.f32.mrb[0].mxu0
        %2080 = vmatprep.mubr.f32.mxu0 0.0
        %v2081 = vand.u32 %v1851, 4294901760
        %v2082 = vsub.f32 %v1851, %v2081
        %v2083 = vand.u32 %v2082, 4294901760
        %v2084 = vsub.f32 %v2082, %v2083
        %v2085 = vand.u32 %v2084, 4294901760
        %2086 = vmatmul.mubr.f32.gmra.mrb[0].mxu0 %v2085
        %v2087 = vpop.f32.mrb[0].mxu0
        %v2088 = vadd.f32 0.0, %v2087
        %v2089 = vpop.f32.mrb[0].mxu0
        %2090 = vmatprep.mubr.f32.mxu0 0.0
        %v2091 = vand.u32 %v1852, 4294901760
        %v2092 = vsub.f32 %v1852, %v2091
        %v2093 = vand.u32 %v2092, 4294901760
        %v2094 = vsub.f32 %v2092, %v2093
        %v2095 = vand.u32 %v2094, 4294901760
        %2096 = vmatmul.mubr.f32.gmra.mrb[0].mxu0 %v2095
        %v2097 = vpop.f32.mrb[0].mxu0
        %v2098 = vadd.f32 0.0, %v2097
        %v2099 = vpop.f32.mrb[0].mxu0
        %2100 = vmatprep.mubr.f32.mxu0 0.0
        %v2101 = vand.u32 %v1853, 4294901760
        %v2102 = vsub.f32 %v1853, %v2101
        %v2103 = vand.u32 %v2102, 4294901760
        %v2104 = vsub.f32 %v2102, %v2103
        %v2105 = vand.u32 %v2104, 4294901760
        %2106 = vmatmul.mubr.f32.gmra.mrb[0].mxu0 %v2105
        %v2107 = vpop.f32.mrb[0].mxu0
        %v2108 = vadd.f32 0.0, %v2107
        %v2109 = vpop.f32.mrb[0].mxu0
        %2110 = vdwg.mxu0
        %2111 = vmatprep.subr.mxu0 0.0
        %v2112 = vand.u32 %v1854, 4294901760
        %v2113 = vsub.f32 %v1854, %v2112
        %v2114 = vand.u32 %v2113, 4294901760
        %v2115 = vsub.f32 %v2113, %v2114
        %v2116 = vand.u32 %v2115, 4294901760
        %2117 = vmatpush1.msra.mxu0 %v2116
        %2118 = vmatprep.subr.mxu0 0.0
        %v2119 = vand.u32 %v1855, 4294901760
        %v2120 = vsub.f32 %v1855, %v2119
        %v2121 = vand.u32 %v2120, 4294901760
        %v2122 = vsub.f32 %v2120, %v2121
        %v2123 = vand.u32 %v2122, 4294901760
        %2124 = vmatpush1.msra.mxu0 %v2123
        %2125 = vmatprep.subr.mxu0 0.0
        %v2126 = vand.u32 %v1856, 4294901760
        %v2127 = vsub.f32 %v1856, %v2126
        %v2128 = vand.u32 %v2127, 4294901760
        %v2129 = vsub.f32 %v2127, %v2128
        %v2130 = vand.u32 %v2129, 4294901760
        %2131 = vmatpush1.msra.mxu0 %v2130
        %2132 = vmatprep.subr.mxu0 0.0
        %v2133 = vand.u32 %v1857, 4294901760
        %v2134 = vsub.f32 %v1857, %v2133
        %v2135 = vand.u32 %v2134, 4294901760
        %v2136 = vsub.f32 %v2134, %v2135
        %v2137 = vand.u32 %v2136, 4294901760
        %2138 = vmatpush1.msra.mxu0 %v2137
        %2139 = vmatprep.subr.mxu0 0.0
        %v2140 = vand.u32 %v1858, 4294901760
        %v2141 = vsub.f32 %v1858, %v2140
        %v2142 = vand.u32 %v2141, 4294901760
        %v2143 = vsub.f32 %v2141, %v2142
        %v2144 = vand.u32 %v2143, 4294901760
        %2145 = vmatpush1.msra.mxu0 %v2144
        %2146 = vmatprep.subr.mxu0 0.0
        %v2147 = vand.u32 %v1859, 4294901760
        %v2148 = vsub.f32 %v1859, %v2147
        %v2149 = vand.u32 %v2148, 4294901760
        %v2150 = vsub.f32 %v2148, %v2149
        %v2151 = vand.u32 %v2150, 4294901760
        %2152 = vmatpush1.msra.mxu0 %v2151
        %2153 = vmatprep.subr.mxu0 0.0
        %v2154 = vand.u32 %v1860, 4294901760
        %v2155 = vsub.f32 %v1860, %v2154
        %v2156 = vand.u32 %v2155, 4294901760
        %v2157 = vsub.f32 %v2155, %v2156
        %v2158 = vand.u32 %v2157, 4294901760
        %2159 = vmatpush1.msra.mxu0 %v2158
        %2160 = vmatprep.subr.mxu0 0.0
        %v2161 = vand.u32 %v1861, 4294901760
        %v2162 = vsub.f32 %v1861, %v2161
        %v2163 = vand.u32 %v2162, 4294901760
        %v2164 = vsub.f32 %v2162, %v2163
        %v2165 = vand.u32 %v2164, 4294901760
        %2166 = vmatpush1.msra.mxu0 %v2165
        %2167 = vmatprep.subr.mxu0 0.0
        %v2168 = vand.u32 %v1862, 4294901760
        %v2169 = vsub.f32 %v1862, %v2168
        %v2170 = vand.u32 %v2169, 4294901760
        %v2171 = vsub.f32 %v2169, %v2170
        %v2172 = vand.u32 %v2171, 4294901760
        %2173 = vmatpush1.msra.mxu0 %v2172
        %2174 = vmatprep.subr.mxu0 0.0
        %v2175 = vand.u32 %v1863, 4294901760
        %v2176 = vsub.f32 %v1863, %v2175
        %v2177 = vand.u32 %v2176, 4294901760
        %v2178 = vsub.f32 %v2176, %v2177
        %v2179 = vand.u32 %v2178, 4294901760
        %2180 = vmatpush1.msra.mxu0 %v2179
        %2181 = vmatprep.subr.mxu0 0.0
        %v2182 = vand.u32 %v1864, 4294901760
        %v2183 = vsub.f32 %v1864, %v2182
        %v2184 = vand.u32 %v2183, 4294901760
        %v2185 = vsub.f32 %v2183, %v2184
        %v2186 = vand.u32 %v2185, 4294901760
        %2187 = vmatpush1.msra.mxu0 %v2186
        %2188 = vmatprep.subr.mxu0 0.0
        %v2189 = vand.u32 %v1865, 4294901760
        %v2190 = vsub.f32 %v1865, %v2189
        %v2191 = vand.u32 %v2190, 4294901760
        %v2192 = vsub.f32 %v2190, %v2191
        %v2193 = vand.u32 %v2192, 4294901760
        %2194 = vmatpush1.msra.mxu0 %v2193
        %2195 = vmatprep.subr.mxu0 0.0
        %v2196 = vand.u32 %v1866, 4294901760
        %v2197 = vsub.f32 %v1866, %v2196
        %v2198 = vand.u32 %v2197, 4294901760
        %v2199 = vsub.f32 %v2197, %v2198
        %v2200 = vand.u32 %v2199, 4294901760
        %2201 = vmatpush1.msra.mxu0 %v2200
        %2202 = vmatprep.subr.mxu0 0.0
        %v2203 = vand.u32 %v1867, 4294901760
        %v2204 = vsub.f32 %v1867, %v2203
        %v2205 = vand.u32 %v2204, 4294901760
        %v2206 = vsub.f32 %v2204, %v2205
        %v2207 = vand.u32 %v2206, 4294901760
        %2208 = vmatpush1.msra.mxu0 %v2207
        %2209 = vmatprep.subr.mxu0 0.0
        %v2210 = vand.u32 %v1868, 4294901760
        %v2211 = vsub.f32 %v1868, %v2210
        %v2212 = vand.u32 %v2211, 4294901760
        %v2213 = vsub.f32 %v2211, %v2212
        %v2214 = vand.u32 %v2213, 4294901760
        %2215 = vmatpush1.msra.mxu0 %v2214
        %2216 = vmatprep.subr.mxu0 0.0
        %v2217 = vand.u32 %v1869, 4294901760
        %v2218 = vsub.f32 %v1869, %v2217
        %v2219 = vand.u32 %v2218, 4294901760
        %v2220 = vsub.f32 %v2218, %v2219
        %v2221 = vand.u32 %v2220, 4294901760
        %2222 = vmatpush1.msra.mxu0 %v2221
        %2223 = vmatprep.subr.mxu0 0.0
        %2224 = vmatpush1.msra.mxu0 0.0
        %2225 = vmatprep.subr.mxu0 0.0
        %2226 = vmatpush1.msra.mxu0 0.0
        %2227 = vmatprep.subr.mxu0 0.0
        %2228 = vmatpush1.msra.mxu0 0.0
        %2229 = vmatprep.subr.mxu0 0.0
        %2230 = vmatpush1.msra.mxu0 0.0
        %2231 = vmatprep.subr.mxu0 0.0
        %2232 = vmatpush1.msra.mxu0 0.0
        %2233 = vmatprep.subr.mxu0 0.0
        %2234 = vmatpush1.msra.mxu0 0.0
        %2235 = vmatprep.subr.mxu0 0.0
        %2236 = vmatpush1.msra.mxu0 0.0
        %2237 = vmatprep.subr.mxu0 0.0
        %2238 = vmatpush1.msra.mxu0 0.0
        %2239 = vmatprep.subr.mxu0 0.0
        %2240 = vmatpush1.msra.mxu0 0.0
        %2241 = vmatprep.subr.mxu0 0.0
        %2242 = vmatpush1.msra.mxu0 0.0
        %2243 = vmatprep.subr.mxu0 0.0
        %2244 = vmatpush1.msra.mxu0 0.0
        %2245 = vmatprep.subr.mxu0 0.0
        %2246 = vmatpush1.msra.mxu0 0.0
        %2247 = vmatprep.subr.mxu0 0.0
        %2248 = vmatpush1.msra.mxu0 0.0
        %2249 = vmatprep.subr.mxu0 0.0
        %2250 = vmatpush1.msra.mxu0 0.0
        %2251 = vmatprep.subr.mxu0 0.0
        %2252 = vmatpush1.msra.mxu0 0.0
        %2253 = vmatprep.subr.mxu0 0.0
        %2254 = vmatpush1.msra.mxu0 0.0
        %2255 = vmatprep.mubr.f32.mxu0 0.0
        %v2256 = vand.u32 %v1838, 4294901760
        %2257 = vmatmul.mubr.f32.gmra.mrb[0].mxu0 %v2256
        %v2258 = vpop.f32.mrb[0].mxu0
        %v2259 = vadd.f32 %v1958, %v2258
        %v2260 = vpop.f32.mrb[0].mxu0
        %2261 = vmatprep.mubr.f32.mxu0 0.0
        %v2262 = vand.u32 %v1839, 4294901760
        %2263 = vmatmul.mubr.f32.gmra.mrb[0].mxu0 %v2262
        %v2264 = vpop.f32.mrb[0].mxu0
        %v2265 = vadd.f32 %v1968, %v2264
        %v2266 = vpop.f32.mrb[0].mxu0
        %2267 = vmatprep.mubr.f32.mxu0 0.0
        %v2268 = vand.u32 %v1840, 4294901760
        %2269 = vmatmul.mubr.f32.gmra.mrb[0].mxu0 %v2268
        %v2270 = vpop.f32.mrb[0].mxu0
        %v2271 = vadd.f32 %v1978, %v2270
        %v2272 = vpop.f32.mrb[0].mxu0
        %2273 = vmatprep.mubr.f32.mxu0 0.0
        %v2274 = vand.u32 %v1841, 4294901760
        %2275 = vmatmul.mubr.f32.gmra.mrb[0].mxu0 %v2274
        %v2276 = vpop.f32.mrb[0].mxu0
        %v2277 = vadd.f32 %v1988, %v2276
        %v2278 = vpop.f32.mrb[0].mxu0
        %2279 = vmatprep.mubr.f32.mxu0 0.0
        %v2280 = vand.u32 %v1842, 4294901760
        %2281 = vmatmul.mubr.f32.gmra.mrb[0].mxu0 %v2280
        %v2282 = vpop.f32.mrb[0].mxu0
        %v2283 = vadd.f32 %v1998, %v2282
        %v2284 = vpop.f32.mrb[0].mxu0
        %2285 = vmatprep.mubr.f32.mxu0 0.0
        %v2286 = vand.u32 %v1843, 4294901760
        %2287 = vmatmul.mubr.f32.gmra.mrb[0].mxu0 %v2286
        %v2288 = vpop.f32.mrb[0].mxu0
        %v2289 = vadd.f32 %v2008, %v2288
        %v2290 = vpop.f32.mrb[0].mxu0
        %2291 = vmatprep.mubr.f32.mxu0 0.0
        %v2292 = vand.u32 %v1844, 4294901760
        %2293 = vmatmul.mubr.f32.gmra.mrb[0].mxu0 %v2292
        %v2294 = vpop.f32.mrb[0].mxu0
        %v2295 = vadd.f32 %v2018, %v2294
        %v2296 = vpop.f32.mrb[0].mxu0
        %2297 = vmatprep.mubr.f32.mxu0 0.0
        %v2298 = vand.u32 %v1845, 4294901760
        %2299 = vmatmul.mubr.f32.gmra.mrb[0].mxu0 %v2298
        %v2300 = vpop.f32.mrb[0].mxu0
        %v2301 = vadd.f32 %v2028, %v2300
        %v2302 = vpop.f32.mrb[0].mxu0
        %2303 = vmatprep.mubr.f32.mxu0 0.0
        %v2304 = vand.u32 %v1846, 4294901760
        %2305 = vmatmul.mubr.f32.gmra.mrb[0].mxu0 %v2304
        %v2306 = vpop.f32.mrb[0].mxu0
        %v2307 = vadd.f32 %v2038, %v2306
        %v2308 = vpop.f32.mrb[0].mxu0
        %2309 = vmatprep.mubr.f32.mxu0 0.0
        %v2310 = vand.u32 %v1847, 4294901760
        %2311 = vmatmul.mubr.f32.gmra.mrb[0].mxu0 %v2310
        %v2312 = vpop.f32.mrb[0].mxu0
        %v2313 = vadd.f32 %v2048, %v2312
        %v2314 = vpop.f32.mrb[0].mxu0
        %2315 = vmatprep.mubr.f32.mxu0 0.0
        %v2316 = vand.u32 %v1848, 4294901760
        %2317 = vmatmul.mubr.f32.gmra.mrb[0].mxu0 %v2316
        %v2318 = vpop.f32.mrb[0].mxu0
        %v2319 = vadd.f32 %v2058, %v2318
        %v2320 = vpop.f32.mrb[0].mxu0
        %2321 = vmatprep.mubr.f32.mxu0 0.0
        %v2322 = vand.u32 %v1849, 4294901760
        %2323 = vmatmul.mubr.f32.gmra.mrb[0].mxu0 %v2322
        %v2324 = vpop.f32.mrb[0].mxu0
        %v2325 = vadd.f32 %v2068, %v2324
        %v2326 = vpop.f32.mrb[0].mxu0
        %2327 = vmatprep.mubr.f32.mxu0 0.0
        %v2328 = vand.u32 %v1850, 4294901760
        %2329 = vmatmul.mubr.f32.gmra.mrb[0].mxu0 %v2328
        %v2330 = vpop.f32.mrb[0].mxu0
        %v2331 = vadd.f32 %v2078, %v2330
        %v2332 = vpop.f32.mrb[0].mxu0
        %2333 = vmatprep.mubr.f32.mxu0 0.0
        %v2334 = vand.u32 %v1851, 4294901760
        %2335 = vmatmul.mubr.f32.gmra.mrb[0].mxu0 %v2334
        %v2336 = vpop.f32.mrb[0].mxu0
        %v2337 = vadd.f32 %v2088, %v2336
        %v2338 = vpop.f32.mrb[0].mxu0
        %2339 = vmatprep.mubr.f32.mxu0 0.0
        %v2340 = vand.u32 %v1852, 4294901760
        %2341 = vmatmul.mubr.f32.gmra.mrb[0].mxu0 %v2340
        %v2342 = vpop.f32.mrb[0].mxu0
        %v2343 = vadd.f32 %v2098, %v2342
        %v2344 = vpop.f32.mrb[0].mxu0
        %2345 = vmatprep.mubr.f32.mxu0 0.0
        %v2346 = vand.u32 %v1853, 4294901760
        %2347 = vmatmul.mubr.f32.gmra.mrb[0].mxu0 %v2346
        %v2348 = vpop.f32.mrb[0].mxu0
        %v2349 = vadd.f32 %v2108, %v2348
        %v2350 = vpop.f32.mrb[0].mxu0
        %2351 = vdwg.mxu0
        %2352 = vmatprep.subr.mxu0 0.0
        %v2353 = vand.u32 %v1854, 4294901760
        %v2354 = vsub.f32 %v1854, %v2353
        %2355 = vmatpush1.msra.mxu0 %v2354
        %2356 = vmatprep.subr.mxu0 0.0
        %v2357 = vand.u32 %v1855, 4294901760
        %v2358 = vsub.f32 %v1855, %v2357
        %2359 = vmatpush1.msra.mxu0 %v2358
        %2360 = vmatprep.subr.mxu0 0.0
        %v2361 = vand.u32 %v1856, 4294901760
        %v2362 = vsub.f32 %v1856, %v2361
        %2363 = vmatpush1.msra.mxu0 %v2362
        %2364 = vmatprep.subr.mxu0 0.0
        %v2365 = vand.u32 %v1857, 4294901760
        %v2366 = vsub.f32 %v1857, %v2365
        %2367 = vmatpush1.msra.mxu0 %v2366
        %2368 = vmatprep.subr.mxu0 0.0
        %v2369 = vand.u32 %v1858, 4294901760
        %v2370 = vsub.f32 %v1858, %v2369
        %2371 = vmatpush1.msra.mxu0 %v2370
        %2372 = vmatprep.subr.mxu0 0.0
        %v2373 = vand.u32 %v1859, 4294901760
        %v2374 = vsub.f32 %v1859, %v2373
        %2375 = vmatpush1.msra.mxu0 %v2374
        %2376 = vmatprep.subr.mxu0 0.0
        %v2377 = vand.u32 %v1860, 4294901760
        %v2378 = vsub.f32 %v1860, %v2377
        %2379 = vmatpush1.msra.mxu0 %v2378
        %2380 = vmatprep.subr.mxu0 0.0
        %v2381 = vand.u32 %v1861, 4294901760
        %v2382 = vsub.f32 %v1861, %v2381
        %2383 = vmatpush1.msra.mxu0 %v2382
        %2384 = vmatprep.subr.mxu0 0.0
        %v2385 = vand.u32 %v1862, 4294901760
        %v2386 = vsub.f32 %v1862, %v2385
        %2387 = vmatpush1.msra.mxu0 %v2386
        %2388 = vmatprep.subr.mxu0 0.0
        %v2389 = vand.u32 %v1863, 4294901760
        %v2390 = vsub.f32 %v1863, %v2389
        %2391 = vmatpush1.msra.mxu0 %v2390
        %2392 = vmatprep.subr.mxu0 0.0
        %v2393 = vand.u32 %v1864, 4294901760
        %v2394 = vsub.f32 %v1864, %v2393
        %2395 = vmatpush1.msra.mxu0 %v2394
        %2396 = vmatprep.subr.mxu0 0.0
        %v2397 = vand.u32 %v1865, 4294901760
        %v2398 = vsub.f32 %v1865, %v2397
        %2399 = vmatpush1.msra.mxu0 %v2398
        %2400 = vmatprep.subr.mxu0 0.0
        %v2401 = vand.u32 %v1866, 4294901760
        %v2402 = vsub.f32 %v1866, %v2401
        %2403 = vmatpush1.msra.mxu0 %v2402
        %2404 = vmatprep.subr.mxu0 0.0
        %v2405 = vand.u32 %v1867, 4294901760
        %v2406 = vsub.f32 %v1867, %v2405
        %2407 = vmatpush1.msra.mxu0 %v2406
        %2408 = vmatprep.subr.mxu0 0.0
        %v2409 = vand.u32 %v1868, 4294901760
        %v2410 = vsub.f32 %v1868, %v2409
        %2411 = vmatpush1.msra.mxu0 %v2410
        %2412 = vmatprep.subr.mxu0 0.0
        %v2413 = vand.u32 %v1869, 4294901760
        %v2414 = vsub.f32 %v1869, %v2413
        %2415 = vmatpush1.msra.mxu0 %v2414
        %2416 = vmatprep.subr.mxu0 0.0
        %2417 = vmatpush1.msra.mxu0 0.0
        %2418 = vmatprep.subr.mxu0 0.0
        %2419 = vmatpush1.msra.mxu0 0.0
        %2420 = vmatprep.subr.mxu0 0.0
        %2421 = vmatpush1.msra.mxu0 0.0
        %2422 = vmatprep.subr.mxu0 0.0
        %2423 = vmatpush1.msra.mxu0 0.0
        %2424 = vmatprep.subr.mxu0 0.0
        %2425 = vmatpush1.msra.mxu0 0.0
        %2426 = vmatprep.subr.mxu0 0.0
        %2427 = vmatpush1.msra.mxu0 0.0
        %2428 = vmatprep.subr.mxu0 0.0
        %2429 = vmatpush1.msra.mxu0 0.0
        %2430 = vmatprep.subr.mxu0 0.0
        %2431 = vmatpush1.msra.mxu0 0.0
        %2432 = vmatprep.subr.mxu0 0.0
        %2433 = vmatpush1.msra.mxu0 0.0
        %2434 = vmatprep.subr.mxu0 0.0
        %2435 = vmatpush1.msra.mxu0 0.0
        %2436 = vmatprep.subr.mxu0 0.0
        %2437 = vmatpush1.msra.mxu0 0.0
        %2438 = vmatprep.subr.mxu0 0.0
        %2439 = vmatpush1.msra.mxu0 0.0
        %2440 = vmatprep.subr.mxu0 0.0
        %2441 = vmatpush1.msra.mxu0 0.0
        %2442 = vmatprep.subr.mxu0 0.0
        %2443 = vmatpush1.msra.mxu0 0.0
        %2444 = vmatprep.subr.mxu0 0.0
        %2445 = vmatpush1.msra.mxu0 0.0
        %2446 = vmatprep.subr.mxu0 0.0
        %2447 = vmatpush1.msra.mxu0 0.0
        %2448 = vmatprep.mubr.f32.mxu0 0.0
        %v2449 = vand.u32 %v1838, 4294901760
        %v2450 = vsub.f32 %v1838, %v2449
        %2451 = vmatmul.mubr.f32.gmra.mrb[0].mxu0 %v2450
        %v2452 = vpop.f32.mrb[0].mxu0
        %v2453 = vadd.f32 %v2259, %v2452
        %v2454 = vpop.f32.mrb[0].mxu0
        %2455 = vmatprep.mubr.f32.mxu0 0.0
        %v2456 = vand.u32 %v1839, 4294901760
        %v2457 = vsub.f32 %v1839, %v2456
        %2458 = vmatmul.mubr.f32.gmra.mrb[0].mxu0 %v2457
        %v2459 = vpop.f32.mrb[0].mxu0
        %v2460 = vadd.f32 %v2265, %v2459
        %v2461 = vpop.f32.mrb[0].mxu0
        %2462 = vmatprep.mubr.f32.mxu0 0.0
        %v2463 = vand.u32 %v1840, 4294901760
        %v2464 = vsub.f32 %v1840, %v2463
        %2465 = vmatmul.mubr.f32.gmra.mrb[0].mxu0 %v2464
        %v2466 = vpop.f32.mrb[0].mxu0
        %v2467 = vadd.f32 %v2271, %v2466
        %v2468 = vpop.f32.mrb[0].mxu0
        %2469 = vmatprep.mubr.f32.mxu0 0.0
        %v2470 = vand.u32 %v1841, 4294901760
        %v2471 = vsub.f32 %v1841, %v2470
        %2472 = vmatmul.mubr.f32.gmra.mrb[0].mxu0 %v2471
        %v2473 = vpop.f32.mrb[0].mxu0
        %v2474 = vadd.f32 %v2277, %v2473
        %v2475 = vpop.f32.mrb[0].mxu0
        %2476 = vmatprep.mubr.f32.mxu0 0.0
        %v2477 = vand.u32 %v1842, 4294901760
        %v2478 = vsub.f32 %v1842, %v2477
        %2479 = vmatmul.mubr.f32.gmra.mrb[0].mxu0 %v2478
        %v2480 = vpop.f32.mrb[0].mxu0
        %v2481 = vadd.f32 %v2283, %v2480
        %v2482 = vpop.f32.mrb[0].mxu0
        %2483 = vmatprep.mubr.f32.mxu0 0.0
        %v2484 = vand.u32 %v1843, 4294901760
        %v2485 = vsub.f32 %v1843, %v2484
        %2486 = vmatmul.mubr.f32.gmra.mrb[0].mxu0 %v2485
        %v2487 = vpop.f32.mrb[0].mxu0
        %v2488 = vadd.f32 %v2289, %v2487
        %v2489 = vpop.f32.mrb[0].mxu0
        %2490 = vmatprep.mubr.f32.mxu0 0.0
        %v2491 = vand.u32 %v1844, 4294901760
        %v2492 = vsub.f32 %v1844, %v2491
        %2493 = vmatmul.mubr.f32.gmra.mrb[0].mxu0 %v2492
        %v2494 = vpop.f32.mrb[0].mxu0
        %v2495 = vadd.f32 %v2295, %v2494
        %v2496 = vpop.f32.mrb[0].mxu0
        %2497 = vmatprep.mubr.f32.mxu0 0.0
        %v2498 = vand.u32 %v1845, 4294901760
        %v2499 = vsub.f32 %v1845, %v2498
        %2500 = vmatmul.mubr.f32.gmra.mrb[0].mxu0 %v2499
        %v2501 = vpop.f32.mrb[0].mxu0
        %v2502 = vadd.f32 %v2301, %v2501
        %v2503 = vpop.f32.mrb[0].mxu0
        %2504 = vmatprep.mubr.f32.mxu0 0.0
        %v2505 = vand.u32 %v1846, 4294901760
        %v2506 = vsub.f32 %v1846, %v2505
        %2507 = vmatmul.mubr.f32.gmra.mrb[0].mxu0 %v2506
        %v2508 = vpop.f32.mrb[0].mxu0
        %v2509 = vadd.f32 %v2307, %v2508
        %v2510 = vpop.f32.mrb[0].mxu0
        %2511 = vmatprep.mubr.f32.mxu0 0.0
        %v2512 = vand.u32 %v1847, 4294901760
        %v2513 = vsub.f32 %v1847, %v2512
        %2514 = vmatmul.mubr.f32.gmra.mrb[0].mxu0 %v2513
        %v2515 = vpop.f32.mrb[0].mxu0
        %v2516 = vadd.f32 %v2313, %v2515
        %v2517 = vpop.f32.mrb[0].mxu0
        %2518 = vmatprep.mubr.f32.mxu0 0.0
        %v2519 = vand.u32 %v1848, 4294901760
        %v2520 = vsub.f32 %v1848, %v2519
        %2521 = vmatmul.mubr.f32.gmra.mrb[0].mxu0 %v2520
        %v2522 = vpop.f32.mrb[0].mxu0
        %v2523 = vadd.f32 %v2319, %v2522
        %v2524 = vpop.f32.mrb[0].mxu0
        %2525 = vmatprep.mubr.f32.mxu0 0.0
        %v2526 = vand.u32 %v1849, 4294901760
        %v2527 = vsub.f32 %v1849, %v2526
        %2528 = vmatmul.mubr.f32.gmra.mrb[0].mxu0 %v2527
        %v2529 = vpop.f32.mrb[0].mxu0
        %v2530 = vadd.f32 %v2325, %v2529
        %v2531 = vpop.f32.mrb[0].mxu0
        %2532 = vmatprep.mubr.f32.mxu0 0.0
        %v2533 = vand.u32 %v1850, 4294901760
        %v2534 = vsub.f32 %v1850, %v2533
        %2535 = vmatmul.mubr.f32.gmra.mrb[0].mxu0 %v2534
        %v2536 = vpop.f32.mrb[0].mxu0
        %v2537 = vadd.f32 %v2331, %v2536
        %v2538 = vpop.f32.mrb[0].mxu0
        %2539 = vmatprep.mubr.f32.mxu0 0.0
        %v2540 = vand.u32 %v1851, 4294901760
        %v2541 = vsub.f32 %v1851, %v2540
        %2542 = vmatmul.mubr.f32.gmra.mrb[0].mxu0 %v2541
        %v2543 = vpop.f32.mrb[0].mxu0
        %v2544 = vadd.f32 %v2337, %v2543
        %v2545 = vpop.f32.mrb[0].mxu0
        %2546 = vmatprep.mubr.f32.mxu0 0.0
        %v2547 = vand.u32 %v1852, 4294901760
        %v2548 = vsub.f32 %v1852, %v2547
        %2549 = vmatmul.mubr.f32.gmra.mrb[0].mxu0 %v2548
        %v2550 = vpop.f32.mrb[0].mxu0
        %v2551 = vadd.f32 %v2343, %v2550
        %v2552 = vpop.f32.mrb[0].mxu0
        %2553 = vmatprep.mubr.f32.mxu0 0.0
        %v2554 = vand.u32 %v1853, 4294901760
        %v2555 = vsub.f32 %v1853, %v2554
        %2556 = vmatmul.mubr.f32.gmra.mrb[0].mxu0 %v2555
        %v2557 = vpop.f32.mrb[0].mxu0
        %v2558 = vadd.f32 %v2349, %v2557
        %v2559 = vpop.f32.mrb[0].mxu0
        %2560 = vdwg.mxu0
        %2561 = vmatprep.subr.mxu0 0.0
        %v2562 = vand.u32 %v1854, 4294901760
        %2563 = vmatpush1.msra.mxu0 %v2562
        %2564 = vmatprep.subr.mxu0 0.0
        %v2565 = vand.u32 %v1855, 4294901760
        %2566 = vmatpush1.msra.mxu0 %v2565
        %2567 = vmatprep.subr.mxu0 0.0
        %v2568 = vand.u32 %v1856, 4294901760
        %2569 = vmatpush1.msra.mxu0 %v2568
        %2570 = vmatprep.subr.mxu0 0.0
        %v2571 = vand.u32 %v1857, 4294901760
        %2572 = vmatpush1.msra.mxu0 %v2571
        %2573 = vmatprep.subr.mxu0 0.0
        %v2574 = vand.u32 %v1858, 4294901760
        %2575 = vmatpush1.msra.mxu0 %v2574
        %2576 = vmatprep.subr.mxu0 0.0
        %v2577 = vand.u32 %v1859, 4294901760
        %2578 = vmatpush1.msra.mxu0 %v2577
        %2579 = vmatprep.subr.mxu0 0.0
        %v2580 = vand.u32 %v1860, 4294901760
        %2581 = vmatpush1.msra.mxu0 %v2580
        %2582 = vmatprep.subr.mxu0 0.0
        %v2583 = vand.u32 %v1861, 4294901760
        %2584 = vmatpush1.msra.mxu0 %v2583
        %2585 = vmatprep.subr.mxu0 0.0
        %v2586 = vand.u32 %v1862, 4294901760
        %2587 = vmatpush1.msra.mxu0 %v2586
        %2588 = vmatprep.subr.mxu0 0.0
        %v2589 = vand.u32 %v1863, 4294901760
        %2590 = vmatpush1.msra.mxu0 %v2589
        %2591 = vmatprep.subr.mxu0 0.0
        %v2592 = vand.u32 %v1864, 4294901760
        %2593 = vmatpush1.msra.mxu0 %v2592
        %2594 = vmatprep.subr.mxu0 0.0
        %v2595 = vand.u32 %v1865, 4294901760
        %2596 = vmatpush1.msra.mxu0 %v2595
        %2597 = vmatprep.subr.mxu0 0.0
        %v2598 = vand.u32 %v1866, 4294901760
        %2599 = vmatpush1.msra.mxu0 %v2598
        %2600 = vmatprep.subr.mxu0 0.0
        %v2601 = vand.u32 %v1867, 4294901760
        %2602 = vmatpush1.msra.mxu0 %v2601
        %2603 = vmatprep.subr.mxu0 0.0
        %v2604 = vand.u32 %v1868, 4294901760
        %2605 = vmatpush1.msra.mxu0 %v2604
        %2606 = vmatprep.subr.mxu0 0.0
        %v2607 = vand.u32 %v1869, 4294901760
        %2608 = vmatpush1.msra.mxu0 %v2607
        %2609 = vmatprep.subr.mxu0 0.0
        %2610 = vmatpush1.msra.mxu0 0.0
        %2611 = vmatprep.subr.mxu0 0.0
        %2612 = vmatpush1.msra.mxu0 0.0
        %2613 = vmatprep.subr.mxu0 0.0
        %2614 = vmatpush1.msra.mxu0 0.0
        %2615 = vmatprep.subr.mxu0 0.0
        %2616 = vmatpush1.msra.mxu0 0.0
        %2617 = vmatprep.subr.mxu0 0.0
        %2618 = vmatpush1.msra.mxu0 0.0
        %2619 = vmatprep.subr.mxu0 0.0
        %2620 = vmatpush1.msra.mxu0 0.0
        %2621 = vmatprep.subr.mxu0 0.0
        %2622 = vmatpush1.msra.mxu0 0.0
        %2623 = vmatprep.subr.mxu0 0.0
        %2624 = vmatpush1.msra.mxu0 0.0
        %2625 = vmatprep.subr.mxu0 0.0
        %2626 = vmatpush1.msra.mxu0 0.0
        %2627 = vmatprep.subr.mxu0 0.0
        %2628 = vmatpush1.msra.mxu0 0.0
        %2629 = vmatprep.subr.mxu0 0.0
        %2630 = vmatpush1.msra.mxu0 0.0
        %2631 = vmatprep.subr.mxu0 0.0
        %2632 = vmatpush1.msra.mxu0 0.0
        %2633 = vmatprep.subr.mxu0 0.0
        %2634 = vmatpush1.msra.mxu0 0.0
        %2635 = vmatprep.subr.mxu0 0.0
        %2636 = vmatpush1.msra.mxu0 0.0
        %2637 = vmatprep.subr.mxu0 0.0
        %2638 = vmatpush1.msra.mxu0 0.0
        %2639 = vmatprep.subr.mxu0 0.0
        %2640 = vmatpush1.msra.mxu0 0.0
        %2641 = vmatprep.mubr.f32.mxu0 0.0
        %v2642 = vand.u32 %v1838, 4294901760
        %v2643 = vsub.f32 %v1838, %v2642
        %v2644 = vand.u32 %v2643, 4294901760
        %2645 = vmatmul.mubr.f32.gmra.mrb[0].mxu0 %v2644
        %v2646 = vpop.f32.mrb[0].mxu0
        %v2647 = vadd.f32 %v2453, %v2646
        %v2648 = vpop.f32.mrb[0].mxu0
        %2649 = vmatprep.mubr.f32.mxu0 0.0
        %v2650 = vand.u32 %v1839, 4294901760
        %v2651 = vsub.f32 %v1839, %v2650
        %v2652 = vand.u32 %v2651, 4294901760
        %2653 = vmatmul.mubr.f32.gmra.mrb[0].mxu0 %v2652
        %v2654 = vpop.f32.mrb[0].mxu0
        %v2655 = vadd.f32 %v2460, %v2654
        %v2656 = vpop.f32.mrb[0].mxu0
        %2657 = vmatprep.mubr.f32.mxu0 0.0
        %v2658 = vand.u32 %v1840, 4294901760
        %v2659 = vsub.f32 %v1840, %v2658
        %v2660 = vand.u32 %v2659, 4294901760
        %2661 = vmatmul.mubr.f32.gmra.mrb[0].mxu0 %v2660
        %v2662 = vpop.f32.mrb[0].mxu0
        %v2663 = vadd.f32 %v2467, %v2662
        %v2664 = vpop.f32.mrb[0].mxu0
        %2665 = vmatprep.mubr.f32.mxu0 0.0
        %v2666 = vand.u32 %v1841, 4294901760
        %v2667 = vsub.f32 %v1841, %v2666
        %v2668 = vand.u32 %v2667, 4294901760
        %2669 = vmatmul.mubr.f32.gmra.mrb[0].mxu0 %v2668
        %v2670 = vpop.f32.mrb[0].mxu0
        %v2671 = vadd.f32 %v2474, %v2670
        %v2672 = vpop.f32.mrb[0].mxu0
        %2673 = vmatprep.mubr.f32.mxu0 0.0
        %v2674 = vand.u32 %v1842, 4294901760
        %v2675 = vsub.f32 %v1842, %v2674
        %v2676 = vand.u32 %v2675, 4294901760
        %2677 = vmatmul.mubr.f32.gmra.mrb[0].mxu0 %v2676
        %v2678 = vpop.f32.mrb[0].mxu0
        %v2679 = vadd.f32 %v2481, %v2678
        %v2680 = vpop.f32.mrb[0].mxu0
        %2681 = vmatprep.mubr.f32.mxu0 0.0
        %v2682 = vand.u32 %v1843, 4294901760
        %v2683 = vsub.f32 %v1843, %v2682
        %v2684 = vand.u32 %v2683, 4294901760
        %2685 = vmatmul.mubr.f32.gmra.mrb[0].mxu0 %v2684
        %v2686 = vpop.f32.mrb[0].mxu0
        %v2687 = vadd.f32 %v2488, %v2686
        %v2688 = vpop.f32.mrb[0].mxu0
        %2689 = vmatprep.mubr.f32.mxu0 0.0
        %v2690 = vand.u32 %v1844, 4294901760
        %v2691 = vsub.f32 %v1844, %v2690
        %v2692 = vand.u32 %v2691, 4294901760
        %2693 = vmatmul.mubr.f32.gmra.mrb[0].mxu0 %v2692
        %v2694 = vpop.f32.mrb[0].mxu0
        %v2695 = vadd.f32 %v2495, %v2694
        %v2696 = vpop.f32.mrb[0].mxu0
        %2697 = vmatprep.mubr.f32.mxu0 0.0
        %v2698 = vand.u32 %v1845, 4294901760
        %v2699 = vsub.f32 %v1845, %v2698
        %v2700 = vand.u32 %v2699, 4294901760
        %2701 = vmatmul.mubr.f32.gmra.mrb[0].mxu0 %v2700
        %v2702 = vpop.f32.mrb[0].mxu0
        %v2703 = vadd.f32 %v2502, %v2702
        %v2704 = vpop.f32.mrb[0].mxu0
        %2705 = vmatprep.mubr.f32.mxu0 0.0
        %v2706 = vand.u32 %v1846, 4294901760
        %v2707 = vsub.f32 %v1846, %v2706
        %v2708 = vand.u32 %v2707, 4294901760
        %2709 = vmatmul.mubr.f32.gmra.mrb[0].mxu0 %v2708
        %v2710 = vpop.f32.mrb[0].mxu0
        %v2711 = vadd.f32 %v2509, %v2710
        %v2712 = vpop.f32.mrb[0].mxu0
        %2713 = vmatprep.mubr.f32.mxu0 0.0
        %v2714 = vand.u32 %v1847, 4294901760
        %v2715 = vsub.f32 %v1847, %v2714
        %v2716 = vand.u32 %v2715, 4294901760
        %2717 = vmatmul.mubr.f32.gmra.mrb[0].mxu0 %v2716
        %v2718 = vpop.f32.mrb[0].mxu0
        %v2719 = vadd.f32 %v2516, %v2718
        %v2720 = vpop.f32.mrb[0].mxu0
        %2721 = vmatprep.mubr.f32.mxu0 0.0
        %v2722 = vand.u32 %v1848, 4294901760
        %v2723 = vsub.f32 %v1848, %v2722
        %v2724 = vand.u32 %v2723, 4294901760
        %2725 = vmatmul.mubr.f32.gmra.mrb[0].mxu0 %v2724
        %v2726 = vpop.f32.mrb[0].mxu0
        %v2727 = vadd.f32 %v2523, %v2726
        %v2728 = vpop.f32.mrb[0].mxu0
        %2729 = vmatprep.mubr.f32.mxu0 0.0
        %v2730 = vand.u32 %v1849, 4294901760
        %v2731 = vsub.f32 %v1849, %v2730
        %v2732 = vand.u32 %v2731, 4294901760
        %2733 = vmatmul.mubr.f32.gmra.mrb[0].mxu0 %v2732
        %v2734 = vpop.f32.mrb[0].mxu0
        %v2735 = vadd.f32 %v2530, %v2734
        %v2736 = vpop.f32.mrb[0].mxu0
        %2737 = vmatprep.mubr.f32.mxu0 0.0
        %v2738 = vand.u32 %v1850, 4294901760
        %v2739 = vsub.f32 %v1850, %v2738
        %v2740 = vand.u32 %v2739, 4294901760
        %2741 = vmatmul.mubr.f32.gmra.mrb[0].mxu0 %v2740
        %v2742 = vpop.f32.mrb[0].mxu0
        %v2743 = vadd.f32 %v2537, %v2742
        %v2744 = vpop.f32.mrb[0].mxu0
        %2745 = vmatprep.mubr.f32.mxu0 0.0
        %v2746 = vand.u32 %v1851, 4294901760
        %v2747 = vsub.f32 %v1851, %v2746
        %v2748 = vand.u32 %v2747, 4294901760
        %2749 = vmatmul.mubr.f32.gmra.mrb[0].mxu0 %v2748
        %v2750 = vpop.f32.mrb[0].mxu0
        %v2751 = vadd.f32 %v2544, %v2750
        %v2752 = vpop.f32.mrb[0].mxu0
        %2753 = vmatprep.mubr.f32.mxu0 0.0
        %v2754 = vand.u32 %v1852, 4294901760
        %v2755 = vsub.f32 %v1852, %v2754
        %v2756 = vand.u32 %v2755, 4294901760
        %2757 = vmatmul.mubr.f32.gmra.mrb[0].mxu0 %v2756
        %v2758 = vpop.f32.mrb[0].mxu0
        %v2759 = vadd.f32 %v2551, %v2758
        %v2760 = vpop.f32.mrb[0].mxu0
        %2761 = vmatprep.mubr.f32.mxu0 0.0
        %v2762 = vand.u32 %v1853, 4294901760
        %v2763 = vsub.f32 %v1853, %v2762
        %v2764 = vand.u32 %v2763, 4294901760
        %2765 = vmatmul.mubr.f32.gmra.mrb[0].mxu0 %v2764
        %v2766 = vpop.f32.mrb[0].mxu0
        %v2767 = vadd.f32 %v2558, %v2766
        %v2768 = vpop.f32.mrb[0].mxu0
        %2769 = vdwg.mxu0
        %2770 = vmatprep.subr.mxu0 0.0
        %v2771 = vand.u32 %v1854, 4294901760
        %v2772 = vsub.f32 %v1854, %v2771
        %v2773 = vand.u32 %v2772, 4294901760
        %2774 = vmatpush1.msra.mxu0 %v2773
        %2775 = vmatprep.subr.mxu0 0.0
        %v2776 = vand.u32 %v1855, 4294901760
        %v2777 = vsub.f32 %v1855, %v2776
        %v2778 = vand.u32 %v2777, 4294901760
        %2779 = vmatpush1.msra.mxu0 %v2778
        %2780 = vmatprep.subr.mxu0 0.0
        %v2781 = vand.u32 %v1856, 4294901760
        %v2782 = vsub.f32 %v1856, %v2781
        %v2783 = vand.u32 %v2782, 4294901760
        %2784 = vmatpush1.msra.mxu0 %v2783
        %2785 = vmatprep.subr.mxu0 0.0
        %v2786 = vand.u32 %v1857, 4294901760
        %v2787 = vsub.f32 %v1857, %v2786
        %v2788 = vand.u32 %v2787, 4294901760
        %2789 = vmatpush1.msra.mxu0 %v2788
        %2790 = vmatprep.subr.mxu0 0.0
        %v2791 = vand.u32 %v1858, 4294901760
        %v2792 = vsub.f32 %v1858, %v2791
        %v2793 = vand.u32 %v2792, 4294901760
        %2794 = vmatpush1.msra.mxu0 %v2793
        %2795 = vmatprep.subr.mxu0 0.0
        %v2796 = vand.u32 %v1859, 4294901760
        %v2797 = vsub.f32 %v1859, %v2796
        %v2798 = vand.u32 %v2797, 4294901760
        %2799 = vmatpush1.msra.mxu0 %v2798
        %2800 = vmatprep.subr.mxu0 0.0
        %v2801 = vand.u32 %v1860, 4294901760
        %v2802 = vsub.f32 %v1860, %v2801
        %v2803 = vand.u32 %v2802, 4294901760
        %2804 = vmatpush1.msra.mxu0 %v2803
        %2805 = vmatprep.subr.mxu0 0.0
        %v2806 = vand.u32 %v1861, 4294901760
        %v2807 = vsub.f32 %v1861, %v2806
        %v2808 = vand.u32 %v2807, 4294901760
        %2809 = vmatpush1.msra.mxu0 %v2808
        %2810 = vmatprep.subr.mxu0 0.0
        %v2811 = vand.u32 %v1862, 4294901760
        %v2812 = vsub.f32 %v1862, %v2811
        %v2813 = vand.u32 %v2812, 4294901760
        %2814 = vmatpush1.msra.mxu0 %v2813
        %2815 = vmatprep.subr.mxu0 0.0
        %v2816 = vand.u32 %v1863, 4294901760
        %v2817 = vsub.f32 %v1863, %v2816
        %v2818 = vand.u32 %v2817, 4294901760
        %2819 = vmatpush1.msra.mxu0 %v2818
        %2820 = vmatprep.subr.mxu0 0.0
        %v2821 = vand.u32 %v1864, 4294901760
        %v2822 = vsub.f32 %v1864, %v2821
        %v2823 = vand.u32 %v2822, 4294901760
        %2824 = vmatpush1.msra.mxu0 %v2823
        %2825 = vmatprep.subr.mxu0 0.0
        %v2826 = vand.u32 %v1865, 4294901760
        %v2827 = vsub.f32 %v1865, %v2826
        %v2828 = vand.u32 %v2827, 4294901760
        %2829 = vmatpush1.msra.mxu0 %v2828
        %2830 = vmatprep.subr.mxu0 0.0
        %v2831 = vand.u32 %v1866, 4294901760
        %v2832 = vsub.f32 %v1866, %v2831
        %v2833 = vand.u32 %v2832, 4294901760
        %2834 = vmatpush1.msra.mxu0 %v2833
        %2835 = vmatprep.subr.mxu0 0.0
        %v2836 = vand.u32 %v1867, 4294901760
        %v2837 = vsub.f32 %v1867, %v2836
        %v2838 = vand.u32 %v2837, 4294901760
        %2839 = vmatpush1.msra.mxu0 %v2838
        %2840 = vmatprep.subr.mxu0 0.0
        %v2841 = vand.u32 %v1868, 4294901760
        %v2842 = vsub.f32 %v1868, %v2841
        %v2843 = vand.u32 %v2842, 4294901760
        %2844 = vmatpush1.msra.mxu0 %v2843
        %2845 = vmatprep.subr.mxu0 0.0
        %v2846 = vand.u32 %v1869, 4294901760
        %v2847 = vsub.f32 %v1869, %v2846
        %v2848 = vand.u32 %v2847, 4294901760
        %2849 = vmatpush1.msra.mxu0 %v2848
        %2850 = vmatprep.subr.mxu0 0.0
        %2851 = vmatpush1.msra.mxu0 0.0
        %2852 = vmatprep.subr.mxu0 0.0
        %2853 = vmatpush1.msra.mxu0 0.0
        %2854 = vmatprep.subr.mxu0 0.0
        %2855 = vmatpush1.msra.mxu0 0.0
        %2856 = vmatprep.subr.mxu0 0.0
        %2857 = vmatpush1.msra.mxu0 0.0
        %2858 = vmatprep.subr.mxu0 0.0
        %2859 = vmatpush1.msra.mxu0 0.0
        %2860 = vmatprep.subr.mxu0 0.0
        %2861 = vmatpush1.msra.mxu0 0.0
        %2862 = vmatprep.subr.mxu0 0.0
        %2863 = vmatpush1.msra.mxu0 0.0
        %2864 = vmatprep.subr.mxu0 0.0
        %2865 = vmatpush1.msra.mxu0 0.0
        %2866 = vmatprep.subr.mxu0 0.0
        %2867 = vmatpush1.msra.mxu0 0.0
        %2868 = vmatprep.subr.mxu0 0.0
        %2869 = vmatpush1.msra.mxu0 0.0
        %2870 = vmatprep.subr.mxu0 0.0
        %2871 = vmatpush1.msra.mxu0 0.0
        %2872 = vmatprep.subr.mxu0 0.0
        %2873 = vmatpush1.msra.mxu0 0.0
        %2874 = vmatprep.subr.mxu0 0.0
        %2875 = vmatpush1.msra.mxu0 0.0
        %2876 = vmatprep.subr.mxu0 0.0
        %2877 = vmatpush1.msra.mxu0 0.0
        %2878 = vmatprep.subr.mxu0 0.0
        %2879 = vmatpush1.msra.mxu0 0.0
        %2880 = vmatprep.subr.mxu0 0.0
        %2881 = vmatpush1.msra.mxu0 0.0
        %2882 = vmatprep.mubr.f32.mxu0 0.0
        %v2883 = vand.u32 %v1838, 4294901760
        %2884 = vmatmul.mubr.f32.gmra.mrb[0].mxu0 %v2883
        %v2885 = vpop.f32.mrb[0].mxu0
        %v2886 = vadd.f32 %v2647, %v2885
        %v2887 = vpop.f32.mrb[0].mxu0
        %2888 = vmatprep.mubr.f32.mxu0 0.0
        %v2889 = vand.u32 %v1839, 4294901760
        %2890 = vmatmul.mubr.f32.gmra.mrb[0].mxu0 %v2889
        %v2891 = vpop.f32.mrb[0].mxu0
        %v2892 = vadd.f32 %v2655, %v2891
        %v2893 = vpop.f32.mrb[0].mxu0
        %2894 = vmatprep.mubr.f32.mxu0 0.0
        %v2895 = vand.u32 %v1840, 4294901760
        %2896 = vmatmul.mubr.f32.gmra.mrb[0].mxu0 %v2895
        %v2897 = vpop.f32.mrb[0].mxu0
        %v2898 = vadd.f32 %v2663, %v2897
        %v2899 = vpop.f32.mrb[0].mxu0
        %2900 = vmatprep.mubr.f32.mxu0 0.0
        %v2901 = vand.u32 %v1841, 4294901760
        %2902 = vmatmul.mubr.f32.gmra.mrb[0].mxu0 %v2901
        %v2903 = vpop.f32.mrb[0].mxu0
        %v2904 = vadd.f32 %v2671, %v2903
        %v2905 = vpop.f32.mrb[0].mxu0
        %2906 = vmatprep.mubr.f32.mxu0 0.0
        %v2907 = vand.u32 %v1842, 4294901760
        %2908 = vmatmul.mubr.f32.gmra.mrb[0].mxu0 %v2907
        %v2909 = vpop.f32.mrb[0].mxu0
        %v2910 = vadd.f32 %v2679, %v2909
        %v2911 = vpop.f32.mrb[0].mxu0
        %2912 = vmatprep.mubr.f32.mxu0 0.0
        %v2913 = vand.u32 %v1843, 4294901760
        %2914 = vmatmul.mubr.f32.gmra.mrb[0].mxu0 %v2913
        %v2915 = vpop.f32.mrb[0].mxu0
        %v2916 = vadd.f32 %v2687, %v2915
        %v2917 = vpop.f32.mrb[0].mxu0
        %2918 = vmatprep.mubr.f32.mxu0 0.0
        %v2919 = vand.u32 %v1844, 4294901760
        %2920 = vmatmul.mubr.f32.gmra.mrb[0].mxu0 %v2919
        %v2921 = vpop.f32.mrb[0].mxu0
        %v2922 = vadd.f32 %v2695, %v2921
        %v2923 = vpop.f32.mrb[0].mxu0
        %2924 = vmatprep.mubr.f32.mxu0 0.0
        %v2925 = vand.u32 %v1845, 4294901760
        %2926 = vmatmul.mubr.f32.gmra.mrb[0].mxu0 %v2925
        %v2927 = vpop.f32.mrb[0].mxu0
        %v2928 = vadd.f32 %v2703, %v2927
        %v2929 = vpop.f32.mrb[0].mxu0
        %2930 = vmatprep.mubr.f32.mxu0 0.0
        %v2931 = vand.u32 %v1846, 4294901760
        %2932 = vmatmul.mubr.f32.gmra.mrb[0].mxu0 %v2931
        %v2933 = vpop.f32.mrb[0].mxu0
        %v2934 = vadd.f32 %v2711, %v2933
        %v2935 = vpop.f32.mrb[0].mxu0
        %2936 = vmatprep.mubr.f32.mxu0 0.0
        %v2937 = vand.u32 %v1847, 4294901760
        %2938 = vmatmul.mubr.f32.gmra.mrb[0].mxu0 %v2937
        %v2939 = vpop.f32.mrb[0].mxu0
        %v2940 = vadd.f32 %v2719, %v2939
        %v2941 = vpop.f32.mrb[0].mxu0
        %2942 = vmatprep.mubr.f32.mxu0 0.0
        %v2943 = vand.u32 %v1848, 4294901760
        %2944 = vmatmul.mubr.f32.gmra.mrb[0].mxu0 %v2943
        %v2945 = vpop.f32.mrb[0].mxu0
        %v2946 = vadd.f32 %v2727, %v2945
        %v2947 = vpop.f32.mrb[0].mxu0
        %2948 = vmatprep.mubr.f32.mxu0 0.0
        %v2949 = vand.u32 %v1849, 4294901760
        %2950 = vmatmul.mubr.f32.gmra.mrb[0].mxu0 %v2949
        %v2951 = vpop.f32.mrb[0].mxu0
        %v2952 = vadd.f32 %v2735, %v2951
        %v2953 = vpop.f32.mrb[0].mxu0
        %2954 = vmatprep.mubr.f32.mxu0 0.0
        %v2955 = vand.u32 %v1850, 4294901760
        %2956 = vmatmul.mubr.f32.gmra.mrb[0].mxu0 %v2955
        %v2957 = vpop.f32.mrb[0].mxu0
        %v2958 = vadd.f32 %v2743, %v2957
        %v2959 = vpop.f32.mrb[0].mxu0
        %2960 = vmatprep.mubr.f32.mxu0 0.0
        %v2961 = vand.u32 %v1851, 4294901760
        %2962 = vmatmul.mubr.f32.gmra.mrb[0].mxu0 %v2961
        %v2963 = vpop.f32.mrb[0].mxu0
        %v2964 = vadd.f32 %v2751, %v2963
        %v2965 = vpop.f32.mrb[0].mxu0
        %2966 = vmatprep.mubr.f32.mxu0 0.0
        %v2967 = vand.u32 %v1852, 4294901760
        %2968 = vmatmul.mubr.f32.gmra.mrb[0].mxu0 %v2967
        %v2969 = vpop.f32.mrb[0].mxu0
        %v2970 = vadd.f32 %v2759, %v2969
        %v2971 = vpop.f32.mrb[0].mxu0
        %2972 = vmatprep.mubr.f32.mxu0 0.0
        %v2973 = vand.u32 %v1853, 4294901760
        %2974 = vmatmul.mubr.f32.gmra.mrb[0].mxu0 %v2973
        %v2975 = vpop.f32.mrb[0].mxu0
        %v2976 = vadd.f32 %v2767, %v2975
        %v2977 = vpop.f32.mrb[0].mxu0
        %2978 = vdwg.mxu0
        %2979 = vmatprep.subr.mxu0 0.0
        %v2980 = vand.u32 %v1854, 4294901760
        %2981 = vmatpush1.msra.mxu0 %v2980
        %2982 = vmatprep.subr.mxu0 0.0
        %v2983 = vand.u32 %v1855, 4294901760
        %2984 = vmatpush1.msra.mxu0 %v2983
        %2985 = vmatprep.subr.mxu0 0.0
        %v2986 = vand.u32 %v1856, 4294901760
        %2987 = vmatpush1.msra.mxu0 %v2986
        %2988 = vmatprep.subr.mxu0 0.0
        %v2989 = vand.u32 %v1857, 4294901760
        %2990 = vmatpush1.msra.mxu0 %v2989
        %2991 = vmatprep.subr.mxu0 0.0
        %v2992 = vand.u32 %v1858, 4294901760
        %2993 = vmatpush1.msra.mxu0 %v2992
        %2994 = vmatprep.subr.mxu0 0.0
        %v2995 = vand.u32 %v1859, 4294901760
        %2996 = vmatpush1.msra.mxu0 %v2995
        %2997 = vmatprep.subr.mxu0 0.0
        %v2998 = vand.u32 %v1860, 4294901760
        %2999 = vmatpush1.msra.mxu0 %v2998
        %3000 = vmatprep.subr.mxu0 0.0
        %v3001 = vand.u32 %v1861, 4294901760
        %3002 = vmatpush1.msra.mxu0 %v3001
        %3003 = vmatprep.subr.mxu0 0.0
        %v3004 = vand.u32 %v1862, 4294901760
        %3005 = vmatpush1.msra.mxu0 %v3004
        %3006 = vmatprep.subr.mxu0 0.0
        %v3007 = vand.u32 %v1863, 4294901760
        %3008 = vmatpush1.msra.mxu0 %v3007
        %3009 = vmatprep.subr.mxu0 0.0
        %v3010 = vand.u32 %v1864, 4294901760
        %3011 = vmatpush1.msra.mxu0 %v3010
        %3012 = vmatprep.subr.mxu0 0.0
        %v3013 = vand.u32 %v1865, 4294901760
        %3014 = vmatpush1.msra.mxu0 %v3013
        %3015 = vmatprep.subr.mxu0 0.0
        %v3016 = vand.u32 %v1866, 4294901760
        %3017 = vmatpush1.msra.mxu0 %v3016
        %3018 = vmatprep.subr.mxu0 0.0
        %v3019 = vand.u32 %v1867, 4294901760
        %3020 = vmatpush1.msra.mxu0 %v3019
        %3021 = vmatprep.subr.mxu0 0.0
        %v3022 = vand.u32 %v1868, 4294901760
        %3023 = vmatpush1.msra.mxu0 %v3022
        %3024 = vmatprep.subr.mxu0 0.0
        %v3025 = vand.u32 %v1869, 4294901760
        %3026 = vmatpush1.msra.mxu0 %v3025
        %3027 = vmatprep.subr.mxu0 0.0
        %3028 = vmatpush1.msra.mxu0 0.0
        %3029 = vmatprep.subr.mxu0 0.0
        %3030 = vmatpush1.msra.mxu0 0.0
        %3031 = vmatprep.subr.mxu0 0.0
        %3032 = vmatpush1.msra.mxu0 0.0
        %3033 = vmatprep.subr.mxu0 0.0
        %3034 = vmatpush1.msra.mxu0 0.0
        %3035 = vmatprep.subr.mxu0 0.0
        %3036 = vmatpush1.msra.mxu0 0.0
        %3037 = vmatprep.subr.mxu0 0.0
        %3038 = vmatpush1.msra.mxu0 0.0
        %3039 = vmatprep.subr.mxu0 0.0
        %3040 = vmatpush1.msra.mxu0 0.0
        %3041 = vmatprep.subr.mxu0 0.0
        %3042 = vmatpush1.msra.mxu0 0.0
        %3043 = vmatprep.subr.mxu0 0.0
        %3044 = vmatpush1.msra.mxu0 0.0
        %3045 = vmatprep.subr.mxu0 0.0
        %3046 = vmatpush1.msra.mxu0 0.0
        %3047 = vmatprep.subr.mxu0 0.0
        %3048 = vmatpush1.msra.mxu0 0.0
        %3049 = vmatprep.subr.mxu0 0.0
        %3050 = vmatpush1.msra.mxu0 0.0
        %3051 = vmatprep.subr.mxu0 0.0
        %3052 = vmatpush1.msra.mxu0 0.0
        %3053 = vmatprep.subr.mxu0 0.0
        %3054 = vmatpush1.msra.mxu0 0.0
        %3055 = vmatprep.subr.mxu0 0.0
        %3056 = vmatpush1.msra.mxu0 0.0
        %3057 = vmatprep.subr.mxu0 0.0
        %3058 = vmatpush1.msra.mxu0 0.0
        %3059 = vmatprep.mubr.f32.mxu0 0.0
        %v3060 = vand.u32 %v1838, 4294901760
        %3061 = vmatmul.mubr.f32.gmra.mrb[0].mxu0 %v3060
        %v3062 = vpop.f32.mrb[0].mxu0
        %v3063 = vadd.f32 %v2886, %v3062
        %v3064 = vpop.f32.mrb[0].mxu0
        %3065 = vmatprep.mubr.f32.mxu0 0.0
        %v3066 = vand.u32 %v1839, 4294901760
        %3067 = vmatmul.mubr.f32.gmra.mrb[0].mxu0 %v3066
        %v3068 = vpop.f32.mrb[0].mxu0
        %v3069 = vadd.f32 %v2892, %v3068
        %v3070 = vpop.f32.mrb[0].mxu0
        %3071 = vmatprep.mubr.f32.mxu0 0.0
        %v3072 = vand.u32 %v1840, 4294901760
        %3073 = vmatmul.mubr.f32.gmra.mrb[0].mxu0 %v3072
        %v3074 = vpop.f32.mrb[0].mxu0
        %v3075 = vadd.f32 %v2898, %v3074
        %v3076 = vpop.f32.mrb[0].mxu0
        %3077 = vmatprep.mubr.f32.mxu0 0.0
        %v3078 = vand.u32 %v1841, 4294901760
        %3079 = vmatmul.mubr.f32.gmra.mrb[0].mxu0 %v3078
        %v3080 = vpop.f32.mrb[0].mxu0
        %v3081 = vadd.f32 %v2904, %v3080
        %v3082 = vpop.f32.mrb[0].mxu0
        %3083 = vmatprep.mubr.f32.mxu0 0.0
        %v3084 = vand.u32 %v1842, 4294901760
        %3085 = vmatmul.mubr.f32.gmra.mrb[0].mxu0 %v3084
        %v3086 = vpop.f32.mrb[0].mxu0
        %v3087 = vadd.f32 %v2910, %v3086
        %v3088 = vpop.f32.mrb[0].mxu0
        %3089 = vmatprep.mubr.f32.mxu0 0.0
        %v3090 = vand.u32 %v1843, 4294901760
        %3091 = vmatmul.mubr.f32.gmra.mrb[0].mxu0 %v3090
        %v3092 = vpop.f32.mrb[0].mxu0
        %v3093 = vadd.f32 %v2916, %v3092
        %v3094 = vpop.f32.mrb[0].mxu0
        %3095 = vmatprep.mubr.f32.mxu0 0.0
        %v3096 = vand.u32 %v1844, 4294901760
        %3097 = vmatmul.mubr.f32.gmra.mrb[0].mxu0 %v3096
        %v3098 = vpop.f32.mrb[0].mxu0
        %v3099 = vadd.f32 %v2922, %v3098
        %v3100 = vpop.f32.mrb[0].mxu0
        %3101 = vmatprep.mubr.f32.mxu0 0.0
        %v3102 = vand.u32 %v1845, 4294901760
        %3103 = vmatmul.mubr.f32.gmra.mrb[0].mxu0 %v3102
        %v3104 = vpop.f32.mrb[0].mxu0
        %v3105 = vadd.f32 %v2928, %v3104
        %v3106 = vpop.f32.mrb[0].mxu0
        %3107 = vmatprep.mubr.f32.mxu0 0.0
        %v3108 = vand.u32 %v1846, 4294901760
        %3109 = vmatmul.mubr.f32.gmra.mrb[0].mxu0 %v3108
        %v3110 = vpop.f32.mrb[0].mxu0
        %v3111 = vadd.f32 %v2934, %v3110
        %v3112 = vpop.f32.mrb[0].mxu0
        %3113 = vmatprep.mubr.f32.mxu0 0.0
        %v3114 = vand.u32 %v1847, 4294901760
        %3115 = vmatmul.mubr.f32.gmra.mrb[0].mxu0 %v3114
        %v3116 = vpop.f32.mrb[0].mxu0
        %v3117 = vadd.f32 %v2940, %v3116
        %v3118 = vpop.f32.mrb[0].mxu0
        %3119 = vmatprep.mubr.f32.mxu0 0.0
        %v3120 = vand.u32 %v1848, 4294901760
        %3121 = vmatmul.mubr.f32.gmra.mrb[0].mxu0 %v3120
        %v3122 = vpop.f32.mrb[0].mxu0
        %v3123 = vadd.f32 %v2946, %v3122
        %v3124 = vpop.f32.mrb[0].mxu0
        %3125 = vmatprep.mubr.f32.mxu0 0.0
        %v3126 = vand.u32 %v1849, 4294901760
        %3127 = vmatmul.mubr.f32.gmra.mrb[0].mxu0 %v3126
        %v3128 = vpop.f32.mrb[0].mxu0
        %v3129 = vadd.f32 %v2952, %v3128
        %v3130 = vpop.f32.mrb[0].mxu0
        %3131 = vmatprep.mubr.f32.mxu0 0.0
        %v3132 = vand.u32 %v1850, 4294901760
        %3133 = vmatmul.mubr.f32.gmra.mrb[0].mxu0 %v3132
        %v3134 = vpop.f32.mrb[0].mxu0
        %v3135 = vadd.f32 %v2958, %v3134
        %v3136 = vpop.f32.mrb[0].mxu0
        %3137 = vmatprep.mubr.f32.mxu0 0.0
        %v3138 = vand.u32 %v1851, 4294901760
        %3139 = vmatmul.mubr.f32.gmra.mrb[0].mxu0 %v3138
        %v3140 = vpop.f32.mrb[0].mxu0
        %v3141 = vadd.f32 %v2964, %v3140
        %v3142 = vpop.f32.mrb[0].mxu0
        %3143 = vmatprep.mubr.f32.mxu0 0.0
        %v3144 = vand.u32 %v1852, 4294901760
        %3145 = vmatmul.mubr.f32.gmra.mrb[0].mxu0 %v3144
        %v3146 = vpop.f32.mrb[0].mxu0
        %v3147 = vadd.f32 %v2970, %v3146
        %v3148 = vpop.f32.mrb[0].mxu0
        %3149 = vmatprep.mubr.f32.mxu0 0.0
        %v3150 = vand.u32 %v1853, 4294901760
        %3151 = vmatmul.mubr.f32.gmra.mrb[0].mxu0 %v3150
        %v3152 = vpop.f32.mrb[0].mxu0
        %v3153 = vadd.f32 %v2976, %v3152
        %v3154 = vpop.f32.mrb[0].mxu0
        %3155 = vdwg.mxu0
        %v3156 = vcvt.s32.f32 %v366
        %v3157 = vcvt.s32.f32 %v367
        %v3158 = vcvt.s32.f32 %v368
        %v3159 = vcvt.s32.f32 %v369
        %v3160 = vcvt.s32.f32 %v370
        %v3161 = vcvt.s32.f32 %v371
        %v3162 = vcvt.s32.f32 %v372
        %v3163 = vcvt.s32.f32 %v373
        %v3164 = vcvt.s32.f32 %v374
        %v3165 = vcvt.s32.f32 %v375
        %v3166 = vcvt.s32.f32 %v376
        %v3167 = vcvt.s32.f32 %v377
        %v3168 = vcvt.s32.f32 %v378
        %v3169 = vcvt.s32.f32 %v379
        %v3170 = vcvt.s32.f32 %v380
        %v3171 = vcvt.s32.f32 %v381
        %vm3172 = vcmask 64512
        %v3173 = vsel %vm3172, %v3156, 0.0
        %3174 = vadd.xlane.f32.xlu0 %v3173
        %v3175 = vpop.xlane.xlu0 %3174
        %v3176 = vsel %vm3172, %v3157, 0.0
        %3177 = vadd.xlane.f32.xlu0 %v3176
        %v3178 = vpop.xlane.xlu0 %3177
        %v3179 = vsel %vm3172, %v3158, 0.0
        %3180 = vadd.xlane.f32.xlu0 %v3179
        %v3181 = vpop.xlane.xlu0 %3180
        %v3182 = vsel %vm3172, %v3159, 0.0
        %3183 = vadd.xlane.f32.xlu0 %v3182
        %v3184 = vpop.xlane.xlu0 %3183
        %v3185 = vsel %vm3172, %v3160, 0.0
        %3186 = vadd.xlane.f32.xlu0 %v3185
        %v3187 = vpop.xlane.xlu0 %3186
        %v3188 = vsel %vm3172, %v3161, 0.0
        %3189 = vadd.xlane.f32.xlu0 %v3188
        %v3190 = vpop.xlane.xlu0 %3189
        %v3191 = vsel %vm3172, %v3162, 0.0
        %3192 = vadd.xlane.f32.xlu0 %v3191
        %v3193 = vpop.xlane.xlu0 %3192
        %v3194 = vsel %vm3172, %v3163, 0.0
        %3195 = vadd.xlane.f32.xlu0 %v3194
        %v3196 = vpop.xlane.xlu0 %3195
        %v3197 = vsel %vm3172, %v3164, 0.0
        %3198 = vadd.xlane.f32.xlu0 %v3197
        %v3199 = vpop.xlane.xlu0 %3198
        %v3200 = vsel %vm3172, %v3165, 0.0
        %3201 = vadd.xlane.f32.xlu0 %v3200
        %v3202 = vpop.xlane.xlu0 %3201
        %v3203 = vsel %vm3172, %v3166, 0.0
        %3204 = vadd.xlane.f32.xlu0 %v3203
        %v3205 = vpop.xlane.xlu0 %3204
        %v3206 = vsel %vm3172, %v3167, 0.0
        %3207 = vadd.xlane.f32.xlu0 %v3206
        %v3208 = vpop.xlane.xlu0 %3207
        %v3209 = vsel %vm3172, %v3168, 0.0
        %3210 = vadd.xlane.f32.xlu0 %v3209
        %v3211 = vpop.xlane.xlu0 %3210
        %v3212 = vsel %vm3172, %v3169, 0.0
        %3213 = vadd.xlane.f32.xlu0 %v3212
        %v3214 = vpop.xlane.xlu0 %3213
        %v3215 = vsel %vm3172, %v3170, 0.0
        %3216 = vadd.xlane.f32.xlu0 %v3215
        %v3217 = vpop.xlane.xlu0 %3216
        %v3218 = vsel %vm3172, %v3171, 0.0
        %3219 = vadd.xlane.f32.xlu0 %v3218
        %v3220 = vpop.xlane.xlu0 %3219
        %v3221 = vadd.f32 %v3175, 1e-09
        %v3222 = vadd.f32 %v3178, 1e-09
        %v3223 = vadd.f32 %v3181, 1e-09
        %v3224 = vadd.f32 %v3184, 1e-09
        %v3225 = vadd.f32 %v3187, 1e-09
        %v3226 = vadd.f32 %v3190, 1e-09
        %v3227 = vadd.f32 %v3193, 1e-09
        %v3228 = vadd.f32 %v3196, 1e-09
        %v3229 = vadd.f32 %v3199, 1e-09
        %v3230 = vadd.f32 %v3202, 1e-09
        %v3231 = vadd.f32 %v3205, 1e-09
        %v3232 = vadd.f32 %v3208, 1e-09
        %v3233 = vadd.f32 %v3211, 1e-09
        %v3234 = vadd.f32 %v3214, 1e-09
        %v3235 = vadd.f32 %v3217, 1e-09
        %v3236 = vadd.f32 %v3220, 1e-09
        %v3237 = vrcp.pop %v3221
        %v3238 = vrcp.pop %v3222
        %v3239 = vrcp.pop %v3223
        %v3240 = vrcp.pop %v3224
        %v3241 = vrcp.pop %v3225
        %v3242 = vrcp.pop %v3226
        %v3243 = vrcp.pop %v3227
        %v3244 = vrcp.pop %v3228
        %v3245 = vrcp.pop %v3229
        %v3246 = vrcp.pop %v3230
        %v3247 = vrcp.pop %v3231
        %v3248 = vrcp.pop %v3232
        %v3249 = vrcp.pop %v3233
        %v3250 = vrcp.pop %v3234
        %v3251 = vrcp.pop %v3235
        %v3252 = vrcp.pop %v3236
        %v3253 = vmul.f32 %v3063, %v3237
        %v3254 = vmul.f32 %v3069, %v3238
        %v3255 = vmul.f32 %v3075, %v3239
        %v3256 = vmul.f32 %v3081, %v3240
        %v3257 = vmul.f32 %v3087, %v3241
        %v3258 = vmul.f32 %v3093, %v3242
        %v3259 = vmul.f32 %v3099, %v3243
        %v3260 = vmul.f32 %v3105, %v3244
        %v3261 = vmul.f32 %v3111, %v3245
        %v3262 = vmul.f32 %v3117, %v3246
        %v3263 = vmul.f32 %v3123, %v3247
        %v3264 = vmul.f32 %v3129, %v3248
        %v3265 = vmul.f32 %v3135, %v3249
        %v3266 = vmul.f32 %v3141, %v3250
        %v3267 = vmul.f32 %v3147, %v3251
        %v3268 = vmul.f32 %v3153, %v3252
        %v3269 = vld [vmem:[%s2] sm:$0xff]
        %v3270 = vld [vmem:[%s2 + $0x8] sm:$0xff]
        %v3271 = vld [vmem:[%s2 + $0x10] sm:$0xff]
        %v3272 = vld [vmem:[%s2 + $0x18] sm:$0xff]
        %v3273 = vld [vmem:[%s2 + $0x20] sm:$0xff]
        %v3274 = vld [vmem:[%s2 + $0x28] sm:$0xff]
        %v3275 = vld [vmem:[%s2 + $0x30] sm:$0xff]
        %v3276 = vld [vmem:[%s2 + $0x38] sm:$0xff]
        %v3277 = vld [vmem:[%s2 + $0x40] sm:$0xff]
        %v3278 = vld [vmem:[%s2 + $0x48] sm:$0xff]
        %v3279 = vld [vmem:[%s2 + $0x50] sm:$0xff]
        %v3280 = vld [vmem:[%s2 + $0x58] sm:$0xff]
        %v3281 = vld [vmem:[%s2 + $0x60] sm:$0xff]
        %v3282 = vld [vmem:[%s2 + $0x68] sm:$0xff]
        %v3283 = vld [vmem:[%s2 + $0x70] sm:$0xff]
        %v3284 = vld [vmem:[%s2 + $0x78] sm:$0xff]
        %v3285 = vld [vmem:[%s3] sm:$0x1]
        %v3287 = vlaneseq
        %v3288 = vshrl.u32 %v3287, 7
        %v3289 = vsub.s32 0, %v3288
        %v3290 = vrot.slane %v3285, %v3289
        %3292 = vmatprep.subr.mxu0 0.0
        %v3293 = vand.u32 %v3269, 4294901760
        %3294 = vmatpush1.msra.mxu0 %v3293
        %3295 = vmatprep.subr.mxu0 0.0
        %v3296 = vand.u32 %v3270, 4294901760
        %3297 = vmatpush1.msra.mxu0 %v3296
        %3298 = vmatprep.subr.mxu0 0.0
        %v3299 = vand.u32 %v3271, 4294901760
        %3300 = vmatpush1.msra.mxu0 %v3299
        %3301 = vmatprep.subr.mxu0 0.0
        %v3302 = vand.u32 %v3272, 4294901760
        %3303 = vmatpush1.msra.mxu0 %v3302
        %3304 = vmatprep.subr.mxu0 0.0
        %v3305 = vand.u32 %v3273, 4294901760
        %3306 = vmatpush1.msra.mxu0 %v3305
        %3307 = vmatprep.subr.mxu0 0.0
        %v3308 = vand.u32 %v3274, 4294901760
        %3309 = vmatpush1.msra.mxu0 %v3308
        %3310 = vmatprep.subr.mxu0 0.0
        %v3311 = vand.u32 %v3275, 4294901760
        %3312 = vmatpush1.msra.mxu0 %v3311
        %3313 = vmatprep.subr.mxu0 0.0
        %v3314 = vand.u32 %v3276, 4294901760
        %3315 = vmatpush1.msra.mxu0 %v3314
        %3316 = vmatprep.subr.mxu0 0.0
        %v3317 = vand.u32 %v3277, 4294901760
        %3318 = vmatpush1.msra.mxu0 %v3317
        %3319 = vmatprep.subr.mxu0 0.0
        %v3320 = vand.u32 %v3278, 4294901760
        %3321 = vmatpush1.msra.mxu0 %v3320
        %3322 = vmatprep.subr.mxu0 0.0
        %v3323 = vand.u32 %v3279, 4294901760
        %3324 = vmatpush1.msra.mxu0 %v3323
        %3325 = vmatprep.subr.mxu0 0.0
        %v3326 = vand.u32 %v3280, 4294901760
        %3327 = vmatpush1.msra.mxu0 %v3326
        %3328 = vmatprep.subr.mxu0 0.0
        %v3329 = vand.u32 %v3281, 4294901760
        %3330 = vmatpush1.msra.mxu0 %v3329
        %3331 = vmatprep.subr.mxu0 0.0
        %v3332 = vand.u32 %v3282, 4294901760
        %3333 = vmatpush1.msra.mxu0 %v3332
        %3334 = vmatprep.subr.mxu0 0.0
        %v3335 = vand.u32 %v3283, 4294901760
        %3336 = vmatpush1.msra.mxu0 %v3335
        %3337 = vmatprep.subr.mxu0 0.0
        %v3338 = vand.u32 %v3284, 4294901760
        %3339 = vmatpush1.msra.mxu0 %v3338
        %3340 = vmatprep.subr.mxu0 0.0
        %3341 = vmatpush1.msra.mxu0 0.0
        %3342 = vmatprep.subr.mxu0 0.0
        %3343 = vmatpush1.msra.mxu0 0.0
        %3344 = vmatprep.subr.mxu0 0.0
        %3345 = vmatpush1.msra.mxu0 0.0
        %3346 = vmatprep.subr.mxu0 0.0
        %3347 = vmatpush1.msra.mxu0 0.0
        %3348 = vmatprep.subr.mxu0 0.0
        %3349 = vmatpush1.msra.mxu0 0.0
        %3350 = vmatprep.subr.mxu0 0.0
        %3351 = vmatpush1.msra.mxu0 0.0
        %3352 = vmatprep.subr.mxu0 0.0
        %3353 = vmatpush1.msra.mxu0 0.0
        %3354 = vmatprep.subr.mxu0 0.0
        %3355 = vmatpush1.msra.mxu0 0.0
        %3356 = vmatprep.subr.mxu0 0.0
        %3357 = vmatpush1.msra.mxu0 0.0
        %3358 = vmatprep.subr.mxu0 0.0
        %3359 = vmatpush1.msra.mxu0 0.0
        %3360 = vmatprep.subr.mxu0 0.0
        %3361 = vmatpush1.msra.mxu0 0.0
        %3362 = vmatprep.subr.mxu0 0.0
        %3363 = vmatpush1.msra.mxu0 0.0
        %3364 = vmatprep.subr.mxu0 0.0
        %3365 = vmatpush1.msra.mxu0 0.0
        %3366 = vmatprep.subr.mxu0 0.0
        %3367 = vmatpush1.msra.mxu0 0.0
        %3368 = vmatprep.subr.mxu0 0.0
        %3369 = vmatpush1.msra.mxu0 0.0
        %3370 = vmatprep.subr.mxu0 0.0
        %3371 = vmatpush1.msra.mxu0 0.0
        %3372 = vmatprep.mubr.f32.mxu0 0.0
        %v3373 = vand.u32 %v3253, 4294901760
        %v3374 = vsub.f32 %v3253, %v3373
        %v3375 = vand.u32 %v3374, 4294901760
        %v3376 = vsub.f32 %v3374, %v3375
        %v3377 = vand.u32 %v3376, 4294901760
        %3378 = vmatmul.mubr.f32.gmra.mrb[0].mxu0 %v3377
        %v3379 = vpop.f32.mrb[0].mxu0
        %v3380 = vadd.f32 %v3290, %v3379
        %v3381 = vpop.f32.mrb[0].mxu0
        %3382 = vmatprep.mubr.f32.mxu0 0.0
        %v3383 = vand.u32 %v3254, 4294901760
        %v3384 = vsub.f32 %v3254, %v3383
        %v3385 = vand.u32 %v3384, 4294901760
        %v3386 = vsub.f32 %v3384, %v3385
        %v3387 = vand.u32 %v3386, 4294901760
        %3388 = vmatmul.mubr.f32.gmra.mrb[0].mxu0 %v3387
        %v3389 = vpop.f32.mrb[0].mxu0
        %v3390 = vadd.f32 %v3290, %v3389
        %v3391 = vpop.f32.mrb[0].mxu0
        %3392 = vmatprep.mubr.f32.mxu0 0.0
        %v3393 = vand.u32 %v3255, 4294901760
        %v3394 = vsub.f32 %v3255, %v3393
        %v3395 = vand.u32 %v3394, 4294901760
        %v3396 = vsub.f32 %v3394, %v3395
        %v3397 = vand.u32 %v3396, 4294901760
        %3398 = vmatmul.mubr.f32.gmra.mrb[0].mxu0 %v3397
        %v3399 = vpop.f32.mrb[0].mxu0
        %v3400 = vadd.f32 %v3290, %v3399
        %v3401 = vpop.f32.mrb[0].mxu0
        %3402 = vmatprep.mubr.f32.mxu0 0.0
        %v3403 = vand.u32 %v3256, 4294901760
        %v3404 = vsub.f32 %v3256, %v3403
        %v3405 = vand.u32 %v3404, 4294901760
        %v3406 = vsub.f32 %v3404, %v3405
        %v3407 = vand.u32 %v3406, 4294901760
        %3408 = vmatmul.mubr.f32.gmra.mrb[0].mxu0 %v3407
        %v3409 = vpop.f32.mrb[0].mxu0
        %v3410 = vadd.f32 %v3290, %v3409
        %v3411 = vpop.f32.mrb[0].mxu0
        %3412 = vmatprep.mubr.f32.mxu0 0.0
        %v3413 = vand.u32 %v3257, 4294901760
        %v3414 = vsub.f32 %v3257, %v3413
        %v3415 = vand.u32 %v3414, 4294901760
        %v3416 = vsub.f32 %v3414, %v3415
        %v3417 = vand.u32 %v3416, 4294901760
        %3418 = vmatmul.mubr.f32.gmra.mrb[0].mxu0 %v3417
        %v3419 = vpop.f32.mrb[0].mxu0
        %v3420 = vadd.f32 %v3290, %v3419
        %v3421 = vpop.f32.mrb[0].mxu0
        %3422 = vmatprep.mubr.f32.mxu0 0.0
        %v3423 = vand.u32 %v3258, 4294901760
        %v3424 = vsub.f32 %v3258, %v3423
        %v3425 = vand.u32 %v3424, 4294901760
        %v3426 = vsub.f32 %v3424, %v3425
        %v3427 = vand.u32 %v3426, 4294901760
        %3428 = vmatmul.mubr.f32.gmra.mrb[0].mxu0 %v3427
        %v3429 = vpop.f32.mrb[0].mxu0
        %v3430 = vadd.f32 %v3290, %v3429
        %v3431 = vpop.f32.mrb[0].mxu0
        %3432 = vmatprep.mubr.f32.mxu0 0.0
        %v3433 = vand.u32 %v3259, 4294901760
        %v3434 = vsub.f32 %v3259, %v3433
        %v3435 = vand.u32 %v3434, 4294901760
        %v3436 = vsub.f32 %v3434, %v3435
        %v3437 = vand.u32 %v3436, 4294901760
        %3438 = vmatmul.mubr.f32.gmra.mrb[0].mxu0 %v3437
        %v3439 = vpop.f32.mrb[0].mxu0
        %v3440 = vadd.f32 %v3290, %v3439
        %v3441 = vpop.f32.mrb[0].mxu0
        %3442 = vmatprep.mubr.f32.mxu0 0.0
        %v3443 = vand.u32 %v3260, 4294901760
        %v3444 = vsub.f32 %v3260, %v3443
        %v3445 = vand.u32 %v3444, 4294901760
        %v3446 = vsub.f32 %v3444, %v3445
        %v3447 = vand.u32 %v3446, 4294901760
        %3448 = vmatmul.mubr.f32.gmra.mrb[0].mxu0 %v3447
        %v3449 = vpop.f32.mrb[0].mxu0
        %v3450 = vadd.f32 %v3290, %v3449
        %v3451 = vpop.f32.mrb[0].mxu0
        %3452 = vmatprep.mubr.f32.mxu0 0.0
        %v3453 = vand.u32 %v3261, 4294901760
        %v3454 = vsub.f32 %v3261, %v3453
        %v3455 = vand.u32 %v3454, 4294901760
        %v3456 = vsub.f32 %v3454, %v3455
        %v3457 = vand.u32 %v3456, 4294901760
        %3458 = vmatmul.mubr.f32.gmra.mrb[0].mxu0 %v3457
        %v3459 = vpop.f32.mrb[0].mxu0
        %v3460 = vadd.f32 %v3290, %v3459
        %v3461 = vpop.f32.mrb[0].mxu0
        %3462 = vmatprep.mubr.f32.mxu0 0.0
        %v3463 = vand.u32 %v3262, 4294901760
        %v3464 = vsub.f32 %v3262, %v3463
        %v3465 = vand.u32 %v3464, 4294901760
        %v3466 = vsub.f32 %v3464, %v3465
        %v3467 = vand.u32 %v3466, 4294901760
        %3468 = vmatmul.mubr.f32.gmra.mrb[0].mxu0 %v3467
        %v3469 = vpop.f32.mrb[0].mxu0
        %v3470 = vadd.f32 %v3290, %v3469
        %v3471 = vpop.f32.mrb[0].mxu0
        %3472 = vmatprep.mubr.f32.mxu0 0.0
        %v3473 = vand.u32 %v3263, 4294901760
        %v3474 = vsub.f32 %v3263, %v3473
        %v3475 = vand.u32 %v3474, 4294901760
        %v3476 = vsub.f32 %v3474, %v3475
        %v3477 = vand.u32 %v3476, 4294901760
        %3478 = vmatmul.mubr.f32.gmra.mrb[0].mxu0 %v3477
        %v3479 = vpop.f32.mrb[0].mxu0
        %v3480 = vadd.f32 %v3290, %v3479
        %v3481 = vpop.f32.mrb[0].mxu0
        %3482 = vmatprep.mubr.f32.mxu0 0.0
        %v3483 = vand.u32 %v3264, 4294901760
        %v3484 = vsub.f32 %v3264, %v3483
        %v3485 = vand.u32 %v3484, 4294901760
        %v3486 = vsub.f32 %v3484, %v3485
        %v3487 = vand.u32 %v3486, 4294901760
        %3488 = vmatmul.mubr.f32.gmra.mrb[0].mxu0 %v3487
        %v3489 = vpop.f32.mrb[0].mxu0
        %v3490 = vadd.f32 %v3290, %v3489
        %v3491 = vpop.f32.mrb[0].mxu0
        %3492 = vmatprep.mubr.f32.mxu0 0.0
        %v3493 = vand.u32 %v3265, 4294901760
        %v3494 = vsub.f32 %v3265, %v3493
        %v3495 = vand.u32 %v3494, 4294901760
        %v3496 = vsub.f32 %v3494, %v3495
        %v3497 = vand.u32 %v3496, 4294901760
        %3498 = vmatmul.mubr.f32.gmra.mrb[0].mxu0 %v3497
        %v3499 = vpop.f32.mrb[0].mxu0
        %v3500 = vadd.f32 %v3290, %v3499
        %v3501 = vpop.f32.mrb[0].mxu0
        %3502 = vmatprep.mubr.f32.mxu0 0.0
        %v3503 = vand.u32 %v3266, 4294901760
        %v3504 = vsub.f32 %v3266, %v3503
        %v3505 = vand.u32 %v3504, 4294901760
        %v3506 = vsub.f32 %v3504, %v3505
        %v3507 = vand.u32 %v3506, 4294901760
        %3508 = vmatmul.mubr.f32.gmra.mrb[0].mxu0 %v3507
        %v3509 = vpop.f32.mrb[0].mxu0
        %v3510 = vadd.f32 %v3290, %v3509
        %v3511 = vpop.f32.mrb[0].mxu0
        %3512 = vmatprep.mubr.f32.mxu0 0.0
        %v3513 = vand.u32 %v3267, 4294901760
        %v3514 = vsub.f32 %v3267, %v3513
        %v3515 = vand.u32 %v3514, 4294901760
        %v3516 = vsub.f32 %v3514, %v3515
        %v3517 = vand.u32 %v3516, 4294901760
        %3518 = vmatmul.mubr.f32.gmra.mrb[0].mxu0 %v3517
        %v3519 = vpop.f32.mrb[0].mxu0
        %v3520 = vadd.f32 %v3290, %v3519
        %v3521 = vpop.f32.mrb[0].mxu0
        %3522 = vmatprep.mubr.f32.mxu0 0.0
        %v3523 = vand.u32 %v3268, 4294901760
        %v3524 = vsub.f32 %v3268, %v3523
        %v3525 = vand.u32 %v3524, 4294901760
        %v3526 = vsub.f32 %v3524, %v3525
        %v3527 = vand.u32 %v3526, 4294901760
        %3528 = vmatmul.mubr.f32.gmra.mrb[0].mxu0 %v3527
        %v3529 = vpop.f32.mrb[0].mxu0
        %v3530 = vadd.f32 %v3290, %v3529
        %v3531 = vpop.f32.mrb[0].mxu0
        %3532 = vdwg.mxu0
        %3533 = vmatprep.subr.mxu0 0.0
        %v3534 = vand.u32 %v3269, 4294901760
        %v3535 = vsub.f32 %v3269, %v3534
        %v3536 = vand.u32 %v3535, 4294901760
        %v3537 = vsub.f32 %v3535, %v3536
        %v3538 = vand.u32 %v3537, 4294901760
        %3539 = vmatpush1.msra.mxu0 %v3538
        %3540 = vmatprep.subr.mxu0 0.0
        %v3541 = vand.u32 %v3270, 4294901760
        %v3542 = vsub.f32 %v3270, %v3541
        %v3543 = vand.u32 %v3542, 4294901760
        %v3544 = vsub.f32 %v3542, %v3543
        %v3545 = vand.u32 %v3544, 4294901760
        %3546 = vmatpush1.msra.mxu0 %v3545
        %3547 = vmatprep.subr.mxu0 0.0
        %v3548 = vand.u32 %v3271, 4294901760
        %v3549 = vsub.f32 %v3271, %v3548
        %v3550 = vand.u32 %v3549, 4294901760
        %v3551 = vsub.f32 %v3549, %v3550
        %v3552 = vand.u32 %v3551, 4294901760
        %3553 = vmatpush1.msra.mxu0 %v3552
        %3554 = vmatprep.subr.mxu0 0.0
        %v3555 = vand.u32 %v3272, 4294901760
        %v3556 = vsub.f32 %v3272, %v3555
        %v3557 = vand.u32 %v3556, 4294901760
        %v3558 = vsub.f32 %v3556, %v3557
        %v3559 = vand.u32 %v3558, 4294901760
        %3560 = vmatpush1.msra.mxu0 %v3559
        %3561 = vmatprep.subr.mxu0 0.0
        %v3562 = vand.u32 %v3273, 4294901760
        %v3563 = vsub.f32 %v3273, %v3562
        %v3564 = vand.u32 %v3563, 4294901760
        %v3565 = vsub.f32 %v3563, %v3564
        %v3566 = vand.u32 %v3565, 4294901760
        %3567 = vmatpush1.msra.mxu0 %v3566
        %3568 = vmatprep.subr.mxu0 0.0
        %v3569 = vand.u32 %v3274, 4294901760
        %v3570 = vsub.f32 %v3274, %v3569
        %v3571 = vand.u32 %v3570, 4294901760
        %v3572 = vsub.f32 %v3570, %v3571
        %v3573 = vand.u32 %v3572, 4294901760
        %3574 = vmatpush1.msra.mxu0 %v3573
        %3575 = vmatprep.subr.mxu0 0.0
        %v3576 = vand.u32 %v3275, 4294901760
        %v3577 = vsub.f32 %v3275, %v3576
        %v3578 = vand.u32 %v3577, 4294901760
        %v3579 = vsub.f32 %v3577, %v3578
        %v3580 = vand.u32 %v3579, 4294901760
        %3581 = vmatpush1.msra.mxu0 %v3580
        %3582 = vmatprep.subr.mxu0 0.0
        %v3583 = vand.u32 %v3276, 4294901760
        %v3584 = vsub.f32 %v3276, %v3583
        %v3585 = vand.u32 %v3584, 4294901760
        %v3586 = vsub.f32 %v3584, %v3585
        %v3587 = vand.u32 %v3586, 4294901760
        %3588 = vmatpush1.msra.mxu0 %v3587
        %3589 = vmatprep.subr.mxu0 0.0
        %v3590 = vand.u32 %v3277, 4294901760
        %v3591 = vsub.f32 %v3277, %v3590
        %v3592 = vand.u32 %v3591, 4294901760
        %v3593 = vsub.f32 %v3591, %v3592
        %v3594 = vand.u32 %v3593, 4294901760
        %3595 = vmatpush1.msra.mxu0 %v3594
        %3596 = vmatprep.subr.mxu0 0.0
        %v3597 = vand.u32 %v3278, 4294901760
        %v3598 = vsub.f32 %v3278, %v3597
        %v3599 = vand.u32 %v3598, 4294901760
        %v3600 = vsub.f32 %v3598, %v3599
        %v3601 = vand.u32 %v3600, 4294901760
        %3602 = vmatpush1.msra.mxu0 %v3601
        %3603 = vmatprep.subr.mxu0 0.0
        %v3604 = vand.u32 %v3279, 4294901760
        %v3605 = vsub.f32 %v3279, %v3604
        %v3606 = vand.u32 %v3605, 4294901760
        %v3607 = vsub.f32 %v3605, %v3606
        %v3608 = vand.u32 %v3607, 4294901760
        %3609 = vmatpush1.msra.mxu0 %v3608
        %3610 = vmatprep.subr.mxu0 0.0
        %v3611 = vand.u32 %v3280, 4294901760
        %v3612 = vsub.f32 %v3280, %v3611
        %v3613 = vand.u32 %v3612, 4294901760
        %v3614 = vsub.f32 %v3612, %v3613
        %v3615 = vand.u32 %v3614, 4294901760
        %3616 = vmatpush1.msra.mxu0 %v3615
        %3617 = vmatprep.subr.mxu0 0.0
        %v3618 = vand.u32 %v3281, 4294901760
        %v3619 = vsub.f32 %v3281, %v3618
        %v3620 = vand.u32 %v3619, 4294901760
        %v3621 = vsub.f32 %v3619, %v3620
        %v3622 = vand.u32 %v3621, 4294901760
        %3623 = vmatpush1.msra.mxu0 %v3622
        %3624 = vmatprep.subr.mxu0 0.0
        %v3625 = vand.u32 %v3282, 4294901760
        %v3626 = vsub.f32 %v3282, %v3625
        %v3627 = vand.u32 %v3626, 4294901760
        %v3628 = vsub.f32 %v3626, %v3627
        %v3629 = vand.u32 %v3628, 4294901760
        %3630 = vmatpush1.msra.mxu0 %v3629
        %3631 = vmatprep.subr.mxu0 0.0
        %v3632 = vand.u32 %v3283, 4294901760
        %v3633 = vsub.f32 %v3283, %v3632
        %v3634 = vand.u32 %v3633, 4294901760
        %v3635 = vsub.f32 %v3633, %v3634
        %v3636 = vand.u32 %v3635, 4294901760
        %3637 = vmatpush1.msra.mxu0 %v3636
        %3638 = vmatprep.subr.mxu0 0.0
        %v3639 = vand.u32 %v3284, 4294901760
        %v3640 = vsub.f32 %v3284, %v3639
        %v3641 = vand.u32 %v3640, 4294901760
        %v3642 = vsub.f32 %v3640, %v3641
        %v3643 = vand.u32 %v3642, 4294901760
        %3644 = vmatpush1.msra.mxu0 %v3643
        %3645 = vmatprep.subr.mxu0 0.0
        %3646 = vmatpush1.msra.mxu0 0.0
        %3647 = vmatprep.subr.mxu0 0.0
        %3648 = vmatpush1.msra.mxu0 0.0
        %3649 = vmatprep.subr.mxu0 0.0
        %3650 = vmatpush1.msra.mxu0 0.0
        %3651 = vmatprep.subr.mxu0 0.0
        %3652 = vmatpush1.msra.mxu0 0.0
        %3653 = vmatprep.subr.mxu0 0.0
        %3654 = vmatpush1.msra.mxu0 0.0
        %3655 = vmatprep.subr.mxu0 0.0
        %3656 = vmatpush1.msra.mxu0 0.0
        %3657 = vmatprep.subr.mxu0 0.0
        %3658 = vmatpush1.msra.mxu0 0.0
        %3659 = vmatprep.subr.mxu0 0.0
        %3660 = vmatpush1.msra.mxu0 0.0
        %3661 = vmatprep.subr.mxu0 0.0
        %3662 = vmatpush1.msra.mxu0 0.0
        %3663 = vmatprep.subr.mxu0 0.0
        %3664 = vmatpush1.msra.mxu0 0.0
        %3665 = vmatprep.subr.mxu0 0.0
        %3666 = vmatpush1.msra.mxu0 0.0
        %3667 = vmatprep.subr.mxu0 0.0
        %3668 = vmatpush1.msra.mxu0 0.0
        %3669 = vmatprep.subr.mxu0 0.0
        %3670 = vmatpush1.msra.mxu0 0.0
        %3671 = vmatprep.subr.mxu0 0.0
        %3672 = vmatpush1.msra.mxu0 0.0
        %3673 = vmatprep.subr.mxu0 0.0
        %3674 = vmatpush1.msra.mxu0 0.0
        %3675 = vmatprep.subr.mxu0 0.0
        %3676 = vmatpush1.msra.mxu0 0.0
        %3677 = vmatprep.mubr.f32.mxu0 0.0
        %v3678 = vand.u32 %v3253, 4294901760
        %3679 = vmatmul.mubr.f32.gmra.mrb[0].mxu0 %v3678
        %v3680 = vpop.f32.mrb[0].mxu0
        %v3681 = vadd.f32 %v3380, %v3680
        %v3682 = vpop.f32.mrb[0].mxu0
        %3683 = vmatprep.mubr.f32.mxu0 0.0
        %v3684 = vand.u32 %v3254, 4294901760
        %3685 = vmatmul.mubr.f32.gmra.mrb[0].mxu0 %v3684
        %v3686 = vpop.f32.mrb[0].mxu0
        %v3687 = vadd.f32 %v3390, %v3686
        %v3688 = vpop.f32.mrb[0].mxu0
        %3689 = vmatprep.mubr.f32.mxu0 0.0
        %v3690 = vand.u32 %v3255, 4294901760
        %3691 = vmatmul.mubr.f32.gmra.mrb[0].mxu0 %v3690
        %v3692 = vpop.f32.mrb[0].mxu0
        %v3693 = vadd.f32 %v3400, %v3692
        %v3694 = vpop.f32.mrb[0].mxu0
        %3695 = vmatprep.mubr.f32.mxu0 0.0
        %v3696 = vand.u32 %v3256, 4294901760
        %3697 = vmatmul.mubr.f32.gmra.mrb[0].mxu0 %v3696
        %v3698 = vpop.f32.mrb[0].mxu0
        %v3699 = vadd.f32 %v3410, %v3698
        %v3700 = vpop.f32.mrb[0].mxu0
        %3701 = vmatprep.mubr.f32.mxu0 0.0
        %v3702 = vand.u32 %v3257, 4294901760
        %3703 = vmatmul.mubr.f32.gmra.mrb[0].mxu0 %v3702
        %v3704 = vpop.f32.mrb[0].mxu0
        %v3705 = vadd.f32 %v3420, %v3704
        %v3706 = vpop.f32.mrb[0].mxu0
        %3707 = vmatprep.mubr.f32.mxu0 0.0
        %v3708 = vand.u32 %v3258, 4294901760
        %3709 = vmatmul.mubr.f32.gmra.mrb[0].mxu0 %v3708
        %v3710 = vpop.f32.mrb[0].mxu0
        %v3711 = vadd.f32 %v3430, %v3710
        %v3712 = vpop.f32.mrb[0].mxu0
        %3713 = vmatprep.mubr.f32.mxu0 0.0
        %v3714 = vand.u32 %v3259, 4294901760
        %3715 = vmatmul.mubr.f32.gmra.mrb[0].mxu0 %v3714
        %v3716 = vpop.f32.mrb[0].mxu0
        %v3717 = vadd.f32 %v3440, %v3716
        %v3718 = vpop.f32.mrb[0].mxu0
        %3719 = vmatprep.mubr.f32.mxu0 0.0
        %v3720 = vand.u32 %v3260, 4294901760
        %3721 = vmatmul.mubr.f32.gmra.mrb[0].mxu0 %v3720
        %v3722 = vpop.f32.mrb[0].mxu0
        %v3723 = vadd.f32 %v3450, %v3722
        %v3724 = vpop.f32.mrb[0].mxu0
        %3725 = vmatprep.mubr.f32.mxu0 0.0
        %v3726 = vand.u32 %v3261, 4294901760
        %3727 = vmatmul.mubr.f32.gmra.mrb[0].mxu0 %v3726
        %v3728 = vpop.f32.mrb[0].mxu0
        %v3729 = vadd.f32 %v3460, %v3728
        %v3730 = vpop.f32.mrb[0].mxu0
        %3731 = vmatprep.mubr.f32.mxu0 0.0
        %v3732 = vand.u32 %v3262, 4294901760
        %3733 = vmatmul.mubr.f32.gmra.mrb[0].mxu0 %v3732
        %v3734 = vpop.f32.mrb[0].mxu0
        %v3735 = vadd.f32 %v3470, %v3734
        %v3736 = vpop.f32.mrb[0].mxu0
        %3737 = vmatprep.mubr.f32.mxu0 0.0
        %v3738 = vand.u32 %v3263, 4294901760
        %3739 = vmatmul.mubr.f32.gmra.mrb[0].mxu0 %v3738
        %v3740 = vpop.f32.mrb[0].mxu0
        %v3741 = vadd.f32 %v3480, %v3740
        %v3742 = vpop.f32.mrb[0].mxu0
        %3743 = vmatprep.mubr.f32.mxu0 0.0
        %v3744 = vand.u32 %v3264, 4294901760
        %3745 = vmatmul.mubr.f32.gmra.mrb[0].mxu0 %v3744
        %v3746 = vpop.f32.mrb[0].mxu0
        %v3747 = vadd.f32 %v3490, %v3746
        %v3748 = vpop.f32.mrb[0].mxu0
        %3749 = vmatprep.mubr.f32.mxu0 0.0
        %v3750 = vand.u32 %v3265, 4294901760
        %3751 = vmatmul.mubr.f32.gmra.mrb[0].mxu0 %v3750
        %v3752 = vpop.f32.mrb[0].mxu0
        %v3753 = vadd.f32 %v3500, %v3752
        %v3754 = vpop.f32.mrb[0].mxu0
        %3755 = vmatprep.mubr.f32.mxu0 0.0
        %v3756 = vand.u32 %v3266, 4294901760
        %3757 = vmatmul.mubr.f32.gmra.mrb[0].mxu0 %v3756
        %v3758 = vpop.f32.mrb[0].mxu0
        %v3759 = vadd.f32 %v3510, %v3758
        %v3760 = vpop.f32.mrb[0].mxu0
        %3761 = vmatprep.mubr.f32.mxu0 0.0
        %v3762 = vand.u32 %v3267, 4294901760
        %3763 = vmatmul.mubr.f32.gmra.mrb[0].mxu0 %v3762
        %v3764 = vpop.f32.mrb[0].mxu0
        %v3765 = vadd.f32 %v3520, %v3764
        %v3766 = vpop.f32.mrb[0].mxu0
        %3767 = vmatprep.mubr.f32.mxu0 0.0
        %v3768 = vand.u32 %v3268, 4294901760
        %3769 = vmatmul.mubr.f32.gmra.mrb[0].mxu0 %v3768
        %v3770 = vpop.f32.mrb[0].mxu0
        %v3771 = vadd.f32 %v3530, %v3770
        %v3772 = vpop.f32.mrb[0].mxu0
        %3773 = vdwg.mxu0
        %3774 = vmatprep.subr.mxu0 0.0
        %v3775 = vand.u32 %v3269, 4294901760
        %v3776 = vsub.f32 %v3269, %v3775
        %3777 = vmatpush1.msra.mxu0 %v3776
        %3778 = vmatprep.subr.mxu0 0.0
        %v3779 = vand.u32 %v3270, 4294901760
        %v3780 = vsub.f32 %v3270, %v3779
        %3781 = vmatpush1.msra.mxu0 %v3780
        %3782 = vmatprep.subr.mxu0 0.0
        %v3783 = vand.u32 %v3271, 4294901760
        %v3784 = vsub.f32 %v3271, %v3783
        %3785 = vmatpush1.msra.mxu0 %v3784
        %3786 = vmatprep.subr.mxu0 0.0
        %v3787 = vand.u32 %v3272, 4294901760
        %v3788 = vsub.f32 %v3272, %v3787
        %3789 = vmatpush1.msra.mxu0 %v3788
        %3790 = vmatprep.subr.mxu0 0.0
        %v3791 = vand.u32 %v3273, 4294901760
        %v3792 = vsub.f32 %v3273, %v3791
        %3793 = vmatpush1.msra.mxu0 %v3792
        %3794 = vmatprep.subr.mxu0 0.0
        %v3795 = vand.u32 %v3274, 4294901760
        %v3796 = vsub.f32 %v3274, %v3795
        %3797 = vmatpush1.msra.mxu0 %v3796
        %3798 = vmatprep.subr.mxu0 0.0
        %v3799 = vand.u32 %v3275, 4294901760
        %v3800 = vsub.f32 %v3275, %v3799
        %3801 = vmatpush1.msra.mxu0 %v3800
        %3802 = vmatprep.subr.mxu0 0.0
        %v3803 = vand.u32 %v3276, 4294901760
        %v3804 = vsub.f32 %v3276, %v3803
        %3805 = vmatpush1.msra.mxu0 %v3804
        %3806 = vmatprep.subr.mxu0 0.0
        %v3807 = vand.u32 %v3277, 4294901760
        %v3808 = vsub.f32 %v3277, %v3807
        %3809 = vmatpush1.msra.mxu0 %v3808
        %3810 = vmatprep.subr.mxu0 0.0
        %v3811 = vand.u32 %v3278, 4294901760
        %v3812 = vsub.f32 %v3278, %v3811
        %3813 = vmatpush1.msra.mxu0 %v3812
        %3814 = vmatprep.subr.mxu0 0.0
        %v3815 = vand.u32 %v3279, 4294901760
        %v3816 = vsub.f32 %v3279, %v3815
        %3817 = vmatpush1.msra.mxu0 %v3816
        %3818 = vmatprep.subr.mxu0 0.0
        %v3819 = vand.u32 %v3280, 4294901760
        %v3820 = vsub.f32 %v3280, %v3819
        %3821 = vmatpush1.msra.mxu0 %v3820
        %3822 = vmatprep.subr.mxu0 0.0
        %v3823 = vand.u32 %v3281, 4294901760
        %v3824 = vsub.f32 %v3281, %v3823
        %3825 = vmatpush1.msra.mxu0 %v3824
        %3826 = vmatprep.subr.mxu0 0.0
        %v3827 = vand.u32 %v3282, 4294901760
        %v3828 = vsub.f32 %v3282, %v3827
        %3829 = vmatpush1.msra.mxu0 %v3828
        %3830 = vmatprep.subr.mxu0 0.0
        %v3831 = vand.u32 %v3283, 4294901760
        %v3832 = vsub.f32 %v3283, %v3831
        %3833 = vmatpush1.msra.mxu0 %v3832
        %3834 = vmatprep.subr.mxu0 0.0
        %v3835 = vand.u32 %v3284, 4294901760
        %v3836 = vsub.f32 %v3284, %v3835
        %3837 = vmatpush1.msra.mxu0 %v3836
        %3838 = vmatprep.subr.mxu0 0.0
        %3839 = vmatpush1.msra.mxu0 0.0
        %3840 = vmatprep.subr.mxu0 0.0
        %3841 = vmatpush1.msra.mxu0 0.0
        %3842 = vmatprep.subr.mxu0 0.0
        %3843 = vmatpush1.msra.mxu0 0.0
        %3844 = vmatprep.subr.mxu0 0.0
        %3845 = vmatpush1.msra.mxu0 0.0
        %3846 = vmatprep.subr.mxu0 0.0
        %3847 = vmatpush1.msra.mxu0 0.0
        %3848 = vmatprep.subr.mxu0 0.0
        %3849 = vmatpush1.msra.mxu0 0.0
        %3850 = vmatprep.subr.mxu0 0.0
        %3851 = vmatpush1.msra.mxu0 0.0
        %3852 = vmatprep.subr.mxu0 0.0
        %3853 = vmatpush1.msra.mxu0 0.0
        %3854 = vmatprep.subr.mxu0 0.0
        %3855 = vmatpush1.msra.mxu0 0.0
        %3856 = vmatprep.subr.mxu0 0.0
        %3857 = vmatpush1.msra.mxu0 0.0
        %3858 = vmatprep.subr.mxu0 0.0
        %3859 = vmatpush1.msra.mxu0 0.0
        %3860 = vmatprep.subr.mxu0 0.0
        %3861 = vmatpush1.msra.mxu0 0.0
        %3862 = vmatprep.subr.mxu0 0.0
        %3863 = vmatpush1.msra.mxu0 0.0
        %3864 = vmatprep.subr.mxu0 0.0
        %3865 = vmatpush1.msra.mxu0 0.0
        %3866 = vmatprep.subr.mxu0 0.0
        %3867 = vmatpush1.msra.mxu0 0.0
        %3868 = vmatprep.subr.mxu0 0.0
        %3869 = vmatpush1.msra.mxu0 0.0
        %3870 = vmatprep.mubr.f32.mxu0 0.0
        %v3871 = vand.u32 %v3253, 4294901760
        %v3872 = vsub.f32 %v3253, %v3871
        %3873 = vmatmul.mubr.f32.gmra.mrb[0].mxu0 %v3872
        %v3874 = vpop.f32.mrb[0].mxu0
        %v3875 = vadd.f32 %v3681, %v3874
        %v3876 = vpop.f32.mrb[0].mxu0
        %3877 = vmatprep.mubr.f32.mxu0 0.0
        %v3878 = vand.u32 %v3254, 4294901760
        %v3879 = vsub.f32 %v3254, %v3878
        %3880 = vmatmul.mubr.f32.gmra.mrb[0].mxu0 %v3879
        %v3881 = vpop.f32.mrb[0].mxu0
        %v3882 = vadd.f32 %v3687, %v3881
        %v3883 = vpop.f32.mrb[0].mxu0
        %3884 = vmatprep.mubr.f32.mxu0 0.0
        %v3885 = vand.u32 %v3255, 4294901760
        %v3886 = vsub.f32 %v3255, %v3885
        %3887 = vmatmul.mubr.f32.gmra.mrb[0].mxu0 %v3886
        %v3888 = vpop.f32.mrb[0].mxu0
        %v3889 = vadd.f32 %v3693, %v3888
        %v3890 = vpop.f32.mrb[0].mxu0
        %3891 = vmatprep.mubr.f32.mxu0 0.0
        %v3892 = vand.u32 %v3256, 4294901760
        %v3893 = vsub.f32 %v3256, %v3892
        %3894 = vmatmul.mubr.f32.gmra.mrb[0].mxu0 %v3893
        %v3895 = vpop.f32.mrb[0].mxu0
        %v3896 = vadd.f32 %v3699, %v3895
        %v3897 = vpop.f32.mrb[0].mxu0
        %3898 = vmatprep.mubr.f32.mxu0 0.0
        %v3899 = vand.u32 %v3257, 4294901760
        %v3900 = vsub.f32 %v3257, %v3899
        %3901 = vmatmul.mubr.f32.gmra.mrb[0].mxu0 %v3900
        %v3902 = vpop.f32.mrb[0].mxu0
        %v3903 = vadd.f32 %v3705, %v3902
        %v3904 = vpop.f32.mrb[0].mxu0
        %3905 = vmatprep.mubr.f32.mxu0 0.0
        %v3906 = vand.u32 %v3258, 4294901760
        %v3907 = vsub.f32 %v3258, %v3906
        %3908 = vmatmul.mubr.f32.gmra.mrb[0].mxu0 %v3907
        %v3909 = vpop.f32.mrb[0].mxu0
        %v3910 = vadd.f32 %v3711, %v3909
        %v3911 = vpop.f32.mrb[0].mxu0
        %3912 = vmatprep.mubr.f32.mxu0 0.0
        %v3913 = vand.u32 %v3259, 4294901760
        %v3914 = vsub.f32 %v3259, %v3913
        %3915 = vmatmul.mubr.f32.gmra.mrb[0].mxu0 %v3914
        %v3916 = vpop.f32.mrb[0].mxu0
        %v3917 = vadd.f32 %v3717, %v3916
        %v3918 = vpop.f32.mrb[0].mxu0
        %3919 = vmatprep.mubr.f32.mxu0 0.0
        %v3920 = vand.u32 %v3260, 4294901760
        %v3921 = vsub.f32 %v3260, %v3920
        %3922 = vmatmul.mubr.f32.gmra.mrb[0].mxu0 %v3921
        %v3923 = vpop.f32.mrb[0].mxu0
        %v3924 = vadd.f32 %v3723, %v3923
        %v3925 = vpop.f32.mrb[0].mxu0
        %3926 = vmatprep.mubr.f32.mxu0 0.0
        %v3927 = vand.u32 %v3261, 4294901760
        %v3928 = vsub.f32 %v3261, %v3927
        %3929 = vmatmul.mubr.f32.gmra.mrb[0].mxu0 %v3928
        %v3930 = vpop.f32.mrb[0].mxu0
        %v3931 = vadd.f32 %v3729, %v3930
        %v3932 = vpop.f32.mrb[0].mxu0
        %3933 = vmatprep.mubr.f32.mxu0 0.0
        %v3934 = vand.u32 %v3262, 4294901760
        %v3935 = vsub.f32 %v3262, %v3934
        %3936 = vmatmul.mubr.f32.gmra.mrb[0].mxu0 %v3935
        %v3937 = vpop.f32.mrb[0].mxu0
        %v3938 = vadd.f32 %v3735, %v3937
        %v3939 = vpop.f32.mrb[0].mxu0
        %3940 = vmatprep.mubr.f32.mxu0 0.0
        %v3941 = vand.u32 %v3263, 4294901760
        %v3942 = vsub.f32 %v3263, %v3941
        %3943 = vmatmul.mubr.f32.gmra.mrb[0].mxu0 %v3942
        %v3944 = vpop.f32.mrb[0].mxu0
        %v3945 = vadd.f32 %v3741, %v3944
        %v3946 = vpop.f32.mrb[0].mxu0
        %3947 = vmatprep.mubr.f32.mxu0 0.0
        %v3948 = vand.u32 %v3264, 4294901760
        %v3949 = vsub.f32 %v3264, %v3948
        %3950 = vmatmul.mubr.f32.gmra.mrb[0].mxu0 %v3949
        %v3951 = vpop.f32.mrb[0].mxu0
        %v3952 = vadd.f32 %v3747, %v3951
        %v3953 = vpop.f32.mrb[0].mxu0
        %3954 = vmatprep.mubr.f32.mxu0 0.0
        %v3955 = vand.u32 %v3265, 4294901760
        %v3956 = vsub.f32 %v3265, %v3955
        %3957 = vmatmul.mubr.f32.gmra.mrb[0].mxu0 %v3956
        %v3958 = vpop.f32.mrb[0].mxu0
        %v3959 = vadd.f32 %v3753, %v3958
        %v3960 = vpop.f32.mrb[0].mxu0
        %3961 = vmatprep.mubr.f32.mxu0 0.0
        %v3962 = vand.u32 %v3266, 4294901760
        %v3963 = vsub.f32 %v3266, %v3962
        %3964 = vmatmul.mubr.f32.gmra.mrb[0].mxu0 %v3963
        %v3965 = vpop.f32.mrb[0].mxu0
        %v3966 = vadd.f32 %v3759, %v3965
        %v3967 = vpop.f32.mrb[0].mxu0
        %3968 = vmatprep.mubr.f32.mxu0 0.0
        %v3969 = vand.u32 %v3267, 4294901760
        %v3970 = vsub.f32 %v3267, %v3969
        %3971 = vmatmul.mubr.f32.gmra.mrb[0].mxu0 %v3970
        %v3972 = vpop.f32.mrb[0].mxu0
        %v3973 = vadd.f32 %v3765, %v3972
        %v3974 = vpop.f32.mrb[0].mxu0
        %3975 = vmatprep.mubr.f32.mxu0 0.0
        %v3976 = vand.u32 %v3268, 4294901760
        %v3977 = vsub.f32 %v3268, %v3976
        %3978 = vmatmul.mubr.f32.gmra.mrb[0].mxu0 %v3977
        %v3979 = vpop.f32.mrb[0].mxu0
        %v3980 = vadd.f32 %v3771, %v3979
        %v3981 = vpop.f32.mrb[0].mxu0
        %3982 = vdwg.mxu0
        %3983 = vmatprep.subr.mxu0 0.0
        %v3984 = vand.u32 %v3269, 4294901760
        %3985 = vmatpush1.msra.mxu0 %v3984
        %3986 = vmatprep.subr.mxu0 0.0
        %v3987 = vand.u32 %v3270, 4294901760
        %3988 = vmatpush1.msra.mxu0 %v3987
        %3989 = vmatprep.subr.mxu0 0.0
        %v3990 = vand.u32 %v3271, 4294901760
        %3991 = vmatpush1.msra.mxu0 %v3990
        %3992 = vmatprep.subr.mxu0 0.0
        %v3993 = vand.u32 %v3272, 4294901760
        %3994 = vmatpush1.msra.mxu0 %v3993
        %3995 = vmatprep.subr.mxu0 0.0
        %v3996 = vand.u32 %v3273, 4294901760
        %3997 = vmatpush1.msra.mxu0 %v3996
        %3998 = vmatprep.subr.mxu0 0.0
        %v3999 = vand.u32 %v3274, 4294901760
        %4000 = vmatpush1.msra.mxu0 %v3999
        %4001 = vmatprep.subr.mxu0 0.0
        %v4002 = vand.u32 %v3275, 4294901760
        %4003 = vmatpush1.msra.mxu0 %v4002
        %4004 = vmatprep.subr.mxu0 0.0
        %v4005 = vand.u32 %v3276, 4294901760
        %4006 = vmatpush1.msra.mxu0 %v4005
        %4007 = vmatprep.subr.mxu0 0.0
        %v4008 = vand.u32 %v3277, 4294901760
        %4009 = vmatpush1.msra.mxu0 %v4008
        %4010 = vmatprep.subr.mxu0 0.0
        %v4011 = vand.u32 %v3278, 4294901760
        %4012 = vmatpush1.msra.mxu0 %v4011
        %4013 = vmatprep.subr.mxu0 0.0
        %v4014 = vand.u32 %v3279, 4294901760
        %4015 = vmatpush1.msra.mxu0 %v4014
        %4016 = vmatprep.subr.mxu0 0.0
        %v4017 = vand.u32 %v3280, 4294901760
        %4018 = vmatpush1.msra.mxu0 %v4017
        %4019 = vmatprep.subr.mxu0 0.0
        %v4020 = vand.u32 %v3281, 4294901760
        %4021 = vmatpush1.msra.mxu0 %v4020
        %4022 = vmatprep.subr.mxu0 0.0
        %v4023 = vand.u32 %v3282, 4294901760
        %4024 = vmatpush1.msra.mxu0 %v4023
        %4025 = vmatprep.subr.mxu0 0.0
        %v4026 = vand.u32 %v3283, 4294901760
        %4027 = vmatpush1.msra.mxu0 %v4026
        %4028 = vmatprep.subr.mxu0 0.0
        %v4029 = vand.u32 %v3284, 4294901760
        %4030 = vmatpush1.msra.mxu0 %v4029
        %4031 = vmatprep.subr.mxu0 0.0
        %4032 = vmatpush1.msra.mxu0 0.0
        %4033 = vmatprep.subr.mxu0 0.0
        %4034 = vmatpush1.msra.mxu0 0.0
        %4035 = vmatprep.subr.mxu0 0.0
        %4036 = vmatpush1.msra.mxu0 0.0
        %4037 = vmatprep.subr.mxu0 0.0
        %4038 = vmatpush1.msra.mxu0 0.0
        %4039 = vmatprep.subr.mxu0 0.0
        %4040 = vmatpush1.msra.mxu0 0.0
        %4041 = vmatprep.subr.mxu0 0.0
        %4042 = vmatpush1.msra.mxu0 0.0
        %4043 = vmatprep.subr.mxu0 0.0
        %4044 = vmatpush1.msra.mxu0 0.0
        %4045 = vmatprep.subr.mxu0 0.0
        %4046 = vmatpush1.msra.mxu0 0.0
        %4047 = vmatprep.subr.mxu0 0.0
        %4048 = vmatpush1.msra.mxu0 0.0
        %4049 = vmatprep.subr.mxu0 0.0
        %4050 = vmatpush1.msra.mxu0 0.0
        %4051 = vmatprep.subr.mxu0 0.0
        %4052 = vmatpush1.msra.mxu0 0.0
        %4053 = vmatprep.subr.mxu0 0.0
        %4054 = vmatpush1.msra.mxu0 0.0
        %4055 = vmatprep.subr.mxu0 0.0
        %4056 = vmatpush1.msra.mxu0 0.0
        %4057 = vmatprep.subr.mxu0 0.0
        %4058 = vmatpush1.msra.mxu0 0.0
        %4059 = vmatprep.subr.mxu0 0.0
        %4060 = vmatpush1.msra.mxu0 0.0
        %4061 = vmatprep.subr.mxu0 0.0
        %4062 = vmatpush1.msra.mxu0 0.0
        %4063 = vmatprep.mubr.f32.mxu0 0.0
        %v4064 = vand.u32 %v3253, 4294901760
        %v4065 = vsub.f32 %v3253, %v4064
        %v4066 = vand.u32 %v4065, 4294901760
        %4067 = vmatmul.mubr.f32.gmra.mrb[0].mxu0 %v4066
        %v4068 = vpop.f32.mrb[0].mxu0
        %v4069 = vadd.f32 %v3875, %v4068
        %v4070 = vpop.f32.mrb[0].mxu0
        %4071 = vmatprep.mubr.f32.mxu0 0.0
        %v4072 = vand.u32 %v3254, 4294901760
        %v4073 = vsub.f32 %v3254, %v4072
        %v4074 = vand.u32 %v4073, 4294901760
        %4075 = vmatmul.mubr.f32.gmra.mrb[0].mxu0 %v4074
        %v4076 = vpop.f32.mrb[0].mxu0
        %v4077 = vadd.f32 %v3882, %v4076
        %v4078 = vpop.f32.mrb[0].mxu0
        %4079 = vmatprep.mubr.f32.mxu0 0.0
        %v4080 = vand.u32 %v3255, 4294901760
        %v4081 = vsub.f32 %v3255, %v4080
        %v4082 = vand.u32 %v4081, 4294901760
        %4083 = vmatmul.mubr.f32.gmra.mrb[0].mxu0 %v4082
        %v4084 = vpop.f32.mrb[0].mxu0
        %v4085 = vadd.f32 %v3889, %v4084
        %v4086 = vpop.f32.mrb[0].mxu0
        %4087 = vmatprep.mubr.f32.mxu0 0.0
        %v4088 = vand.u32 %v3256, 4294901760
        %v4089 = vsub.f32 %v3256, %v4088
        %v4090 = vand.u32 %v4089, 4294901760
        %4091 = vmatmul.mubr.f32.gmra.mrb[0].mxu0 %v4090
        %v4092 = vpop.f32.mrb[0].mxu0
        %v4093 = vadd.f32 %v3896, %v4092
        %v4094 = vpop.f32.mrb[0].mxu0
        %4095 = vmatprep.mubr.f32.mxu0 0.0
        %v4096 = vand.u32 %v3257, 4294901760
        %v4097 = vsub.f32 %v3257, %v4096
        %v4098 = vand.u32 %v4097, 4294901760
        %4099 = vmatmul.mubr.f32.gmra.mrb[0].mxu0 %v4098
        %v4100 = vpop.f32.mrb[0].mxu0
        %v4101 = vadd.f32 %v3903, %v4100
        %v4102 = vpop.f32.mrb[0].mxu0
        %4103 = vmatprep.mubr.f32.mxu0 0.0
        %v4104 = vand.u32 %v3258, 4294901760
        %v4105 = vsub.f32 %v3258, %v4104
        %v4106 = vand.u32 %v4105, 4294901760
        %4107 = vmatmul.mubr.f32.gmra.mrb[0].mxu0 %v4106
        %v4108 = vpop.f32.mrb[0].mxu0
        %v4109 = vadd.f32 %v3910, %v4108
        %v4110 = vpop.f32.mrb[0].mxu0
        %4111 = vmatprep.mubr.f32.mxu0 0.0
        %v4112 = vand.u32 %v3259, 4294901760
        %v4113 = vsub.f32 %v3259, %v4112
        %v4114 = vand.u32 %v4113, 4294901760
        %4115 = vmatmul.mubr.f32.gmra.mrb[0].mxu0 %v4114
        %v4116 = vpop.f32.mrb[0].mxu0
        %v4117 = vadd.f32 %v3917, %v4116
        %v4118 = vpop.f32.mrb[0].mxu0
        %4119 = vmatprep.mubr.f32.mxu0 0.0
        %v4120 = vand.u32 %v3260, 4294901760
        %v4121 = vsub.f32 %v3260, %v4120
        %v4122 = vand.u32 %v4121, 4294901760
        %4123 = vmatmul.mubr.f32.gmra.mrb[0].mxu0 %v4122
        %v4124 = vpop.f32.mrb[0].mxu0
        %v4125 = vadd.f32 %v3924, %v4124
        %v4126 = vpop.f32.mrb[0].mxu0
        %4127 = vmatprep.mubr.f32.mxu0 0.0
        %v4128 = vand.u32 %v3261, 4294901760
        %v4129 = vsub.f32 %v3261, %v4128
        %v4130 = vand.u32 %v4129, 4294901760
        %4131 = vmatmul.mubr.f32.gmra.mrb[0].mxu0 %v4130
        %v4132 = vpop.f32.mrb[0].mxu0
        %v4133 = vadd.f32 %v3931, %v4132
        %v4134 = vpop.f32.mrb[0].mxu0
        %4135 = vmatprep.mubr.f32.mxu0 0.0
        %v4136 = vand.u32 %v3262, 4294901760
        %v4137 = vsub.f32 %v3262, %v4136
        %v4138 = vand.u32 %v4137, 4294901760
        %4139 = vmatmul.mubr.f32.gmra.mrb[0].mxu0 %v4138
        %v4140 = vpop.f32.mrb[0].mxu0
        %v4141 = vadd.f32 %v3938, %v4140
        %v4142 = vpop.f32.mrb[0].mxu0
        %4143 = vmatprep.mubr.f32.mxu0 0.0
        %v4144 = vand.u32 %v3263, 4294901760
        %v4145 = vsub.f32 %v3263, %v4144
        %v4146 = vand.u32 %v4145, 4294901760
        %4147 = vmatmul.mubr.f32.gmra.mrb[0].mxu0 %v4146
        %v4148 = vpop.f32.mrb[0].mxu0
        %v4149 = vadd.f32 %v3945, %v4148
        %v4150 = vpop.f32.mrb[0].mxu0
        %4151 = vmatprep.mubr.f32.mxu0 0.0
        %v4152 = vand.u32 %v3264, 4294901760
        %v4153 = vsub.f32 %v3264, %v4152
        %v4154 = vand.u32 %v4153, 4294901760
        %4155 = vmatmul.mubr.f32.gmra.mrb[0].mxu0 %v4154
        %v4156 = vpop.f32.mrb[0].mxu0
        %v4157 = vadd.f32 %v3952, %v4156
        %v4158 = vpop.f32.mrb[0].mxu0
        %4159 = vmatprep.mubr.f32.mxu0 0.0
        %v4160 = vand.u32 %v3265, 4294901760
        %v4161 = vsub.f32 %v3265, %v4160
        %v4162 = vand.u32 %v4161, 4294901760
        %4163 = vmatmul.mubr.f32.gmra.mrb[0].mxu0 %v4162
        %v4164 = vpop.f32.mrb[0].mxu0
        %v4165 = vadd.f32 %v3959, %v4164
        %v4166 = vpop.f32.mrb[0].mxu0
        %4167 = vmatprep.mubr.f32.mxu0 0.0
        %v4168 = vand.u32 %v3266, 4294901760
        %v4169 = vsub.f32 %v3266, %v4168
        %v4170 = vand.u32 %v4169, 4294901760
        %4171 = vmatmul.mubr.f32.gmra.mrb[0].mxu0 %v4170
        %v4172 = vpop.f32.mrb[0].mxu0
        %v4173 = vadd.f32 %v3966, %v4172
        %v4174 = vpop.f32.mrb[0].mxu0
        %4175 = vmatprep.mubr.f32.mxu0 0.0
        %v4176 = vand.u32 %v3267, 4294901760
        %v4177 = vsub.f32 %v3267, %v4176
        %v4178 = vand.u32 %v4177, 4294901760
        %4179 = vmatmul.mubr.f32.gmra.mrb[0].mxu0 %v4178
        %v4180 = vpop.f32.mrb[0].mxu0
        %v4181 = vadd.f32 %v3973, %v4180
        %v4182 = vpop.f32.mrb[0].mxu0
        %4183 = vmatprep.mubr.f32.mxu0 0.0
        %v4184 = vand.u32 %v3268, 4294901760
        %v4185 = vsub.f32 %v3268, %v4184
        %v4186 = vand.u32 %v4185, 4294901760
        %4187 = vmatmul.mubr.f32.gmra.mrb[0].mxu0 %v4186
        %v4188 = vpop.f32.mrb[0].mxu0
        %v4189 = vadd.f32 %v3980, %v4188
        %v4190 = vpop.f32.mrb[0].mxu0
        %4191 = vdwg.mxu0
        %4192 = vmatprep.subr.mxu0 0.0
        %v4193 = vand.u32 %v3269, 4294901760
        %v4194 = vsub.f32 %v3269, %v4193
        %v4195 = vand.u32 %v4194, 4294901760
        %4196 = vmatpush1.msra.mxu0 %v4195
        %4197 = vmatprep.subr.mxu0 0.0
        %v4198 = vand.u32 %v3270, 4294901760
        %v4199 = vsub.f32 %v3270, %v4198
        %v4200 = vand.u32 %v4199, 4294901760
        %4201 = vmatpush1.msra.mxu0 %v4200
        %4202 = vmatprep.subr.mxu0 0.0
        %v4203 = vand.u32 %v3271, 4294901760
        %v4204 = vsub.f32 %v3271, %v4203
        %v4205 = vand.u32 %v4204, 4294901760
        %4206 = vmatpush1.msra.mxu0 %v4205
        %4207 = vmatprep.subr.mxu0 0.0
        %v4208 = vand.u32 %v3272, 4294901760
        %v4209 = vsub.f32 %v3272, %v4208
        %v4210 = vand.u32 %v4209, 4294901760
        %4211 = vmatpush1.msra.mxu0 %v4210
        %4212 = vmatprep.subr.mxu0 0.0
        %v4213 = vand.u32 %v3273, 4294901760
        %v4214 = vsub.f32 %v3273, %v4213
        %v4215 = vand.u32 %v4214, 4294901760
        %4216 = vmatpush1.msra.mxu0 %v4215
        %4217 = vmatprep.subr.mxu0 0.0
        %v4218 = vand.u32 %v3274, 4294901760
        %v4219 = vsub.f32 %v3274, %v4218
        %v4220 = vand.u32 %v4219, 4294901760
        %4221 = vmatpush1.msra.mxu0 %v4220
        %4222 = vmatprep.subr.mxu0 0.0
        %v4223 = vand.u32 %v3275, 4294901760
        %v4224 = vsub.f32 %v3275, %v4223
        %v4225 = vand.u32 %v4224, 4294901760
        %4226 = vmatpush1.msra.mxu0 %v4225
        %4227 = vmatprep.subr.mxu0 0.0
        %v4228 = vand.u32 %v3276, 4294901760
        %v4229 = vsub.f32 %v3276, %v4228
        %v4230 = vand.u32 %v4229, 4294901760
        %4231 = vmatpush1.msra.mxu0 %v4230
        %4232 = vmatprep.subr.mxu0 0.0
        %v4233 = vand.u32 %v3277, 4294901760
        %v4234 = vsub.f32 %v3277, %v4233
        %v4235 = vand.u32 %v4234, 4294901760
        %4236 = vmatpush1.msra.mxu0 %v4235
        %4237 = vmatprep.subr.mxu0 0.0
        %v4238 = vand.u32 %v3278, 4294901760
        %v4239 = vsub.f32 %v3278, %v4238
        %v4240 = vand.u32 %v4239, 4294901760
        %4241 = vmatpush1.msra.mxu0 %v4240
        %4242 = vmatprep.subr.mxu0 0.0
        %v4243 = vand.u32 %v3279, 4294901760
        %v4244 = vsub.f32 %v3279, %v4243
        %v4245 = vand.u32 %v4244, 4294901760
        %4246 = vmatpush1.msra.mxu0 %v4245
        %4247 = vmatprep.subr.mxu0 0.0
        %v4248 = vand.u32 %v3280, 4294901760
        %v4249 = vsub.f32 %v3280, %v4248
        %v4250 = vand.u32 %v4249, 4294901760
        %4251 = vmatpush1.msra.mxu0 %v4250
        %4252 = vmatprep.subr.mxu0 0.0
        %v4253 = vand.u32 %v3281, 4294901760
        %v4254 = vsub.f32 %v3281, %v4253
        %v4255 = vand.u32 %v4254, 4294901760
        %4256 = vmatpush1.msra.mxu0 %v4255
        %4257 = vmatprep.subr.mxu0 0.0
        %v4258 = vand.u32 %v3282, 4294901760
        %v4259 = vsub.f32 %v3282, %v4258
        %v4260 = vand.u32 %v4259, 4294901760
        %4261 = vmatpush1.msra.mxu0 %v4260
        %4262 = vmatprep.subr.mxu0 0.0
        %v4263 = vand.u32 %v3283, 4294901760
        %v4264 = vsub.f32 %v3283, %v4263
        %v4265 = vand.u32 %v4264, 4294901760
        %4266 = vmatpush1.msra.mxu0 %v4265
        %4267 = vmatprep.subr.mxu0 0.0
        %v4268 = vand.u32 %v3284, 4294901760
        %v4269 = vsub.f32 %v3284, %v4268
        %v4270 = vand.u32 %v4269, 4294901760
        %4271 = vmatpush1.msra.mxu0 %v4270
        %4272 = vmatprep.subr.mxu0 0.0
        %4273 = vmatpush1.msra.mxu0 0.0
        %4274 = vmatprep.subr.mxu0 0.0
        %4275 = vmatpush1.msra.mxu0 0.0
        %4276 = vmatprep.subr.mxu0 0.0
        %4277 = vmatpush1.msra.mxu0 0.0
        %4278 = vmatprep.subr.mxu0 0.0
        %4279 = vmatpush1.msra.mxu0 0.0
        %4280 = vmatprep.subr.mxu0 0.0
        %4281 = vmatpush1.msra.mxu0 0.0
        %4282 = vmatprep.subr.mxu0 0.0
        %4283 = vmatpush1.msra.mxu0 0.0
        %4284 = vmatprep.subr.mxu0 0.0
        %4285 = vmatpush1.msra.mxu0 0.0
        %4286 = vmatprep.subr.mxu0 0.0
        %4287 = vmatpush1.msra.mxu0 0.0
        %4288 = vmatprep.subr.mxu0 0.0
        %4289 = vmatpush1.msra.mxu0 0.0
        %4290 = vmatprep.subr.mxu0 0.0
        %4291 = vmatpush1.msra.mxu0 0.0
        %4292 = vmatprep.subr.mxu0 0.0
        %4293 = vmatpush1.msra.mxu0 0.0
        %4294 = vmatprep.subr.mxu0 0.0
        %4295 = vmatpush1.msra.mxu0 0.0
        %4296 = vmatprep.subr.mxu0 0.0
        %4297 = vmatpush1.msra.mxu0 0.0
        %4298 = vmatprep.subr.mxu0 0.0
        %4299 = vmatpush1.msra.mxu0 0.0
        %4300 = vmatprep.subr.mxu0 0.0
        %4301 = vmatpush1.msra.mxu0 0.0
        %4302 = vmatprep.subr.mxu0 0.0
        %4303 = vmatpush1.msra.mxu0 0.0
        %4304 = vmatprep.mubr.f32.mxu0 0.0
        %v4305 = vand.u32 %v3253, 4294901760
        %4306 = vmatmul.mubr.f32.gmra.mrb[0].mxu0 %v4305
        %v4307 = vpop.f32.mrb[0].mxu0
        %v4308 = vadd.f32 %v4069, %v4307
        %v4309 = vpop.f32.mrb[0].mxu0
        %4310 = vmatprep.mubr.f32.mxu0 0.0
        %v4311 = vand.u32 %v3254, 4294901760
        %4312 = vmatmul.mubr.f32.gmra.mrb[0].mxu0 %v4311
        %v4313 = vpop.f32.mrb[0].mxu0
        %v4314 = vadd.f32 %v4077, %v4313
        %v4315 = vpop.f32.mrb[0].mxu0
        %4316 = vmatprep.mubr.f32.mxu0 0.0
        %v4317 = vand.u32 %v3255, 4294901760
        %4318 = vmatmul.mubr.f32.gmra.mrb[0].mxu0 %v4317
        %v4319 = vpop.f32.mrb[0].mxu0
        %v4320 = vadd.f32 %v4085, %v4319
        %v4321 = vpop.f32.mrb[0].mxu0
        %4322 = vmatprep.mubr.f32.mxu0 0.0
        %v4323 = vand.u32 %v3256, 4294901760
        %4324 = vmatmul.mubr.f32.gmra.mrb[0].mxu0 %v4323
        %v4325 = vpop.f32.mrb[0].mxu0
        %v4326 = vadd.f32 %v4093, %v4325
        %v4327 = vpop.f32.mrb[0].mxu0
        %4328 = vmatprep.mubr.f32.mxu0 0.0
        %v4329 = vand.u32 %v3257, 4294901760
        %4330 = vmatmul.mubr.f32.gmra.mrb[0].mxu0 %v4329
        %v4331 = vpop.f32.mrb[0].mxu0
        %v4332 = vadd.f32 %v4101, %v4331
        %v4333 = vpop.f32.mrb[0].mxu0
        %4334 = vmatprep.mubr.f32.mxu0 0.0
        %v4335 = vand.u32 %v3258, 4294901760
        %4336 = vmatmul.mubr.f32.gmra.mrb[0].mxu0 %v4335
        %v4337 = vpop.f32.mrb[0].mxu0
        %v4338 = vadd.f32 %v4109, %v4337
        %v4339 = vpop.f32.mrb[0].mxu0
        %4340 = vmatprep.mubr.f32.mxu0 0.0
        %v4341 = vand.u32 %v3259, 4294901760
        %4342 = vmatmul.mubr.f32.gmra.mrb[0].mxu0 %v4341
        %v4343 = vpop.f32.mrb[0].mxu0
        %v4344 = vadd.f32 %v4117, %v4343
        %v4345 = vpop.f32.mrb[0].mxu0
        %4346 = vmatprep.mubr.f32.mxu0 0.0
        %v4347 = vand.u32 %v3260, 4294901760
        %4348 = vmatmul.mubr.f32.gmra.mrb[0].mxu0 %v4347
        %v4349 = vpop.f32.mrb[0].mxu0
        %v4350 = vadd.f32 %v4125, %v4349
        %v4351 = vpop.f32.mrb[0].mxu0
        %4352 = vmatprep.mubr.f32.mxu0 0.0
        %v4353 = vand.u32 %v3261, 4294901760
        %4354 = vmatmul.mubr.f32.gmra.mrb[0].mxu0 %v4353
        %v4355 = vpop.f32.mrb[0].mxu0
        %v4356 = vadd.f32 %v4133, %v4355
        %v4357 = vpop.f32.mrb[0].mxu0
        %4358 = vmatprep.mubr.f32.mxu0 0.0
        %v4359 = vand.u32 %v3262, 4294901760
        %4360 = vmatmul.mubr.f32.gmra.mrb[0].mxu0 %v4359
        %v4361 = vpop.f32.mrb[0].mxu0
        %v4362 = vadd.f32 %v4141, %v4361
        %v4363 = vpop.f32.mrb[0].mxu0
        %4364 = vmatprep.mubr.f32.mxu0 0.0
        %v4365 = vand.u32 %v3263, 4294901760
        %4366 = vmatmul.mubr.f32.gmra.mrb[0].mxu0 %v4365
        %v4367 = vpop.f32.mrb[0].mxu0
        %v4368 = vadd.f32 %v4149, %v4367
        %v4369 = vpop.f32.mrb[0].mxu0
        %4370 = vmatprep.mubr.f32.mxu0 0.0
        %v4371 = vand.u32 %v3264, 4294901760
        %4372 = vmatmul.mubr.f32.gmra.mrb[0].mxu0 %v4371
        %v4373 = vpop.f32.mrb[0].mxu0
        %v4374 = vadd.f32 %v4157, %v4373
        %v4375 = vpop.f32.mrb[0].mxu0
        %4376 = vmatprep.mubr.f32.mxu0 0.0
        %v4377 = vand.u32 %v3265, 4294901760
        %4378 = vmatmul.mubr.f32.gmra.mrb[0].mxu0 %v4377
        %v4379 = vpop.f32.mrb[0].mxu0
        %v4380 = vadd.f32 %v4165, %v4379
        %v4381 = vpop.f32.mrb[0].mxu0
        %4382 = vmatprep.mubr.f32.mxu0 0.0
        %v4383 = vand.u32 %v3266, 4294901760
        %4384 = vmatmul.mubr.f32.gmra.mrb[0].mxu0 %v4383
        %v4385 = vpop.f32.mrb[0].mxu0
        %v4386 = vadd.f32 %v4173, %v4385
        %v4387 = vpop.f32.mrb[0].mxu0
        %4388 = vmatprep.mubr.f32.mxu0 0.0
        %v4389 = vand.u32 %v3267, 4294901760
        %4390 = vmatmul.mubr.f32.gmra.mrb[0].mxu0 %v4389
        %v4391 = vpop.f32.mrb[0].mxu0
        %v4392 = vadd.f32 %v4181, %v4391
        %v4393 = vpop.f32.mrb[0].mxu0
        %4394 = vmatprep.mubr.f32.mxu0 0.0
        %v4395 = vand.u32 %v3268, 4294901760
        %4396 = vmatmul.mubr.f32.gmra.mrb[0].mxu0 %v4395
        %v4397 = vpop.f32.mrb[0].mxu0
        %v4398 = vadd.f32 %v4189, %v4397
        %v4399 = vpop.f32.mrb[0].mxu0
        %4400 = vdwg.mxu0
        %4401 = vmatprep.subr.mxu0 0.0
        %v4402 = vand.u32 %v3269, 4294901760
        %4403 = vmatpush1.msra.mxu0 %v4402
        %4404 = vmatprep.subr.mxu0 0.0
        %v4405 = vand.u32 %v3270, 4294901760
        %4406 = vmatpush1.msra.mxu0 %v4405
        %4407 = vmatprep.subr.mxu0 0.0
        %v4408 = vand.u32 %v3271, 4294901760
        %4409 = vmatpush1.msra.mxu0 %v4408
        %4410 = vmatprep.subr.mxu0 0.0
        %v4411 = vand.u32 %v3272, 4294901760
        %4412 = vmatpush1.msra.mxu0 %v4411
        %4413 = vmatprep.subr.mxu0 0.0
        %v4414 = vand.u32 %v3273, 4294901760
        %4415 = vmatpush1.msra.mxu0 %v4414
        %4416 = vmatprep.subr.mxu0 0.0
        %v4417 = vand.u32 %v3274, 4294901760
        %4418 = vmatpush1.msra.mxu0 %v4417
        %4419 = vmatprep.subr.mxu0 0.0
        %v4420 = vand.u32 %v3275, 4294901760
        %4421 = vmatpush1.msra.mxu0 %v4420
        %4422 = vmatprep.subr.mxu0 0.0
        %v4423 = vand.u32 %v3276, 4294901760
        %4424 = vmatpush1.msra.mxu0 %v4423
        %4425 = vmatprep.subr.mxu0 0.0
        %v4426 = vand.u32 %v3277, 4294901760
        %4427 = vmatpush1.msra.mxu0 %v4426
        %4428 = vmatprep.subr.mxu0 0.0
        %v4429 = vand.u32 %v3278, 4294901760
        %4430 = vmatpush1.msra.mxu0 %v4429
        %4431 = vmatprep.subr.mxu0 0.0
        %v4432 = vand.u32 %v3279, 4294901760
        %4433 = vmatpush1.msra.mxu0 %v4432
        %4434 = vmatprep.subr.mxu0 0.0
        %v4435 = vand.u32 %v3280, 4294901760
        %4436 = vmatpush1.msra.mxu0 %v4435
        %4437 = vmatprep.subr.mxu0 0.0
        %v4438 = vand.u32 %v3281, 4294901760
        %4439 = vmatpush1.msra.mxu0 %v4438
        %4440 = vmatprep.subr.mxu0 0.0
        %v4441 = vand.u32 %v3282, 4294901760
        %4442 = vmatpush1.msra.mxu0 %v4441
        %4443 = vmatprep.subr.mxu0 0.0
        %v4444 = vand.u32 %v3283, 4294901760
        %4445 = vmatpush1.msra.mxu0 %v4444
        %4446 = vmatprep.subr.mxu0 0.0
        %v4447 = vand.u32 %v3284, 4294901760
        %4448 = vmatpush1.msra.mxu0 %v4447
        %4449 = vmatprep.subr.mxu0 0.0
        %4450 = vmatpush1.msra.mxu0 0.0
        %4451 = vmatprep.subr.mxu0 0.0
        %4452 = vmatpush1.msra.mxu0 0.0
        %4453 = vmatprep.subr.mxu0 0.0
        %4454 = vmatpush1.msra.mxu0 0.0
        %4455 = vmatprep.subr.mxu0 0.0
        %4456 = vmatpush1.msra.mxu0 0.0
        %4457 = vmatprep.subr.mxu0 0.0
        %4458 = vmatpush1.msra.mxu0 0.0
        %4459 = vmatprep.subr.mxu0 0.0
        %4460 = vmatpush1.msra.mxu0 0.0
        %4461 = vmatprep.subr.mxu0 0.0
        %4462 = vmatpush1.msra.mxu0 0.0
        %4463 = vmatprep.subr.mxu0 0.0
        %4464 = vmatpush1.msra.mxu0 0.0
        %4465 = vmatprep.subr.mxu0 0.0
        %4466 = vmatpush1.msra.mxu0 0.0
        %4467 = vmatprep.subr.mxu0 0.0
        %4468 = vmatpush1.msra.mxu0 0.0
        %4469 = vmatprep.subr.mxu0 0.0
        %4470 = vmatpush1.msra.mxu0 0.0
        %4471 = vmatprep.subr.mxu0 0.0
        %4472 = vmatpush1.msra.mxu0 0.0
        %4473 = vmatprep.subr.mxu0 0.0
        %4474 = vmatpush1.msra.mxu0 0.0
        %4475 = vmatprep.subr.mxu0 0.0
        %4476 = vmatpush1.msra.mxu0 0.0
        %4477 = vmatprep.subr.mxu0 0.0
        %4478 = vmatpush1.msra.mxu0 0.0
        %4479 = vmatprep.subr.mxu0 0.0
        %4480 = vmatpush1.msra.mxu0 0.0
        %4481 = vmatprep.mubr.f32.mxu0 0.0
        %v4482 = vand.u32 %v3253, 4294901760
        %4483 = vmatmul.mubr.f32.gmra.mrb[0].mxu0 %v4482
        %v4484 = vpop.f32.mrb[0].mxu0
        %v4485 = vadd.f32 %v4308, %v4484
        %v4486 = vpop.f32.mrb[0].mxu0
        %4487 = vmatprep.mubr.f32.mxu0 0.0
        %v4488 = vand.u32 %v3254, 4294901760
        %4489 = vmatmul.mubr.f32.gmra.mrb[0].mxu0 %v4488
        %v4490 = vpop.f32.mrb[0].mxu0
        %v4491 = vadd.f32 %v4314, %v4490
        %v4492 = vpop.f32.mrb[0].mxu0
        %4493 = vmatprep.mubr.f32.mxu0 0.0
        %v4494 = vand.u32 %v3255, 4294901760
        %4495 = vmatmul.mubr.f32.gmra.mrb[0].mxu0 %v4494
        %v4496 = vpop.f32.mrb[0].mxu0
        %v4497 = vadd.f32 %v4320, %v4496
        %v4498 = vpop.f32.mrb[0].mxu0
        %4499 = vmatprep.mubr.f32.mxu0 0.0
        %v4500 = vand.u32 %v3256, 4294901760
        %4501 = vmatmul.mubr.f32.gmra.mrb[0].mxu0 %v4500
        %v4502 = vpop.f32.mrb[0].mxu0
        %v4503 = vadd.f32 %v4326, %v4502
        %v4504 = vpop.f32.mrb[0].mxu0
        %4505 = vmatprep.mubr.f32.mxu0 0.0
        %v4506 = vand.u32 %v3257, 4294901760
        %4507 = vmatmul.mubr.f32.gmra.mrb[0].mxu0 %v4506
        %v4508 = vpop.f32.mrb[0].mxu0
        %v4509 = vadd.f32 %v4332, %v4508
        %v4510 = vpop.f32.mrb[0].mxu0
        %4511 = vmatprep.mubr.f32.mxu0 0.0
        %v4512 = vand.u32 %v3258, 4294901760
        %4513 = vmatmul.mubr.f32.gmra.mrb[0].mxu0 %v4512
        %v4514 = vpop.f32.mrb[0].mxu0
        %v4515 = vadd.f32 %v4338, %v4514
        %v4516 = vpop.f32.mrb[0].mxu0
        %4517 = vmatprep.mubr.f32.mxu0 0.0
        %v4518 = vand.u32 %v3259, 4294901760
        %4519 = vmatmul.mubr.f32.gmra.mrb[0].mxu0 %v4518
        %v4520 = vpop.f32.mrb[0].mxu0
        %v4521 = vadd.f32 %v4344, %v4520
        %v4522 = vpop.f32.mrb[0].mxu0
        %4523 = vmatprep.mubr.f32.mxu0 0.0
        %v4524 = vand.u32 %v3260, 4294901760
        %4525 = vmatmul.mubr.f32.gmra.mrb[0].mxu0 %v4524
        %v4526 = vpop.f32.mrb[0].mxu0
        %v4527 = vadd.f32 %v4350, %v4526
        %v4528 = vpop.f32.mrb[0].mxu0
        %4529 = vmatprep.mubr.f32.mxu0 0.0
        %v4530 = vand.u32 %v3261, 4294901760
        %4531 = vmatmul.mubr.f32.gmra.mrb[0].mxu0 %v4530
        %v4532 = vpop.f32.mrb[0].mxu0
        %v4533 = vadd.f32 %v4356, %v4532
        %v4534 = vpop.f32.mrb[0].mxu0
        %4535 = vmatprep.mubr.f32.mxu0 0.0
        %v4536 = vand.u32 %v3262, 4294901760
        %4537 = vmatmul.mubr.f32.gmra.mrb[0].mxu0 %v4536
        %v4538 = vpop.f32.mrb[0].mxu0
        %v4539 = vadd.f32 %v4362, %v4538
        %v4540 = vpop.f32.mrb[0].mxu0
        %4541 = vmatprep.mubr.f32.mxu0 0.0
        %v4542 = vand.u32 %v3263, 4294901760
        %4543 = vmatmul.mubr.f32.gmra.mrb[0].mxu0 %v4542
        %v4544 = vpop.f32.mrb[0].mxu0
        %v4545 = vadd.f32 %v4368, %v4544
        %v4546 = vpop.f32.mrb[0].mxu0
        %4547 = vmatprep.mubr.f32.mxu0 0.0
        %v4548 = vand.u32 %v3264, 4294901760
        %4549 = vmatmul.mubr.f32.gmra.mrb[0].mxu0 %v4548
        %v4550 = vpop.f32.mrb[0].mxu0
        %v4551 = vadd.f32 %v4374, %v4550
        %v4552 = vpop.f32.mrb[0].mxu0
        %4553 = vmatprep.mubr.f32.mxu0 0.0
        %v4554 = vand.u32 %v3265, 4294901760
        %4555 = vmatmul.mubr.f32.gmra.mrb[0].mxu0 %v4554
        %v4556 = vpop.f32.mrb[0].mxu0
        %v4557 = vadd.f32 %v4380, %v4556
        %v4558 = vpop.f32.mrb[0].mxu0
        %4559 = vmatprep.mubr.f32.mxu0 0.0
        %v4560 = vand.u32 %v3266, 4294901760
        %4561 = vmatmul.mubr.f32.gmra.mrb[0].mxu0 %v4560
        %v4562 = vpop.f32.mrb[0].mxu0
        %v4563 = vadd.f32 %v4386, %v4562
        %v4564 = vpop.f32.mrb[0].mxu0
        %4565 = vmatprep.mubr.f32.mxu0 0.0
        %v4566 = vand.u32 %v3267, 4294901760
        %4567 = vmatmul.mubr.f32.gmra.mrb[0].mxu0 %v4566
        %v4568 = vpop.f32.mrb[0].mxu0
        %v4569 = vadd.f32 %v4392, %v4568
        %v4570 = vpop.f32.mrb[0].mxu0
        %4571 = vmatprep.mubr.f32.mxu0 0.0
        %v4572 = vand.u32 %v3268, 4294901760
        %4573 = vmatmul.mubr.f32.gmra.mrb[0].mxu0 %v4572
        %v4574 = vpop.f32.mrb[0].mxu0
        %v4575 = vadd.f32 %v4398, %v4574
        %v4576 = vpop.f32.mrb[0].mxu0
        %4577 = vdwg.mxu0
        %v4578 = vmax.f32 %v4485, 0.0
        %v4579 = vmax.f32 %v4491, 0.0
        %v4580 = vmax.f32 %v4497, 0.0
        %v4581 = vmax.f32 %v4503, 0.0
        %v4582 = vmax.f32 %v4509, 0.0
        %v4583 = vmax.f32 %v4515, 0.0
        %v4584 = vmax.f32 %v4521, 0.0
        %v4585 = vmax.f32 %v4527, 0.0
        %v4586 = vmax.f32 %v4533, 0.0
        %v4587 = vmax.f32 %v4539, 0.0
        %v4588 = vmax.f32 %v4545, 0.0
        %v4589 = vmax.f32 %v4551, 0.0
        %v4590 = vmax.f32 %v4557, 0.0
        %v4591 = vmax.f32 %v4563, 0.0
        %v4592 = vmax.f32 %v4569, 0.0
        %v4593 = vmax.f32 %v4575, 0.0
        %v4594 = vld [vmem:[#allocation2] sm:$0xff]
        %v4595 = vld [vmem:[#allocation2 + $0x8] sm:$0xff]
        %v4596 = vld [vmem:[#allocation2 + $0x10] sm:$0xff]
        %v4597 = vld [vmem:[#allocation2 + $0x18] sm:$0xff]
        %v4598 = vld [vmem:[#allocation2 + $0x20] sm:$0xff]
        %v4599 = vld [vmem:[#allocation2 + $0x28] sm:$0xff]
        %v4600 = vld [vmem:[#allocation2 + $0x30] sm:$0xff]
        %v4601 = vld [vmem:[#allocation2 + $0x38] sm:$0xff]
        %v4602 = vld [vmem:[#allocation2 + $0x40] sm:$0xff]
        %v4603 = vld [vmem:[#allocation2 + $0x48] sm:$0xff]
        %v4604 = vld [vmem:[#allocation2 + $0x50] sm:$0xff]
        %v4605 = vld [vmem:[#allocation2 + $0x58] sm:$0xff]
        %v4606 = vld [vmem:[#allocation2 + $0x60] sm:$0xff]
        %v4607 = vld [vmem:[#allocation2 + $0x68] sm:$0xff]
        %v4608 = vld [vmem:[#allocation2 + $0x70] sm:$0xff]
        %v4609 = vld [vmem:[#allocation2 + $0x78] sm:$0xff]
        %v4610 = vld [vmem:[%s5] sm:$0x1]
        %v4612 = vlaneseq
        %v4613 = vshrl.u32 %v4612, 7
        %v4614 = vsub.s32 0, %v4613
        %v4615 = vrot.slane %v4610, %v4614
        %4617 = vmatprep.subr.mxu0 0.0
        %v4618 = vand.u32 %v4594, 4294901760
        %4619 = vmatpush1.msra.mxu0 %v4618
        %4620 = vmatprep.subr.mxu0 0.0
        %v4621 = vand.u32 %v4595, 4294901760
        %4622 = vmatpush1.msra.mxu0 %v4621
        %4623 = vmatprep.subr.mxu0 0.0
        %v4624 = vand.u32 %v4596, 4294901760
        %4625 = vmatpush1.msra.mxu0 %v4624
        %4626 = vmatprep.subr.mxu0 0.0
        %v4627 = vand.u32 %v4597, 4294901760
        %4628 = vmatpush1.msra.mxu0 %v4627
        %4629 = vmatprep.subr.mxu0 0.0
        %v4630 = vand.u32 %v4598, 4294901760
        %4631 = vmatpush1.msra.mxu0 %v4630
        %4632 = vmatprep.subr.mxu0 0.0
        %v4633 = vand.u32 %v4599, 4294901760
        %4634 = vmatpush1.msra.mxu0 %v4633
        %4635 = vmatprep.subr.mxu0 0.0
        %v4636 = vand.u32 %v4600, 4294901760
        %4637 = vmatpush1.msra.mxu0 %v4636
        %4638 = vmatprep.subr.mxu0 0.0
        %v4639 = vand.u32 %v4601, 4294901760
        %4640 = vmatpush1.msra.mxu0 %v4639
        %4641 = vmatprep.subr.mxu0 0.0
        %v4642 = vand.u32 %v4602, 4294901760
        %4643 = vmatpush1.msra.mxu0 %v4642
        %4644 = vmatprep.subr.mxu0 0.0
        %v4645 = vand.u32 %v4603, 4294901760
        %4646 = vmatpush1.msra.mxu0 %v4645
        %4647 = vmatprep.subr.mxu0 0.0
        %v4648 = vand.u32 %v4604, 4294901760
        %4649 = vmatpush1.msra.mxu0 %v4648
        %4650 = vmatprep.subr.mxu0 0.0
        %v4651 = vand.u32 %v4605, 4294901760
        %4652 = vmatpush1.msra.mxu0 %v4651
        %4653 = vmatprep.subr.mxu0 0.0
        %v4654 = vand.u32 %v4606, 4294901760
        %4655 = vmatpush1.msra.mxu0 %v4654
        %4656 = vmatprep.subr.mxu0 0.0
        %v4657 = vand.u32 %v4607, 4294901760
        %4658 = vmatpush1.msra.mxu0 %v4657
        %4659 = vmatprep.subr.mxu0 0.0
        %v4660 = vand.u32 %v4608, 4294901760
        %4661 = vmatpush1.msra.mxu0 %v4660
        %4662 = vmatprep.subr.mxu0 0.0
        %v4663 = vand.u32 %v4609, 4294901760
        %4664 = vmatpush1.msra.mxu0 %v4663
        %4665 = vmatprep.subr.mxu0 0.0
        %4666 = vmatpush1.msra.mxu0 0.0
        %4667 = vmatprep.subr.mxu0 0.0
        %4668 = vmatpush1.msra.mxu0 0.0
        %4669 = vmatprep.subr.mxu0 0.0
        %4670 = vmatpush1.msra.mxu0 0.0
        %4671 = vmatprep.subr.mxu0 0.0
        %4672 = vmatpush1.msra.mxu0 0.0
        %4673 = vmatprep.subr.mxu0 0.0
        %4674 = vmatpush1.msra.mxu0 0.0
        %4675 = vmatprep.subr.mxu0 0.0
        %4676 = vmatpush1.msra.mxu0 0.0
        %4677 = vmatprep.subr.mxu0 0.0
        %4678 = vmatpush1.msra.mxu0 0.0
        %4679 = vmatprep.subr.mxu0 0.0
        %4680 = vmatpush1.msra.mxu0 0.0
        %4681 = vmatprep.subr.mxu0 0.0
        %4682 = vmatpush1.msra.mxu0 0.0
        %4683 = vmatprep.subr.mxu0 0.0
        %4684 = vmatpush1.msra.mxu0 0.0
        %4685 = vmatprep.subr.mxu0 0.0
        %4686 = vmatpush1.msra.mxu0 0.0
        %4687 = vmatprep.subr.mxu0 0.0
        %4688 = vmatpush1.msra.mxu0 0.0
        %4689 = vmatprep.subr.mxu0 0.0
        %4690 = vmatpush1.msra.mxu0 0.0
        %4691 = vmatprep.subr.mxu0 0.0
        %4692 = vmatpush1.msra.mxu0 0.0
        %4693 = vmatprep.subr.mxu0 0.0
        %4694 = vmatpush1.msra.mxu0 0.0
        %4695 = vmatprep.subr.mxu0 0.0
        %4696 = vmatpush1.msra.mxu0 0.0
        %4697 = vmatprep.mubr.f32.mxu0 0.0
        %v4698 = vand.u32 %v4578, 4294901760
        %v4699 = vsub.f32 %v4578, %v4698
        %v4700 = vand.u32 %v4699, 4294901760
        %v4701 = vsub.f32 %v4699, %v4700
        %v4702 = vand.u32 %v4701, 4294901760
        %4703 = vmatmul.mubr.f32.gmra.mrb[0].mxu0 %v4702
        %v4704 = vpop.f32.mrb[0].mxu0
        %v4705 = vadd.f32 %v4615, %v4704
        %v4706 = vpop.f32.mrb[0].mxu0
        %4707 = vmatprep.mubr.f32.mxu0 0.0
        %v4708 = vand.u32 %v4579, 4294901760
        %v4709 = vsub.f32 %v4579, %v4708
        %v4710 = vand.u32 %v4709, 4294901760
        %v4711 = vsub.f32 %v4709, %v4710
        %v4712 = vand.u32 %v4711, 4294901760
        %4713 = vmatmul.mubr.f32.gmra.mrb[0].mxu0 %v4712
        %v4714 = vpop.f32.mrb[0].mxu0
        %v4715 = vadd.f32 %v4615, %v4714
        %v4716 = vpop.f32.mrb[0].mxu0
        %4717 = vmatprep.mubr.f32.mxu0 0.0
        %v4718 = vand.u32 %v4580, 4294901760
        %v4719 = vsub.f32 %v4580, %v4718
        %v4720 = vand.u32 %v4719, 4294901760
        %v4721 = vsub.f32 %v4719, %v4720
        %v4722 = vand.u32 %v4721, 4294901760
        %4723 = vmatmul.mubr.f32.gmra.mrb[0].mxu0 %v4722
        %v4724 = vpop.f32.mrb[0].mxu0
        %v4725 = vadd.f32 %v4615, %v4724
        %v4726 = vpop.f32.mrb[0].mxu0
        %4727 = vmatprep.mubr.f32.mxu0 0.0
        %v4728 = vand.u32 %v4581, 4294901760
        %v4729 = vsub.f32 %v4581, %v4728
        %v4730 = vand.u32 %v4729, 4294901760
        %v4731 = vsub.f32 %v4729, %v4730
        %v4732 = vand.u32 %v4731, 4294901760
        %4733 = vmatmul.mubr.f32.gmra.mrb[0].mxu0 %v4732
        %v4734 = vpop.f32.mrb[0].mxu0
        %v4735 = vadd.f32 %v4615, %v4734
        %v4736 = vpop.f32.mrb[0].mxu0
        %4737 = vmatprep.mubr.f32.mxu0 0.0
        %v4738 = vand.u32 %v4582, 4294901760
        %v4739 = vsub.f32 %v4582, %v4738
        %v4740 = vand.u32 %v4739, 4294901760
        %v4741 = vsub.f32 %v4739, %v4740
        %v4742 = vand.u32 %v4741, 4294901760
        %4743 = vmatmul.mubr.f32.gmra.mrb[0].mxu0 %v4742
        %v4744 = vpop.f32.mrb[0].mxu0
        %v4745 = vadd.f32 %v4615, %v4744
        %v4746 = vpop.f32.mrb[0].mxu0
        %4747 = vmatprep.mubr.f32.mxu0 0.0
        %v4748 = vand.u32 %v4583, 4294901760
        %v4749 = vsub.f32 %v4583, %v4748
        %v4750 = vand.u32 %v4749, 4294901760
        %v4751 = vsub.f32 %v4749, %v4750
        %v4752 = vand.u32 %v4751, 4294901760
        %4753 = vmatmul.mubr.f32.gmra.mrb[0].mxu0 %v4752
        %v4754 = vpop.f32.mrb[0].mxu0
        %v4755 = vadd.f32 %v4615, %v4754
        %v4756 = vpop.f32.mrb[0].mxu0
        %4757 = vmatprep.mubr.f32.mxu0 0.0
        %v4758 = vand.u32 %v4584, 4294901760
        %v4759 = vsub.f32 %v4584, %v4758
        %v4760 = vand.u32 %v4759, 4294901760
        %v4761 = vsub.f32 %v4759, %v4760
        %v4762 = vand.u32 %v4761, 4294901760
        %4763 = vmatmul.mubr.f32.gmra.mrb[0].mxu0 %v4762
        %v4764 = vpop.f32.mrb[0].mxu0
        %v4765 = vadd.f32 %v4615, %v4764
        %v4766 = vpop.f32.mrb[0].mxu0
        %4767 = vmatprep.mubr.f32.mxu0 0.0
        %v4768 = vand.u32 %v4585, 4294901760
        %v4769 = vsub.f32 %v4585, %v4768
        %v4770 = vand.u32 %v4769, 4294901760
        %v4771 = vsub.f32 %v4769, %v4770
        %v4772 = vand.u32 %v4771, 4294901760
        %4773 = vmatmul.mubr.f32.gmra.mrb[0].mxu0 %v4772
        %v4774 = vpop.f32.mrb[0].mxu0
        %v4775 = vadd.f32 %v4615, %v4774
        %v4776 = vpop.f32.mrb[0].mxu0
        %4777 = vmatprep.mubr.f32.mxu0 0.0
        %v4778 = vand.u32 %v4586, 4294901760
        %v4779 = vsub.f32 %v4586, %v4778
        %v4780 = vand.u32 %v4779, 4294901760
        %v4781 = vsub.f32 %v4779, %v4780
        %v4782 = vand.u32 %v4781, 4294901760
        %4783 = vmatmul.mubr.f32.gmra.mrb[0].mxu0 %v4782
        %v4784 = vpop.f32.mrb[0].mxu0
        %v4785 = vadd.f32 %v4615, %v4784
        %v4786 = vpop.f32.mrb[0].mxu0
        %4787 = vmatprep.mubr.f32.mxu0 0.0
        %v4788 = vand.u32 %v4587, 4294901760
        %v4789 = vsub.f32 %v4587, %v4788
        %v4790 = vand.u32 %v4789, 4294901760
        %v4791 = vsub.f32 %v4789, %v4790
        %v4792 = vand.u32 %v4791, 4294901760
        %4793 = vmatmul.mubr.f32.gmra.mrb[0].mxu0 %v4792
        %v4794 = vpop.f32.mrb[0].mxu0
        %v4795 = vadd.f32 %v4615, %v4794
        %v4796 = vpop.f32.mrb[0].mxu0
        %4797 = vmatprep.mubr.f32.mxu0 0.0
        %v4798 = vand.u32 %v4588, 4294901760
        %v4799 = vsub.f32 %v4588, %v4798
        %v4800 = vand.u32 %v4799, 4294901760
        %v4801 = vsub.f32 %v4799, %v4800
        %v4802 = vand.u32 %v4801, 4294901760
        %4803 = vmatmul.mubr.f32.gmra.mrb[0].mxu0 %v4802
        %v4804 = vpop.f32.mrb[0].mxu0
        %v4805 = vadd.f32 %v4615, %v4804
        %v4806 = vpop.f32.mrb[0].mxu0
        %4807 = vmatprep.mubr.f32.mxu0 0.0
        %v4808 = vand.u32 %v4589, 4294901760
        %v4809 = vsub.f32 %v4589, %v4808
        %v4810 = vand.u32 %v4809, 4294901760
        %v4811 = vsub.f32 %v4809, %v4810
        %v4812 = vand.u32 %v4811, 4294901760
        %4813 = vmatmul.mubr.f32.gmra.mrb[0].mxu0 %v4812
        %v4814 = vpop.f32.mrb[0].mxu0
        %v4815 = vadd.f32 %v4615, %v4814
        %v4816 = vpop.f32.mrb[0].mxu0
        %4817 = vmatprep.mubr.f32.mxu0 0.0
        %v4818 = vand.u32 %v4590, 4294901760
        %v4819 = vsub.f32 %v4590, %v4818
        %v4820 = vand.u32 %v4819, 4294901760
        %v4821 = vsub.f32 %v4819, %v4820
        %v4822 = vand.u32 %v4821, 4294901760
        %4823 = vmatmul.mubr.f32.gmra.mrb[0].mxu0 %v4822
        %v4824 = vpop.f32.mrb[0].mxu0
        %v4825 = vadd.f32 %v4615, %v4824
        %v4826 = vpop.f32.mrb[0].mxu0
        %4827 = vmatprep.mubr.f32.mxu0 0.0
        %v4828 = vand.u32 %v4591, 4294901760
        %v4829 = vsub.f32 %v4591, %v4828
        %v4830 = vand.u32 %v4829, 4294901760
        %v4831 = vsub.f32 %v4829, %v4830
        %v4832 = vand.u32 %v4831, 4294901760
        %4833 = vmatmul.mubr.f32.gmra.mrb[0].mxu0 %v4832
        %v4834 = vpop.f32.mrb[0].mxu0
        %v4835 = vadd.f32 %v4615, %v4834
        %v4836 = vpop.f32.mrb[0].mxu0
        %4837 = vmatprep.mubr.f32.mxu0 0.0
        %v4838 = vand.u32 %v4592, 4294901760
        %v4839 = vsub.f32 %v4592, %v4838
        %v4840 = vand.u32 %v4839, 4294901760
        %v4841 = vsub.f32 %v4839, %v4840
        %v4842 = vand.u32 %v4841, 4294901760
        %4843 = vmatmul.mubr.f32.gmra.mrb[0].mxu0 %v4842
        %v4844 = vpop.f32.mrb[0].mxu0
        %v4845 = vadd.f32 %v4615, %v4844
        %v4846 = vpop.f32.mrb[0].mxu0
        %4847 = vmatprep.mubr.f32.mxu0 0.0
        %v4848 = vand.u32 %v4593, 4294901760
        %v4849 = vsub.f32 %v4593, %v4848
        %v4850 = vand.u32 %v4849, 4294901760
        %v4851 = vsub.f32 %v4849, %v4850
        %v4852 = vand.u32 %v4851, 4294901760
        %4853 = vmatmul.mubr.f32.gmra.mrb[0].mxu0 %v4852
        %v4854 = vpop.f32.mrb[0].mxu0
        %v4855 = vadd.f32 %v4615, %v4854
        %v4856 = vpop.f32.mrb[0].mxu0
        %4857 = vdwg.mxu0
        %4858 = vmatprep.subr.mxu0 0.0
        %v4859 = vand.u32 %v4594, 4294901760
        %v4860 = vsub.f32 %v4594, %v4859
        %v4861 = vand.u32 %v4860, 4294901760
        %v4862 = vsub.f32 %v4860, %v4861
        %v4863 = vand.u32 %v4862, 4294901760
        %4864 = vmatpush1.msra.mxu0 %v4863
        %4865 = vmatprep.subr.mxu0 0.0
        %v4866 = vand.u32 %v4595, 4294901760
        %v4867 = vsub.f32 %v4595, %v4866
        %v4868 = vand.u32 %v4867, 4294901760
        %v4869 = vsub.f32 %v4867, %v4868
        %v4870 = vand.u32 %v4869, 4294901760
        %4871 = vmatpush1.msra.mxu0 %v4870
        %4872 = vmatprep.subr.mxu0 0.0
        %v4873 = vand.u32 %v4596, 4294901760
        %v4874 = vsub.f32 %v4596, %v4873
        %v4875 = vand.u32 %v4874, 4294901760
        %v4876 = vsub.f32 %v4874, %v4875
        %v4877 = vand.u32 %v4876, 4294901760
        %4878 = vmatpush1.msra.mxu0 %v4877
        %4879 = vmatprep.subr.mxu0 0.0
        %v4880 = vand.u32 %v4597, 4294901760
        %v4881 = vsub.f32 %v4597, %v4880
        %v4882 = vand.u32 %v4881, 4294901760
        %v4883 = vsub.f32 %v4881, %v4882
        %v4884 = vand.u32 %v4883, 4294901760
        %4885 = vmatpush1.msra.mxu0 %v4884
        %4886 = vmatprep.subr.mxu0 0.0
        %v4887 = vand.u32 %v4598, 4294901760
        %v4888 = vsub.f32 %v4598, %v4887
        %v4889 = vand.u32 %v4888, 4294901760
        %v4890 = vsub.f32 %v4888, %v4889
        %v4891 = vand.u32 %v4890, 4294901760
        %4892 = vmatpush1.msra.mxu0 %v4891
        %4893 = vmatprep.subr.mxu0 0.0
        %v4894 = vand.u32 %v4599, 4294901760
        %v4895 = vsub.f32 %v4599, %v4894
        %v4896 = vand.u32 %v4895, 4294901760
        %v4897 = vsub.f32 %v4895, %v4896
        %v4898 = vand.u32 %v4897, 4294901760
        %4899 = vmatpush1.msra.mxu0 %v4898
        %4900 = vmatprep.subr.mxu0 0.0
        %v4901 = vand.u32 %v4600, 4294901760
        %v4902 = vsub.f32 %v4600, %v4901
        %v4903 = vand.u32 %v4902, 4294901760
        %v4904 = vsub.f32 %v4902, %v4903
        %v4905 = vand.u32 %v4904, 4294901760
        %4906 = vmatpush1.msra.mxu0 %v4905
        %4907 = vmatprep.subr.mxu0 0.0
        %v4908 = vand.u32 %v4601, 4294901760
        %v4909 = vsub.f32 %v4601, %v4908
        %v4910 = vand.u32 %v4909, 4294901760
        %v4911 = vsub.f32 %v4909, %v4910
        %v4912 = vand.u32 %v4911, 4294901760
        %4913 = vmatpush1.msra.mxu0 %v4912
        %4914 = vmatprep.subr.mxu0 0.0
        %v4915 = vand.u32 %v4602, 4294901760
        %v4916 = vsub.f32 %v4602, %v4915
        %v4917 = vand.u32 %v4916, 4294901760
        %v4918 = vsub.f32 %v4916, %v4917
        %v4919 = vand.u32 %v4918, 4294901760
        %4920 = vmatpush1.msra.mxu0 %v4919
        %4921 = vmatprep.subr.mxu0 0.0
        %v4922 = vand.u32 %v4603, 4294901760
        %v4923 = vsub.f32 %v4603, %v4922
        %v4924 = vand.u32 %v4923, 4294901760
        %v4925 = vsub.f32 %v4923, %v4924
        %v4926 = vand.u32 %v4925, 4294901760
        %4927 = vmatpush1.msra.mxu0 %v4926
        %4928 = vmatprep.subr.mxu0 0.0
        %v4929 = vand.u32 %v4604, 4294901760
        %v4930 = vsub.f32 %v4604, %v4929
        %v4931 = vand.u32 %v4930, 4294901760
        %v4932 = vsub.f32 %v4930, %v4931
        %v4933 = vand.u32 %v4932, 4294901760
        %4934 = vmatpush1.msra.mxu0 %v4933
        %4935 = vmatprep.subr.mxu0 0.0
        %v4936 = vand.u32 %v4605, 4294901760
        %v4937 = vsub.f32 %v4605, %v4936
        %v4938 = vand.u32 %v4937, 4294901760
        %v4939 = vsub.f32 %v4937, %v4938
        %v4940 = vand.u32 %v4939, 4294901760
        %4941 = vmatpush1.msra.mxu0 %v4940
        %4942 = vmatprep.subr.mxu0 0.0
        %v4943 = vand.u32 %v4606, 4294901760
        %v4944 = vsub.f32 %v4606, %v4943
        %v4945 = vand.u32 %v4944, 4294901760
        %v4946 = vsub.f32 %v4944, %v4945
        %v4947 = vand.u32 %v4946, 4294901760
        %4948 = vmatpush1.msra.mxu0 %v4947
        %4949 = vmatprep.subr.mxu0 0.0
        %v4950 = vand.u32 %v4607, 4294901760
        %v4951 = vsub.f32 %v4607, %v4950
        %v4952 = vand.u32 %v4951, 4294901760
        %v4953 = vsub.f32 %v4951, %v4952
        %v4954 = vand.u32 %v4953, 4294901760
        %4955 = vmatpush1.msra.mxu0 %v4954
        %4956 = vmatprep.subr.mxu0 0.0
        %v4957 = vand.u32 %v4608, 4294901760
        %v4958 = vsub.f32 %v4608, %v4957
        %v4959 = vand.u32 %v4958, 4294901760
        %v4960 = vsub.f32 %v4958, %v4959
        %v4961 = vand.u32 %v4960, 4294901760
        %4962 = vmatpush1.msra.mxu0 %v4961
        %4963 = vmatprep.subr.mxu0 0.0
        %v4964 = vand.u32 %v4609, 4294901760
        %v4965 = vsub.f32 %v4609, %v4964
        %v4966 = vand.u32 %v4965, 4294901760
        %v4967 = vsub.f32 %v4965, %v4966
        %v4968 = vand.u32 %v4967, 4294901760
        %4969 = vmatpush1.msra.mxu0 %v4968
        %4970 = vmatprep.subr.mxu0 0.0
        %4971 = vmatpush1.msra.mxu0 0.0
        %4972 = vmatprep.subr.mxu0 0.0
        %4973 = vmatpush1.msra.mxu0 0.0
        %4974 = vmatprep.subr.mxu0 0.0
        %4975 = vmatpush1.msra.mxu0 0.0
        %4976 = vmatprep.subr.mxu0 0.0
        %4977 = vmatpush1.msra.mxu0 0.0
        %4978 = vmatprep.subr.mxu0 0.0
        %4979 = vmatpush1.msra.mxu0 0.0
        %4980 = vmatprep.subr.mxu0 0.0
        %4981 = vmatpush1.msra.mxu0 0.0
        %4982 = vmatprep.subr.mxu0 0.0
        %4983 = vmatpush1.msra.mxu0 0.0
        %4984 = vmatprep.subr.mxu0 0.0
        %4985 = vmatpush1.msra.mxu0 0.0
        %4986 = vmatprep.subr.mxu0 0.0
        %4987 = vmatpush1.msra.mxu0 0.0
        %4988 = vmatprep.subr.mxu0 0.0
        %4989 = vmatpush1.msra.mxu0 0.0
        %4990 = vmatprep.subr.mxu0 0.0
        %4991 = vmatpush1.msra.mxu0 0.0
        %4992 = vmatprep.subr.mxu0 0.0
        %4993 = vmatpush1.msra.mxu0 0.0
        %4994 = vmatprep.subr.mxu0 0.0
        %4995 = vmatpush1.msra.mxu0 0.0
        %4996 = vmatprep.subr.mxu0 0.0
        %4997 = vmatpush1.msra.mxu0 0.0
        %4998 = vmatprep.subr.mxu0 0.0
        %4999 = vmatpush1.msra.mxu0 0.0
        %5000 = vmatprep.subr.mxu0 0.0
        %5001 = vmatpush1.msra.mxu0 0.0
        %5002 = vmatprep.mubr.f32.mxu0 0.0
        %v5003 = vand.u32 %v4578, 4294901760
        %5004 = vmatmul.mubr.f32.gmra.mrb[0].mxu0 %v5003
        %v5005 = vpop.f32.mrb[0].mxu0
        %v5006 = vadd.f32 %v4705, %v5005
        %v5007 = vpop.f32.mrb[0].mxu0
        %5008 = vmatprep.mubr.f32.mxu0 0.0
        %v5009 = vand.u32 %v4579, 4294901760
        %5010 = vmatmul.mubr.f32.gmra.mrb[0].mxu0 %v5009
        %v5011 = vpop.f32.mrb[0].mxu0
        %v5012 = vadd.f32 %v4715, %v5011
        %v5013 = vpop.f32.mrb[0].mxu0
        %5014 = vmatprep.mubr.f32.mxu0 0.0
        %v5015 = vand.u32 %v4580, 4294901760
        %5016 = vmatmul.mubr.f32.gmra.mrb[0].mxu0 %v5015
        %v5017 = vpop.f32.mrb[0].mxu0
        %v5018 = vadd.f32 %v4725, %v5017
        %v5019 = vpop.f32.mrb[0].mxu0
        %5020 = vmatprep.mubr.f32.mxu0 0.0
        %v5021 = vand.u32 %v4581, 4294901760
        %5022 = vmatmul.mubr.f32.gmra.mrb[0].mxu0 %v5021
        %v5023 = vpop.f32.mrb[0].mxu0
        %v5024 = vadd.f32 %v4735, %v5023
        %v5025 = vpop.f32.mrb[0].mxu0
        %5026 = vmatprep.mubr.f32.mxu0 0.0
        %v5027 = vand.u32 %v4582, 4294901760
        %5028 = vmatmul.mubr.f32.gmra.mrb[0].mxu0 %v5027
        %v5029 = vpop.f32.mrb[0].mxu0
        %v5030 = vadd.f32 %v4745, %v5029
        %v5031 = vpop.f32.mrb[0].mxu0
        %5032 = vmatprep.mubr.f32.mxu0 0.0
        %v5033 = vand.u32 %v4583, 4294901760
        %5034 = vmatmul.mubr.f32.gmra.mrb[0].mxu0 %v5033
        %v5035 = vpop.f32.mrb[0].mxu0
        %v5036 = vadd.f32 %v4755, %v5035
        %v5037 = vpop.f32.mrb[0].mxu0
        %5038 = vmatprep.mubr.f32.mxu0 0.0
        %v5039 = vand.u32 %v4584, 4294901760
        %5040 = vmatmul.mubr.f32.gmra.mrb[0].mxu0 %v5039
        %v5041 = vpop.f32.mrb[0].mxu0
        %v5042 = vadd.f32 %v4765, %v5041
        %v5043 = vpop.f32.mrb[0].mxu0
        %5044 = vmatprep.mubr.f32.mxu0 0.0
        %v5045 = vand.u32 %v4585, 4294901760
        %5046 = vmatmul.mubr.f32.gmra.mrb[0].mxu0 %v5045
        %v5047 = vpop.f32.mrb[0].mxu0
        %v5048 = vadd.f32 %v4775, %v5047
        %v5049 = vpop.f32.mrb[0].mxu0
        %5050 = vmatprep.mubr.f32.mxu0 0.0
        %v5051 = vand.u32 %v4586, 4294901760
        %5052 = vmatmul.mubr.f32.gmra.mrb[0].mxu0 %v5051
        %v5053 = vpop.f32.mrb[0].mxu0
        %v5054 = vadd.f32 %v4785, %v5053
        %v5055 = vpop.f32.mrb[0].mxu0
        %5056 = vmatprep.mubr.f32.mxu0 0.0
        %v5057 = vand.u32 %v4587, 4294901760
        %5058 = vmatmul.mubr.f32.gmra.mrb[0].mxu0 %v5057
        %v5059 = vpop.f32.mrb[0].mxu0
        %v5060 = vadd.f32 %v4795, %v5059
        %v5061 = vpop.f32.mrb[0].mxu0
        %5062 = vmatprep.mubr.f32.mxu0 0.0
        %v5063 = vand.u32 %v4588, 4294901760
        %5064 = vmatmul.mubr.f32.gmra.mrb[0].mxu0 %v5063
        %v5065 = vpop.f32.mrb[0].mxu0
        %v5066 = vadd.f32 %v4805, %v5065
        %v5067 = vpop.f32.mrb[0].mxu0
        %5068 = vmatprep.mubr.f32.mxu0 0.0
        %v5069 = vand.u32 %v4589, 4294901760
        %5070 = vmatmul.mubr.f32.gmra.mrb[0].mxu0 %v5069
        %v5071 = vpop.f32.mrb[0].mxu0
        %v5072 = vadd.f32 %v4815, %v5071
        %v5073 = vpop.f32.mrb[0].mxu0
        %5074 = vmatprep.mubr.f32.mxu0 0.0
        %v5075 = vand.u32 %v4590, 4294901760
        %5076 = vmatmul.mubr.f32.gmra.mrb[0].mxu0 %v5075
        %v5077 = vpop.f32.mrb[0].mxu0
        %v5078 = vadd.f32 %v4825, %v5077
        %v5079 = vpop.f32.mrb[0].mxu0
        %5080 = vmatprep.mubr.f32.mxu0 0.0
        %v5081 = vand.u32 %v4591, 4294901760
        %5082 = vmatmul.mubr.f32.gmra.mrb[0].mxu0 %v5081
        %v5083 = vpop.f32.mrb[0].mxu0
        %v5084 = vadd.f32 %v4835, %v5083
        %v5085 = vpop.f32.mrb[0].mxu0
        %5086 = vmatprep.mubr.f32.mxu0 0.0
        %v5087 = vand.u32 %v4592, 4294901760
        %5088 = vmatmul.mubr.f32.gmra.mrb[0].mxu0 %v5087
        %v5089 = vpop.f32.mrb[0].mxu0
        %v5090 = vadd.f32 %v4845, %v5089
        %v5091 = vpop.f32.mrb[0].mxu0
        %5092 = vmatprep.mubr.f32.mxu0 0.0
        %v5093 = vand.u32 %v4593, 4294901760
        %5094 = vmatmul.mubr.f32.gmra.mrb[0].mxu0 %v5093
        %v5095 = vpop.f32.mrb[0].mxu0
        %v5096 = vadd.f32 %v4855, %v5095
        %v5097 = vpop.f32.mrb[0].mxu0
        %5098 = vdwg.mxu0
        %5099 = vmatprep.subr.mxu0 0.0
        %v5100 = vand.u32 %v4594, 4294901760
        %v5101 = vsub.f32 %v4594, %v5100
        %5102 = vmatpush1.msra.mxu0 %v5101
        %5103 = vmatprep.subr.mxu0 0.0
        %v5104 = vand.u32 %v4595, 4294901760
        %v5105 = vsub.f32 %v4595, %v5104
        %5106 = vmatpush1.msra.mxu0 %v5105
        %5107 = vmatprep.subr.mxu0 0.0
        %v5108 = vand.u32 %v4596, 4294901760
        %v5109 = vsub.f32 %v4596, %v5108
        %5110 = vmatpush1.msra.mxu0 %v5109
        %5111 = vmatprep.subr.mxu0 0.0
        %v5112 = vand.u32 %v4597, 4294901760
        %v5113 = vsub.f32 %v4597, %v5112
        %5114 = vmatpush1.msra.mxu0 %v5113
        %5115 = vmatprep.subr.mxu0 0.0
        %v5116 = vand.u32 %v4598, 4294901760
        %v5117 = vsub.f32 %v4598, %v5116
        %5118 = vmatpush1.msra.mxu0 %v5117
        %5119 = vmatprep.subr.mxu0 0.0
        %v5120 = vand.u32 %v4599, 4294901760
        %v5121 = vsub.f32 %v4599, %v5120
        %5122 = vmatpush1.msra.mxu0 %v5121
        %5123 = vmatprep.subr.mxu0 0.0
        %v5124 = vand.u32 %v4600, 4294901760
        %v5125 = vsub.f32 %v4600, %v5124
        %5126 = vmatpush1.msra.mxu0 %v5125
        %5127 = vmatprep.subr.mxu0 0.0
        %v5128 = vand.u32 %v4601, 4294901760
        %v5129 = vsub.f32 %v4601, %v5128
        %5130 = vmatpush1.msra.mxu0 %v5129
        %5131 = vmatprep.subr.mxu0 0.0
        %v5132 = vand.u32 %v4602, 4294901760
        %v5133 = vsub.f32 %v4602, %v5132
        %5134 = vmatpush1.msra.mxu0 %v5133
        %5135 = vmatprep.subr.mxu0 0.0
        %v5136 = vand.u32 %v4603, 4294901760
        %v5137 = vsub.f32 %v4603, %v5136
        %5138 = vmatpush1.msra.mxu0 %v5137
        %5139 = vmatprep.subr.mxu0 0.0
        %v5140 = vand.u32 %v4604, 4294901760
        %v5141 = vsub.f32 %v4604, %v5140
        %5142 = vmatpush1.msra.mxu0 %v5141
        %5143 = vmatprep.subr.mxu0 0.0
        %v5144 = vand.u32 %v4605, 4294901760
        %v5145 = vsub.f32 %v4605, %v5144
        %5146 = vmatpush1.msra.mxu0 %v5145
        %5147 = vmatprep.subr.mxu0 0.0
        %v5148 = vand.u32 %v4606, 4294901760
        %v5149 = vsub.f32 %v4606, %v5148
        %5150 = vmatpush1.msra.mxu0 %v5149
        %5151 = vmatprep.subr.mxu0 0.0
        %v5152 = vand.u32 %v4607, 4294901760
        %v5153 = vsub.f32 %v4607, %v5152
        %5154 = vmatpush1.msra.mxu0 %v5153
        %5155 = vmatprep.subr.mxu0 0.0
        %v5156 = vand.u32 %v4608, 4294901760
        %v5157 = vsub.f32 %v4608, %v5156
        %5158 = vmatpush1.msra.mxu0 %v5157
        %5159 = vmatprep.subr.mxu0 0.0
        %v5160 = vand.u32 %v4609, 4294901760
        %v5161 = vsub.f32 %v4609, %v5160
        %5162 = vmatpush1.msra.mxu0 %v5161
        %5163 = vmatprep.subr.mxu0 0.0
        %5164 = vmatpush1.msra.mxu0 0.0
        %5165 = vmatprep.subr.mxu0 0.0
        %5166 = vmatpush1.msra.mxu0 0.0
        %5167 = vmatprep.subr.mxu0 0.0
        %5168 = vmatpush1.msra.mxu0 0.0
        %5169 = vmatprep.subr.mxu0 0.0
        %5170 = vmatpush1.msra.mxu0 0.0
        %5171 = vmatprep.subr.mxu0 0.0
        %5172 = vmatpush1.msra.mxu0 0.0
        %5173 = vmatprep.subr.mxu0 0.0
        %5174 = vmatpush1.msra.mxu0 0.0
        %5175 = vmatprep.subr.mxu0 0.0
        %5176 = vmatpush1.msra.mxu0 0.0
        %5177 = vmatprep.subr.mxu0 0.0
        %5178 = vmatpush1.msra.mxu0 0.0
        %5179 = vmatprep.subr.mxu0 0.0
        %5180 = vmatpush1.msra.mxu0 0.0
        %5181 = vmatprep.subr.mxu0 0.0
        %5182 = vmatpush1.msra.mxu0 0.0
        %5183 = vmatprep.subr.mxu0 0.0
        %5184 = vmatpush1.msra.mxu0 0.0
        %5185 = vmatprep.subr.mxu0 0.0
        %5186 = vmatpush1.msra.mxu0 0.0
        %5187 = vmatprep.subr.mxu0 0.0
        %5188 = vmatpush1.msra.mxu0 0.0
        %5189 = vmatprep.subr.mxu0 0.0
        %5190 = vmatpush1.msra.mxu0 0.0
        %5191 = vmatprep.subr.mxu0 0.0
        %5192 = vmatpush1.msra.mxu0 0.0
        %5193 = vmatprep.subr.mxu0 0.0
        %5194 = vmatpush1.msra.mxu0 0.0
        %5195 = vmatprep.mubr.f32.mxu0 0.0
        %v5196 = vand.u32 %v4578, 4294901760
        %v5197 = vsub.f32 %v4578, %v5196
        %5198 = vmatmul.mubr.f32.gmra.mrb[0].mxu0 %v5197
        %v5199 = vpop.f32.mrb[0].mxu0
        %v5200 = vadd.f32 %v5006, %v5199
        %v5201 = vpop.f32.mrb[0].mxu0
        %5202 = vmatprep.mubr.f32.mxu0 0.0
        %v5203 = vand.u32 %v4579, 4294901760
        %v5204 = vsub.f32 %v4579, %v5203
        %5205 = vmatmul.mubr.f32.gmra.mrb[0].mxu0 %v5204
        %v5206 = vpop.f32.mrb[0].mxu0
        %v5207 = vadd.f32 %v5012, %v5206
        %v5208 = vpop.f32.mrb[0].mxu0
        %5209 = vmatprep.mubr.f32.mxu0 0.0
        %v5210 = vand.u32 %v4580, 4294901760
        %v5211 = vsub.f32 %v4580, %v5210
        %5212 = vmatmul.mubr.f32.gmra.mrb[0].mxu0 %v5211
        %v5213 = vpop.f32.mrb[0].mxu0
        %v5214 = vadd.f32 %v5018, %v5213
        %v5215 = vpop.f32.mrb[0].mxu0
        %5216 = vmatprep.mubr.f32.mxu0 0.0
        %v5217 = vand.u32 %v4581, 4294901760
        %v5218 = vsub.f32 %v4581, %v5217
        %5219 = vmatmul.mubr.f32.gmra.mrb[0].mxu0 %v5218
        %v5220 = vpop.f32.mrb[0].mxu0
        %v5221 = vadd.f32 %v5024, %v5220
        %v5222 = vpop.f32.mrb[0].mxu0
        %5223 = vmatprep.mubr.f32.mxu0 0.0
        %v5224 = vand.u32 %v4582, 4294901760
        %v5225 = vsub.f32 %v4582, %v5224
        %5226 = vmatmul.mubr.f32.gmra.mrb[0].mxu0 %v5225
        %v5227 = vpop.f32.mrb[0].mxu0
        %v5228 = vadd.f32 %v5030, %v5227
        %v5229 = vpop.f32.mrb[0].mxu0
        %5230 = vmatprep.mubr.f32.mxu0 0.0
        %v5231 = vand.u32 %v4583, 4294901760
        %v5232 = vsub.f32 %v4583, %v5231
        %5233 = vmatmul.mubr.f32.gmra.mrb[0].mxu0 %v5232
        %v5234 = vpop.f32.mrb[0].mxu0
        %v5235 = vadd.f32 %v5036, %v5234
        %v5236 = vpop.f32.mrb[0].mxu0
        %5237 = vmatprep.mubr.f32.mxu0 0.0
        %v5238 = vand.u32 %v4584, 4294901760
        %v5239 = vsub.f32 %v4584, %v5238
        %5240 = vmatmul.mubr.f32.gmra.mrb[0].mxu0 %v5239
        %v5241 = vpop.f32.mrb[0].mxu0
        %v5242 = vadd.f32 %v5042, %v5241
        %v5243 = vpop.f32.mrb[0].mxu0
        %5244 = vmatprep.mubr.f32.mxu0 0.0
        %v5245 = vand.u32 %v4585, 4294901760
        %v5246 = vsub.f32 %v4585, %v5245
        %5247 = vmatmul.mubr.f32.gmra.mrb[0].mxu0 %v5246
        %v5248 = vpop.f32.mrb[0].mxu0
        %v5249 = vadd.f32 %v5048, %v5248
        %v5250 = vpop.f32.mrb[0].mxu0
        %5251 = vmatprep.mubr.f32.mxu0 0.0
        %v5252 = vand.u32 %v4586, 4294901760
        %v5253 = vsub.f32 %v4586, %v5252
        %5254 = vmatmul.mubr.f32.gmra.mrb[0].mxu0 %v5253
        %v5255 = vpop.f32.mrb[0].mxu0
        %v5256 = vadd.f32 %v5054, %v5255
        %v5257 = vpop.f32.mrb[0].mxu0
        %5258 = vmatprep.mubr.f32.mxu0 0.0
        %v5259 = vand.u32 %v4587, 4294901760
        %v5260 = vsub.f32 %v4587, %v5259
        %5261 = vmatmul.mubr.f32.gmra.mrb[0].mxu0 %v5260
        %v5262 = vpop.f32.mrb[0].mxu0
        %v5263 = vadd.f32 %v5060, %v5262
        %v5264 = vpop.f32.mrb[0].mxu0
        %5265 = vmatprep.mubr.f32.mxu0 0.0
        %v5266 = vand.u32 %v4588, 4294901760
        %v5267 = vsub.f32 %v4588, %v5266
        %5268 = vmatmul.mubr.f32.gmra.mrb[0].mxu0 %v5267
        %v5269 = vpop.f32.mrb[0].mxu0
        %v5270 = vadd.f32 %v5066, %v5269
        %v5271 = vpop.f32.mrb[0].mxu0
        %5272 = vmatprep.mubr.f32.mxu0 0.0
        %v5273 = vand.u32 %v4589, 4294901760
        %v5274 = vsub.f32 %v4589, %v5273
        %5275 = vmatmul.mubr.f32.gmra.mrb[0].mxu0 %v5274
        %v5276 = vpop.f32.mrb[0].mxu0
        %v5277 = vadd.f32 %v5072, %v5276
        %v5278 = vpop.f32.mrb[0].mxu0
        %5279 = vmatprep.mubr.f32.mxu0 0.0
        %v5280 = vand.u32 %v4590, 4294901760
        %v5281 = vsub.f32 %v4590, %v5280
        %5282 = vmatmul.mubr.f32.gmra.mrb[0].mxu0 %v5281
        %v5283 = vpop.f32.mrb[0].mxu0
        %v5284 = vadd.f32 %v5078, %v5283
        %v5285 = vpop.f32.mrb[0].mxu0
        %5286 = vmatprep.mubr.f32.mxu0 0.0
        %v5287 = vand.u32 %v4591, 4294901760
        %v5288 = vsub.f32 %v4591, %v5287
        %5289 = vmatmul.mubr.f32.gmra.mrb[0].mxu0 %v5288
        %v5290 = vpop.f32.mrb[0].mxu0
        %v5291 = vadd.f32 %v5084, %v5290
        %v5292 = vpop.f32.mrb[0].mxu0
        %5293 = vmatprep.mubr.f32.mxu0 0.0
        %v5294 = vand.u32 %v4592, 4294901760
        %v5295 = vsub.f32 %v4592, %v5294
        %5296 = vmatmul.mubr.f32.gmra.mrb[0].mxu0 %v5295
        %v5297 = vpop.f32.mrb[0].mxu0
        %v5298 = vadd.f32 %v5090, %v5297
        %v5299 = vpop.f32.mrb[0].mxu0
        %5300 = vmatprep.mubr.f32.mxu0 0.0
        %v5301 = vand.u32 %v4593, 4294901760
        %v5302 = vsub.f32 %v4593, %v5301
        %5303 = vmatmul.mubr.f32.gmra.mrb[0].mxu0 %v5302
        %v5304 = vpop.f32.mrb[0].mxu0
        %v5305 = vadd.f32 %v5096, %v5304
        %v5306 = vpop.f32.mrb[0].mxu0
        %5307 = vdwg.mxu0
        %5308 = vmatprep.subr.mxu0 0.0
        %v5309 = vand.u32 %v4594, 4294901760
        %5310 = vmatpush1.msra.mxu0 %v5309
        %5311 = vmatprep.subr.mxu0 0.0
        %v5312 = vand.u32 %v4595, 4294901760
        %5313 = vmatpush1.msra.mxu0 %v5312
        %5314 = vmatprep.subr.mxu0 0.0
        %v5315 = vand.u32 %v4596, 4294901760
        %5316 = vmatpush1.msra.mxu0 %v5315
        %5317 = vmatprep.subr.mxu0 0.0
        %v5318 = vand.u32 %v4597, 4294901760
        %5319 = vmatpush1.msra.mxu0 %v5318
        %5320 = vmatprep.subr.mxu0 0.0
        %v5321 = vand.u32 %v4598, 4294901760
        %5322 = vmatpush1.msra.mxu0 %v5321
        %5323 = vmatprep.subr.mxu0 0.0
        %v5324 = vand.u32 %v4599, 4294901760
        %5325 = vmatpush1.msra.mxu0 %v5324
        %5326 = vmatprep.subr.mxu0 0.0
        %v5327 = vand.u32 %v4600, 4294901760
        %5328 = vmatpush1.msra.mxu0 %v5327
        %5329 = vmatprep.subr.mxu0 0.0
        %v5330 = vand.u32 %v4601, 4294901760
        %5331 = vmatpush1.msra.mxu0 %v5330
        %5332 = vmatprep.subr.mxu0 0.0
        %v5333 = vand.u32 %v4602, 4294901760
        %5334 = vmatpush1.msra.mxu0 %v5333
        %5335 = vmatprep.subr.mxu0 0.0
        %v5336 = vand.u32 %v4603, 4294901760
        %5337 = vmatpush1.msra.mxu0 %v5336
        %5338 = vmatprep.subr.mxu0 0.0
        %v5339 = vand.u32 %v4604, 4294901760
        %5340 = vmatpush1.msra.mxu0 %v5339
        %5341 = vmatprep.subr.mxu0 0.0
        %v5342 = vand.u32 %v4605, 4294901760
        %5343 = vmatpush1.msra.mxu0 %v5342
        %5344 = vmatprep.subr.mxu0 0.0
        %v5345 = vand.u32 %v4606, 4294901760
        %5346 = vmatpush1.msra.mxu0 %v5345
        %5347 = vmatprep.subr.mxu0 0.0
        %v5348 = vand.u32 %v4607, 4294901760
        %5349 = vmatpush1.msra.mxu0 %v5348
        %5350 = vmatprep.subr.mxu0 0.0
        %v5351 = vand.u32 %v4608, 4294901760
        %5352 = vmatpush1.msra.mxu0 %v5351
        %5353 = vmatprep.subr.mxu0 0.0
        %v5354 = vand.u32 %v4609, 4294901760
        %5355 = vmatpush1.msra.mxu0 %v5354
        %5356 = vmatprep.subr.mxu0 0.0
        %5357 = vmatpush1.msra.mxu0 0.0
        %5358 = vmatprep.subr.mxu0 0.0
        %5359 = vmatpush1.msra.mxu0 0.0
        %5360 = vmatprep.subr.mxu0 0.0
        %5361 = vmatpush1.msra.mxu0 0.0
        %5362 = vmatprep.subr.mxu0 0.0
        %5363 = vmatpush1.msra.mxu0 0.0
        %5364 = vmatprep.subr.mxu0 0.0
        %5365 = vmatpush1.msra.mxu0 0.0
        %5366 = vmatprep.subr.mxu0 0.0
        %5367 = vmatpush1.msra.mxu0 0.0
        %5368 = vmatprep.subr.mxu0 0.0
        %5369 = vmatpush1.msra.mxu0 0.0
        %5370 = vmatprep.subr.mxu0 0.0
        %5371 = vmatpush1.msra.mxu0 0.0
        %5372 = vmatprep.subr.mxu0 0.0
        %5373 = vmatpush1.msra.mxu0 0.0
        %5374 = vmatprep.subr.mxu0 0.0
        %5375 = vmatpush1.msra.mxu0 0.0
        %5376 = vmatprep.subr.mxu0 0.0
        %5377 = vmatpush1.msra.mxu0 0.0
        %5378 = vmatprep.subr.mxu0 0.0
        %5379 = vmatpush1.msra.mxu0 0.0
        %5380 = vmatprep.subr.mxu0 0.0
        %5381 = vmatpush1.msra.mxu0 0.0
        %5382 = vmatprep.subr.mxu0 0.0
        %5383 = vmatpush1.msra.mxu0 0.0
        %5384 = vmatprep.subr.mxu0 0.0
        %5385 = vmatpush1.msra.mxu0 0.0
        %5386 = vmatprep.subr.mxu0 0.0
        %5387 = vmatpush1.msra.mxu0 0.0
        %5388 = vmatprep.mubr.f32.mxu0 0.0
        %v5389 = vand.u32 %v4578, 4294901760
        %v5390 = vsub.f32 %v4578, %v5389
        %v5391 = vand.u32 %v5390, 4294901760
        %5392 = vmatmul.mubr.f32.gmra.mrb[0].mxu0 %v5391
        %v5393 = vpop.f32.mrb[0].mxu0
        %v5394 = vadd.f32 %v5200, %v5393
        %v5395 = vpop.f32.mrb[0].mxu0
        %5396 = vmatprep.mubr.f32.mxu0 0.0
        %v5397 = vand.u32 %v4579, 4294901760
        %v5398 = vsub.f32 %v4579, %v5397
        %v5399 = vand.u32 %v5398, 4294901760
        %5400 = vmatmul.mubr.f32.gmra.mrb[0].mxu0 %v5399
        %v5401 = vpop.f32.mrb[0].mxu0
        %v5402 = vadd.f32 %v5207, %v5401
        %v5403 = vpop.f32.mrb[0].mxu0
        %5404 = vmatprep.mubr.f32.mxu0 0.0
        %v5405 = vand.u32 %v4580, 4294901760
        %v5406 = vsub.f32 %v4580, %v5405
        %v5407 = vand.u32 %v5406, 4294901760
        %5408 = vmatmul.mubr.f32.gmra.mrb[0].mxu0 %v5407
        %v5409 = vpop.f32.mrb[0].mxu0
        %v5410 = vadd.f32 %v5214, %v5409
        %v5411 = vpop.f32.mrb[0].mxu0
        %5412 = vmatprep.mubr.f32.mxu0 0.0
        %v5413 = vand.u32 %v4581, 4294901760
        %v5414 = vsub.f32 %v4581, %v5413
        %v5415 = vand.u32 %v5414, 4294901760
        %5416 = vmatmul.mubr.f32.gmra.mrb[0].mxu0 %v5415
        %v5417 = vpop.f32.mrb[0].mxu0
        %v5418 = vadd.f32 %v5221, %v5417
        %v5419 = vpop.f32.mrb[0].mxu0
        %5420 = vmatprep.mubr.f32.mxu0 0.0
        %v5421 = vand.u32 %v4582, 4294901760
        %v5422 = vsub.f32 %v4582, %v5421
        %v5423 = vand.u32 %v5422, 4294901760
        %5424 = vmatmul.mubr.f32.gmra.mrb[0].mxu0 %v5423
        %v5425 = vpop.f32.mrb[0].mxu0
        %v5426 = vadd.f32 %v5228, %v5425
        %v5427 = vpop.f32.mrb[0].mxu0
        %5428 = vmatprep.mubr.f32.mxu0 0.0
        %v5429 = vand.u32 %v4583, 4294901760
        %v5430 = vsub.f32 %v4583, %v5429
        %v5431 = vand.u32 %v5430, 4294901760
        %5432 = vmatmul.mubr.f32.gmra.mrb[0].mxu0 %v5431
        %v5433 = vpop.f32.mrb[0].mxu0
        %v5434 = vadd.f32 %v5235, %v5433
        %v5435 = vpop.f32.mrb[0].mxu0
        %5436 = vmatprep.mubr.f32.mxu0 0.0
        %v5437 = vand.u32 %v4584, 4294901760
        %v5438 = vsub.f32 %v4584, %v5437
        %v5439 = vand.u32 %v5438, 4294901760
        %5440 = vmatmul.mubr.f32.gmra.mrb[0].mxu0 %v5439
        %v5441 = vpop.f32.mrb[0].mxu0
        %v5442 = vadd.f32 %v5242, %v5441
        %v5443 = vpop.f32.mrb[0].mxu0
        %5444 = vmatprep.mubr.f32.mxu0 0.0
        %v5445 = vand.u32 %v4585, 4294901760
        %v5446 = vsub.f32 %v4585, %v5445
        %v5447 = vand.u32 %v5446, 4294901760
        %5448 = vmatmul.mubr.f32.gmra.mrb[0].mxu0 %v5447
        %v5449 = vpop.f32.mrb[0].mxu0
        %v5450 = vadd.f32 %v5249, %v5449
        %v5451 = vpop.f32.mrb[0].mxu0
        %5452 = vmatprep.mubr.f32.mxu0 0.0
        %v5453 = vand.u32 %v4586, 4294901760
        %v5454 = vsub.f32 %v4586, %v5453
        %v5455 = vand.u32 %v5454, 4294901760
        %5456 = vmatmul.mubr.f32.gmra.mrb[0].mxu0 %v5455
        %v5457 = vpop.f32.mrb[0].mxu0
        %v5458 = vadd.f32 %v5256, %v5457
        %v5459 = vpop.f32.mrb[0].mxu0
        %5460 = vmatprep.mubr.f32.mxu0 0.0
        %v5461 = vand.u32 %v4587, 4294901760
        %v5462 = vsub.f32 %v4587, %v5461
        %v5463 = vand.u32 %v5462, 4294901760
        %5464 = vmatmul.mubr.f32.gmra.mrb[0].mxu0 %v5463
        %v5465 = vpop.f32.mrb[0].mxu0
        %v5466 = vadd.f32 %v5263, %v5465
        %v5467 = vpop.f32.mrb[0].mxu0
        %5468 = vmatprep.mubr.f32.mxu0 0.0
        %v5469 = vand.u32 %v4588, 4294901760
        %v5470 = vsub.f32 %v4588, %v5469
        %v5471 = vand.u32 %v5470, 4294901760
        %5472 = vmatmul.mubr.f32.gmra.mrb[0].mxu0 %v5471
        %v5473 = vpop.f32.mrb[0].mxu0
        %v5474 = vadd.f32 %v5270, %v5473
        %v5475 = vpop.f32.mrb[0].mxu0
        %5476 = vmatprep.mubr.f32.mxu0 0.0
        %v5477 = vand.u32 %v4589, 4294901760
        %v5478 = vsub.f32 %v4589, %v5477
        %v5479 = vand.u32 %v5478, 4294901760
        %5480 = vmatmul.mubr.f32.gmra.mrb[0].mxu0 %v5479
        %v5481 = vpop.f32.mrb[0].mxu0
        %v5482 = vadd.f32 %v5277, %v5481
        %v5483 = vpop.f32.mrb[0].mxu0
        %5484 = vmatprep.mubr.f32.mxu0 0.0
        %v5485 = vand.u32 %v4590, 4294901760
        %v5486 = vsub.f32 %v4590, %v5485
        %v5487 = vand.u32 %v5486, 4294901760
        %5488 = vmatmul.mubr.f32.gmra.mrb[0].mxu0 %v5487
        %v5489 = vpop.f32.mrb[0].mxu0
        %v5490 = vadd.f32 %v5284, %v5489
        %v5491 = vpop.f32.mrb[0].mxu0
        %5492 = vmatprep.mubr.f32.mxu0 0.0
        %v5493 = vand.u32 %v4591, 4294901760
        %v5494 = vsub.f32 %v4591, %v5493
        %v5495 = vand.u32 %v5494, 4294901760
        %5496 = vmatmul.mubr.f32.gmra.mrb[0].mxu0 %v5495
        %v5497 = vpop.f32.mrb[0].mxu0
        %v5498 = vadd.f32 %v5291, %v5497
        %v5499 = vpop.f32.mrb[0].mxu0
        %5500 = vmatprep.mubr.f32.mxu0 0.0
        %v5501 = vand.u32 %v4592, 4294901760
        %v5502 = vsub.f32 %v4592, %v5501
        %v5503 = vand.u32 %v5502, 4294901760
        %5504 = vmatmul.mubr.f32.gmra.mrb[0].mxu0 %v5503
        %v5505 = vpop.f32.mrb[0].mxu0
        %v5506 = vadd.f32 %v5298, %v5505
        %v5507 = vpop.f32.mrb[0].mxu0
        %5508 = vmatprep.mubr.f32.mxu0 0.0
        %v5509 = vand.u32 %v4593, 4294901760
        %v5510 = vsub.f32 %v4593, %v5509
        %v5511 = vand.u32 %v5510, 4294901760
        %5512 = vmatmul.mubr.f32.gmra.mrb[0].mxu0 %v5511
        %v5513 = vpop.f32.mrb[0].mxu0
        %v5514 = vadd.f32 %v5305, %v5513
        %v5515 = vpop.f32.mrb[0].mxu0
        %5516 = vdwg.mxu0
        %5517 = vmatprep.subr.mxu0 0.0
        %v5518 = vand.u32 %v4594, 4294901760
        %v5519 = vsub.f32 %v4594, %v5518
        %v5520 = vand.u32 %v5519, 4294901760
        %5521 = vmatpush1.msra.mxu0 %v5520
        %5522 = vmatprep.subr.mxu0 0.0
        %v5523 = vand.u32 %v4595, 4294901760
        %v5524 = vsub.f32 %v4595, %v5523
        %v5525 = vand.u32 %v5524, 4294901760
        %5526 = vmatpush1.msra.mxu0 %v5525
        %5527 = vmatprep.subr.mxu0 0.0
        %v5528 = vand.u32 %v4596, 4294901760
        %v5529 = vsub.f32 %v4596, %v5528
        %v5530 = vand.u32 %v5529, 4294901760
        %5531 = vmatpush1.msra.mxu0 %v5530
        %5532 = vmatprep.subr.mxu0 0.0
        %v5533 = vand.u32 %v4597, 4294901760
        %v5534 = vsub.f32 %v4597, %v5533
        %v5535 = vand.u32 %v5534, 4294901760
        %5536 = vmatpush1.msra.mxu0 %v5535
        %5537 = vmatprep.subr.mxu0 0.0
        %v5538 = vand.u32 %v4598, 4294901760
        %v5539 = vsub.f32 %v4598, %v5538
        %v5540 = vand.u32 %v5539, 4294901760
        %5541 = vmatpush1.msra.mxu0 %v5540
        %5542 = vmatprep.subr.mxu0 0.0
        %v5543 = vand.u32 %v4599, 4294901760
        %v5544 = vsub.f32 %v4599, %v5543
        %v5545 = vand.u32 %v5544, 4294901760
        %5546 = vmatpush1.msra.mxu0 %v5545
        %5547 = vmatprep.subr.mxu0 0.0
        %v5548 = vand.u32 %v4600, 4294901760
        %v5549 = vsub.f32 %v4600, %v5548
        %v5550 = vand.u32 %v5549, 4294901760
        %5551 = vmatpush1.msra.mxu0 %v5550
        %5552 = vmatprep.subr.mxu0 0.0
        %v5553 = vand.u32 %v4601, 4294901760
        %v5554 = vsub.f32 %v4601, %v5553
        %v5555 = vand.u32 %v5554, 4294901760
        %5556 = vmatpush1.msra.mxu0 %v5555
        %5557 = vmatprep.subr.mxu0 0.0
        %v5558 = vand.u32 %v4602, 4294901760
        %v5559 = vsub.f32 %v4602, %v5558
        %v5560 = vand.u32 %v5559, 4294901760
        %5561 = vmatpush1.msra.mxu0 %v5560
        %5562 = vmatprep.subr.mxu0 0.0
        %v5563 = vand.u32 %v4603, 4294901760
        %v5564 = vsub.f32 %v4603, %v5563
        %v5565 = vand.u32 %v5564, 4294901760
        %5566 = vmatpush1.msra.mxu0 %v5565
        %5567 = vmatprep.subr.mxu0 0.0
        %v5568 = vand.u32 %v4604, 4294901760
        %v5569 = vsub.f32 %v4604, %v5568
        %v5570 = vand.u32 %v5569, 4294901760
        %5571 = vmatpush1.msra.mxu0 %v5570
        %5572 = vmatprep.subr.mxu0 0.0
        %v5573 = vand.u32 %v4605, 4294901760
        %v5574 = vsub.f32 %v4605, %v5573
        %v5575 = vand.u32 %v5574, 4294901760
        %5576 = vmatpush1.msra.mxu0 %v5575
        %5577 = vmatprep.subr.mxu0 0.0
        %v5578 = vand.u32 %v4606, 4294901760
        %v5579 = vsub.f32 %v4606, %v5578
        %v5580 = vand.u32 %v5579, 4294901760
        %5581 = vmatpush1.msra.mxu0 %v5580
        %5582 = vmatprep.subr.mxu0 0.0
        %v5583 = vand.u32 %v4607, 4294901760
        %v5584 = vsub.f32 %v4607, %v5583
        %v5585 = vand.u32 %v5584, 4294901760
        %5586 = vmatpush1.msra.mxu0 %v5585
        %5587 = vmatprep.subr.mxu0 0.0
        %v5588 = vand.u32 %v4608, 4294901760
        %v5589 = vsub.f32 %v4608, %v5588
        %v5590 = vand.u32 %v5589, 4294901760
        %5591 = vmatpush1.msra.mxu0 %v5590
        %5592 = vmatprep.subr.mxu0 0.0
        %v5593 = vand.u32 %v4609, 4294901760
        %v5594 = vsub.f32 %v4609, %v5593
        %v5595 = vand.u32 %v5594, 4294901760
        %5596 = vmatpush1.msra.mxu0 %v5595
        %5597 = vmatprep.subr.mxu0 0.0
        %5598 = vmatpush1.msra.mxu0 0.0
        %5599 = vmatprep.subr.mxu0 0.0
        %5600 = vmatpush1.msra.mxu0 0.0
        %5601 = vmatprep.subr.mxu0 0.0
        %5602 = vmatpush1.msra.mxu0 0.0
        %5603 = vmatprep.subr.mxu0 0.0
        %5604 = vmatpush1.msra.mxu0 0.0
        %5605 = vmatprep.subr.mxu0 0.0
        %5606 = vmatpush1.msra.mxu0 0.0
        %5607 = vmatprep.subr.mxu0 0.0
        %5608 = vmatpush1.msra.mxu0 0.0
        %5609 = vmatprep.subr.mxu0 0.0
        %5610 = vmatpush1.msra.mxu0 0.0
        %5611 = vmatprep.subr.mxu0 0.0
        %5612 = vmatpush1.msra.mxu0 0.0
        %5613 = vmatprep.subr.mxu0 0.0
        %5614 = vmatpush1.msra.mxu0 0.0
        %5615 = vmatprep.subr.mxu0 0.0
        %5616 = vmatpush1.msra.mxu0 0.0
        %5617 = vmatprep.subr.mxu0 0.0
        %5618 = vmatpush1.msra.mxu0 0.0
        %5619 = vmatprep.subr.mxu0 0.0
        %5620 = vmatpush1.msra.mxu0 0.0
        %5621 = vmatprep.subr.mxu0 0.0
        %5622 = vmatpush1.msra.mxu0 0.0
        %5623 = vmatprep.subr.mxu0 0.0
        %5624 = vmatpush1.msra.mxu0 0.0
        %5625 = vmatprep.subr.mxu0 0.0
        %5626 = vmatpush1.msra.mxu0 0.0
        %5627 = vmatprep.subr.mxu0 0.0
        %5628 = vmatpush1.msra.mxu0 0.0
        %5629 = vmatprep.mubr.f32.mxu0 0.0
        %v5630 = vand.u32 %v4578, 4294901760
        %5631 = vmatmul.mubr.f32.gmra.mrb[0].mxu0 %v5630
        %v5632 = vpop.f32.mrb[0].mxu0
        %v5633 = vadd.f32 %v5394, %v5632
        %v5634 = vpop.f32.mrb[0].mxu0
        %5635 = vmatprep.mubr.f32.mxu0 0.0
        %v5636 = vand.u32 %v4579, 4294901760
        %5637 = vmatmul.mubr.f32.gmra.mrb[0].mxu0 %v5636
        %v5638 = vpop.f32.mrb[0].mxu0
        %v5639 = vadd.f32 %v5402, %v5638
        %v5640 = vpop.f32.mrb[0].mxu0
        %5641 = vmatprep.mubr.f32.mxu0 0.0
        %v5642 = vand.u32 %v4580, 4294901760
        %5643 = vmatmul.mubr.f32.gmra.mrb[0].mxu0 %v5642
        %v5644 = vpop.f32.mrb[0].mxu0
        %v5645 = vadd.f32 %v5410, %v5644
        %v5646 = vpop.f32.mrb[0].mxu0
        %5647 = vmatprep.mubr.f32.mxu0 0.0
        %v5648 = vand.u32 %v4581, 4294901760
        %5649 = vmatmul.mubr.f32.gmra.mrb[0].mxu0 %v5648
        %v5650 = vpop.f32.mrb[0].mxu0
        %v5651 = vadd.f32 %v5418, %v5650
        %v5652 = vpop.f32.mrb[0].mxu0
        %5653 = vmatprep.mubr.f32.mxu0 0.0
        %v5654 = vand.u32 %v4582, 4294901760
        %5655 = vmatmul.mubr.f32.gmra.mrb[0].mxu0 %v5654
        %v5656 = vpop.f32.mrb[0].mxu0
        %v5657 = vadd.f32 %v5426, %v5656
        %v5658 = vpop.f32.mrb[0].mxu0
        %5659 = vmatprep.mubr.f32.mxu0 0.0
        %v5660 = vand.u32 %v4583, 4294901760
        %5661 = vmatmul.mubr.f32.gmra.mrb[0].mxu0 %v5660
        %v5662 = vpop.f32.mrb[0].mxu0
        %v5663 = vadd.f32 %v5434, %v5662
        %v5664 = vpop.f32.mrb[0].mxu0
        %5665 = vmatprep.mubr.f32.mxu0 0.0
        %v5666 = vand.u32 %v4584, 4294901760
        %5667 = vmatmul.mubr.f32.gmra.mrb[0].mxu0 %v5666
        %v5668 = vpop.f32.mrb[0].mxu0
        %v5669 = vadd.f32 %v5442, %v5668
        %v5670 = vpop.f32.mrb[0].mxu0
        %5671 = vmatprep.mubr.f32.mxu0 0.0
        %v5672 = vand.u32 %v4585, 4294901760
        %5673 = vmatmul.mubr.f32.gmra.mrb[0].mxu0 %v5672
        %v5674 = vpop.f32.mrb[0].mxu0
        %v5675 = vadd.f32 %v5450, %v5674
        %v5676 = vpop.f32.mrb[0].mxu0
        %5677 = vmatprep.mubr.f32.mxu0 0.0
        %v5678 = vand.u32 %v4586, 4294901760
        %5679 = vmatmul.mubr.f32.gmra.mrb[0].mxu0 %v5678
        %v5680 = vpop.f32.mrb[0].mxu0
        %v5681 = vadd.f32 %v5458, %v5680
        %v5682 = vpop.f32.mrb[0].mxu0
        %5683 = vmatprep.mubr.f32.mxu0 0.0
        %v5684 = vand.u32 %v4587, 4294901760
        %5685 = vmatmul.mubr.f32.gmra.mrb[0].mxu0 %v5684
        %v5686 = vpop.f32.mrb[0].mxu0
        %v5687 = vadd.f32 %v5466, %v5686
        %v5688 = vpop.f32.mrb[0].mxu0
        %5689 = vmatprep.mubr.f32.mxu0 0.0
        %v5690 = vand.u32 %v4588, 4294901760
        %5691 = vmatmul.mubr.f32.gmra.mrb[0].mxu0 %v5690
        %v5692 = vpop.f32.mrb[0].mxu0
        %v5693 = vadd.f32 %v5474, %v5692
        %v5694 = vpop.f32.mrb[0].mxu0
        %5695 = vmatprep.mubr.f32.mxu0 0.0
        %v5696 = vand.u32 %v4589, 4294901760
        %5697 = vmatmul.mubr.f32.gmra.mrb[0].mxu0 %v5696
        %v5698 = vpop.f32.mrb[0].mxu0
        %v5699 = vadd.f32 %v5482, %v5698
        %v5700 = vpop.f32.mrb[0].mxu0
        %5701 = vmatprep.mubr.f32.mxu0 0.0
        %v5702 = vand.u32 %v4590, 4294901760
        %5703 = vmatmul.mubr.f32.gmra.mrb[0].mxu0 %v5702
        %v5704 = vpop.f32.mrb[0].mxu0
        %v5705 = vadd.f32 %v5490, %v5704
        %v5706 = vpop.f32.mrb[0].mxu0
        %5707 = vmatprep.mubr.f32.mxu0 0.0
        %v5708 = vand.u32 %v4591, 4294901760
        %5709 = vmatmul.mubr.f32.gmra.mrb[0].mxu0 %v5708
        %v5710 = vpop.f32.mrb[0].mxu0
        %v5711 = vadd.f32 %v5498, %v5710
        %v5712 = vpop.f32.mrb[0].mxu0
        %5713 = vmatprep.mubr.f32.mxu0 0.0
        %v5714 = vand.u32 %v4592, 4294901760
        %5715 = vmatmul.mubr.f32.gmra.mrb[0].mxu0 %v5714
        %v5716 = vpop.f32.mrb[0].mxu0
        %v5717 = vadd.f32 %v5506, %v5716
        %v5718 = vpop.f32.mrb[0].mxu0
        %5719 = vmatprep.mubr.f32.mxu0 0.0
        %v5720 = vand.u32 %v4593, 4294901760
        %5721 = vmatmul.mubr.f32.gmra.mrb[0].mxu0 %v5720
        %v5722 = vpop.f32.mrb[0].mxu0
        %v5723 = vadd.f32 %v5514, %v5722
        %v5724 = vpop.f32.mrb[0].mxu0
        %5725 = vdwg.mxu0
        %5726 = vmatprep.subr.mxu0 0.0
        %v5727 = vand.u32 %v4594, 4294901760
        %5728 = vmatpush1.msra.mxu0 %v5727
        %5729 = vmatprep.subr.mxu0 0.0
        %v5730 = vand.u32 %v4595, 4294901760
        %5731 = vmatpush1.msra.mxu0 %v5730
        %5732 = vmatprep.subr.mxu0 0.0
        %v5733 = vand.u32 %v4596, 4294901760
        %5734 = vmatpush1.msra.mxu0 %v5733
        %5735 = vmatprep.subr.mxu0 0.0
        %v5736 = vand.u32 %v4597, 4294901760
        %5737 = vmatpush1.msra.mxu0 %v5736
        %5738 = vmatprep.subr.mxu0 0.0
        %v5739 = vand.u32 %v4598, 4294901760
        %5740 = vmatpush1.msra.mxu0 %v5739
        %5741 = vmatprep.subr.mxu0 0.0
        %v5742 = vand.u32 %v4599, 4294901760
        %5743 = vmatpush1.msra.mxu0 %v5742
        %5744 = vmatprep.subr.mxu0 0.0
        %v5745 = vand.u32 %v4600, 4294901760
        %5746 = vmatpush1.msra.mxu0 %v5745
        %5747 = vmatprep.subr.mxu0 0.0
        %v5748 = vand.u32 %v4601, 4294901760
        %5749 = vmatpush1.msra.mxu0 %v5748
        %5750 = vmatprep.subr.mxu0 0.0
        %v5751 = vand.u32 %v4602, 4294901760
        %5752 = vmatpush1.msra.mxu0 %v5751
        %5753 = vmatprep.subr.mxu0 0.0
        %v5754 = vand.u32 %v4603, 4294901760
        %5755 = vmatpush1.msra.mxu0 %v5754
        %5756 = vmatprep.subr.mxu0 0.0
        %v5757 = vand.u32 %v4604, 4294901760
        %5758 = vmatpush1.msra.mxu0 %v5757
        %5759 = vmatprep.subr.mxu0 0.0
        %v5760 = vand.u32 %v4605, 4294901760
        %5761 = vmatpush1.msra.mxu0 %v5760
        %5762 = vmatprep.subr.mxu0 0.0
        %v5763 = vand.u32 %v4606, 4294901760
        %5764 = vmatpush1.msra.mxu0 %v5763
        %5765 = vmatprep.subr.mxu0 0.0
        %v5766 = vand.u32 %v4607, 4294901760
        %5767 = vmatpush1.msra.mxu0 %v5766
        %5768 = vmatprep.subr.mxu0 0.0
        %v5769 = vand.u32 %v4608, 4294901760
        %5770 = vmatpush1.msra.mxu0 %v5769
        %5771 = vmatprep.subr.mxu0 0.0
        %v5772 = vand.u32 %v4609, 4294901760
        %5773 = vmatpush1.msra.mxu0 %v5772
        %5774 = vmatprep.subr.mxu0 0.0
        %5775 = vmatpush1.msra.mxu0 0.0
        %5776 = vmatprep.subr.mxu0 0.0
        %5777 = vmatpush1.msra.mxu0 0.0
        %5778 = vmatprep.subr.mxu0 0.0
        %5779 = vmatpush1.msra.mxu0 0.0
        %5780 = vmatprep.subr.mxu0 0.0
        %5781 = vmatpush1.msra.mxu0 0.0
        %5782 = vmatprep.subr.mxu0 0.0
        %5783 = vmatpush1.msra.mxu0 0.0
        %5784 = vmatprep.subr.mxu0 0.0
        %5785 = vmatpush1.msra.mxu0 0.0
        %5786 = vmatprep.subr.mxu0 0.0
        %5787 = vmatpush1.msra.mxu0 0.0
        %5788 = vmatprep.subr.mxu0 0.0
        %5789 = vmatpush1.msra.mxu0 0.0
        %5790 = vmatprep.subr.mxu0 0.0
        %5791 = vmatpush1.msra.mxu0 0.0
        %5792 = vmatprep.subr.mxu0 0.0
        %5793 = vmatpush1.msra.mxu0 0.0
        %5794 = vmatprep.subr.mxu0 0.0
        %5795 = vmatpush1.msra.mxu0 0.0
        %5796 = vmatprep.subr.mxu0 0.0
        %5797 = vmatpush1.msra.mxu0 0.0
        %5798 = vmatprep.subr.mxu0 0.0
        %5799 = vmatpush1.msra.mxu0 0.0
        %5800 = vmatprep.subr.mxu0 0.0
        %5801 = vmatpush1.msra.mxu0 0.0
        %5802 = vmatprep.subr.mxu0 0.0
        %5803 = vmatpush1.msra.mxu0 0.0
        %5804 = vmatprep.subr.mxu0 0.0
        %5805 = vmatpush1.msra.mxu0 0.0
        %5806 = vmatprep.mubr.f32.mxu0 0.0
        %v5807 = vand.u32 %v4578, 4294901760
        %5808 = vmatmul.mubr.f32.gmra.mrb[0].mxu0 %v5807
        %v5809 = vpop.f32.mrb[0].mxu0
        %v5810 = vadd.f32 %v5633, %v5809
        %v5811 = vpop.f32.mrb[0].mxu0
        %5812 = vmatprep.mubr.f32.mxu0 0.0
        %v5813 = vand.u32 %v4579, 4294901760
        %5814 = vmatmul.mubr.f32.gmra.mrb[0].mxu0 %v5813
        %v5815 = vpop.f32.mrb[0].mxu0
        %v5816 = vadd.f32 %v5639, %v5815
        %v5817 = vpop.f32.mrb[0].mxu0
        %5818 = vmatprep.mubr.f32.mxu0 0.0
        %v5819 = vand.u32 %v4580, 4294901760
        %5820 = vmatmul.mubr.f32.gmra.mrb[0].mxu0 %v5819
        %v5821 = vpop.f32.mrb[0].mxu0
        %v5822 = vadd.f32 %v5645, %v5821
        %v5823 = vpop.f32.mrb[0].mxu0
        %5824 = vmatprep.mubr.f32.mxu0 0.0
        %v5825 = vand.u32 %v4581, 4294901760
        %5826 = vmatmul.mubr.f32.gmra.mrb[0].mxu0 %v5825
        %v5827 = vpop.f32.mrb[0].mxu0
        %v5828 = vadd.f32 %v5651, %v5827
        %v5829 = vpop.f32.mrb[0].mxu0
        %5830 = vmatprep.mubr.f32.mxu0 0.0
        %v5831 = vand.u32 %v4582, 4294901760
        %5832 = vmatmul.mubr.f32.gmra.mrb[0].mxu0 %v5831
        %v5833 = vpop.f32.mrb[0].mxu0
        %v5834 = vadd.f32 %v5657, %v5833
        %v5835 = vpop.f32.mrb[0].mxu0
        %5836 = vmatprep.mubr.f32.mxu0 0.0
        %v5837 = vand.u32 %v4583, 4294901760
        %5838 = vmatmul.mubr.f32.gmra.mrb[0].mxu0 %v5837
        %v5839 = vpop.f32.mrb[0].mxu0
        %v5840 = vadd.f32 %v5663, %v5839
        %v5841 = vpop.f32.mrb[0].mxu0
        %5842 = vmatprep.mubr.f32.mxu0 0.0
        %v5843 = vand.u32 %v4584, 4294901760
        %5844 = vmatmul.mubr.f32.gmra.mrb[0].mxu0 %v5843
        %v5845 = vpop.f32.mrb[0].mxu0
        %v5846 = vadd.f32 %v5669, %v5845
        %v5847 = vpop.f32.mrb[0].mxu0
        %5848 = vmatprep.mubr.f32.mxu0 0.0
        %v5849 = vand.u32 %v4585, 4294901760
        %5850 = vmatmul.mubr.f32.gmra.mrb[0].mxu0 %v5849
        %v5851 = vpop.f32.mrb[0].mxu0
        %v5852 = vadd.f32 %v5675, %v5851
        %v5853 = vpop.f32.mrb[0].mxu0
        %5854 = vmatprep.mubr.f32.mxu0 0.0
        %v5855 = vand.u32 %v4586, 4294901760
        %5856 = vmatmul.mubr.f32.gmra.mrb[0].mxu0 %v5855
        %v5857 = vpop.f32.mrb[0].mxu0
        %v5858 = vadd.f32 %v5681, %v5857
        %v5859 = vpop.f32.mrb[0].mxu0
        %5860 = vmatprep.mubr.f32.mxu0 0.0
        %v5861 = vand.u32 %v4587, 4294901760
        %5862 = vmatmul.mubr.f32.gmra.mrb[0].mxu0 %v5861
        %v5863 = vpop.f32.mrb[0].mxu0
        %v5864 = vadd.f32 %v5687, %v5863
        %v5865 = vpop.f32.mrb[0].mxu0
        %5866 = vmatprep.mubr.f32.mxu0 0.0
        %v5867 = vand.u32 %v4588, 4294901760
        %5868 = vmatmul.mubr.f32.gmra.mrb[0].mxu0 %v5867
        %v5869 = vpop.f32.mrb[0].mxu0
        %v5870 = vadd.f32 %v5693, %v5869
        %v5871 = vpop.f32.mrb[0].mxu0
        %5872 = vmatprep.mubr.f32.mxu0 0.0
        %v5873 = vand.u32 %v4589, 4294901760
        %5874 = vmatmul.mubr.f32.gmra.mrb[0].mxu0 %v5873
        %v5875 = vpop.f32.mrb[0].mxu0
        %v5876 = vadd.f32 %v5699, %v5875
        %v5877 = vpop.f32.mrb[0].mxu0
        %5878 = vmatprep.mubr.f32.mxu0 0.0
        %v5879 = vand.u32 %v4590, 4294901760
        %5880 = vmatmul.mubr.f32.gmra.mrb[0].mxu0 %v5879
        %v5881 = vpop.f32.mrb[0].mxu0
        %v5882 = vadd.f32 %v5705, %v5881
        %v5883 = vpop.f32.mrb[0].mxu0
        %5884 = vmatprep.mubr.f32.mxu0 0.0
        %v5885 = vand.u32 %v4591, 4294901760
        %5886 = vmatmul.mubr.f32.gmra.mrb[0].mxu0 %v5885
        %v5887 = vpop.f32.mrb[0].mxu0
        %v5888 = vadd.f32 %v5711, %v5887
        %v5889 = vpop.f32.mrb[0].mxu0
        %5890 = vmatprep.mubr.f32.mxu0 0.0
        %v5891 = vand.u32 %v4592, 4294901760
        %5892 = vmatmul.mubr.f32.gmra.mrb[0].mxu0 %v5891
        %v5893 = vpop.f32.mrb[0].mxu0
        %v5894 = vadd.f32 %v5717, %v5893
        %v5895 = vpop.f32.mrb[0].mxu0
        %5896 = vmatprep.mubr.f32.mxu0 0.0
        %v5897 = vand.u32 %v4593, 4294901760
        %5898 = vmatmul.mubr.f32.gmra.mrb[0].mxu0 %v5897
        %v5899 = vpop.f32.mrb[0].mxu0
        %v5900 = vadd.f32 %v5723, %v5899
        %v5901 = vpop.f32.mrb[0].mxu0
        %5902 = vdwg.mxu0
        %v5903 = vmul.f32 %v5810, %v5810
        %v5904 = vmul.f32 %v5816, %v5816
        %v5905 = vmul.f32 %v5822, %v5822
        %v5906 = vmul.f32 %v5828, %v5828
        %v5907 = vmul.f32 %v5834, %v5834
        %v5908 = vmul.f32 %v5840, %v5840
        %v5909 = vmul.f32 %v5846, %v5846
        %v5910 = vmul.f32 %v5852, %v5852
        %v5911 = vmul.f32 %v5858, %v5858
        %v5912 = vmul.f32 %v5864, %v5864
        %v5913 = vmul.f32 %v5870, %v5870
        %v5914 = vmul.f32 %v5876, %v5876
        %v5915 = vmul.f32 %v5882, %v5882
        %v5916 = vmul.f32 %v5888, %v5888
        %v5917 = vmul.f32 %v5894, %v5894
        %v5918 = vmul.f32 %v5900, %v5900
        %5919 = vadd.xlane.f32.xlu0 %v5903
        %v5920 = vpop.xlane.xlu0 %5919
        %5921 = vadd.xlane.f32.xlu0 %v5904
        %v5922 = vpop.xlane.xlu0 %5921
        %5923 = vadd.xlane.f32.xlu0 %v5905
        %v5924 = vpop.xlane.xlu0 %5923
        %5925 = vadd.xlane.f32.xlu0 %v5906
        %v5926 = vpop.xlane.xlu0 %5925
        %5927 = vadd.xlane.f32.xlu0 %v5907
        %v5928 = vpop.xlane.xlu0 %5927
        %5929 = vadd.xlane.f32.xlu0 %v5908
        %v5930 = vpop.xlane.xlu0 %5929
        %5931 = vadd.xlane.f32.xlu0 %v5909
        %v5932 = vpop.xlane.xlu0 %5931
        %5933 = vadd.xlane.f32.xlu0 %v5910
        %v5934 = vpop.xlane.xlu0 %5933
        %5935 = vadd.xlane.f32.xlu0 %v5911
        %v5936 = vpop.xlane.xlu0 %5935
        %5937 = vadd.xlane.f32.xlu0 %v5912
        %v5938 = vpop.xlane.xlu0 %5937
        %5939 = vadd.xlane.f32.xlu0 %v5913
        %v5940 = vpop.xlane.xlu0 %5939
        %5941 = vadd.xlane.f32.xlu0 %v5914
        %v5942 = vpop.xlane.xlu0 %5941
        %5943 = vadd.xlane.f32.xlu0 %v5915
        %v5944 = vpop.xlane.xlu0 %5943
        %5945 = vadd.xlane.f32.xlu0 %v5916
        %v5946 = vpop.xlane.xlu0 %5945
        %5947 = vadd.xlane.f32.xlu0 %v5917
        %v5948 = vpop.xlane.xlu0 %5947
        %5949 = vadd.xlane.f32.xlu0 %v5918
        %v5950 = vpop.xlane.xlu0 %5949
        %v5951 = vmax.f32 %v5920, 1e-24
        %v5952 = vmax.f32 %v5922, 1e-24
        %v5953 = vmax.f32 %v5924, 1e-24
        %v5954 = vmax.f32 %v5926, 1e-24
        %v5955 = vmax.f32 %v5928, 1e-24
        %v5956 = vmax.f32 %v5930, 1e-24
        %v5957 = vmax.f32 %v5932, 1e-24
        %v5958 = vmax.f32 %v5934, 1e-24
        %v5959 = vmax.f32 %v5936, 1e-24
        %v5960 = vmax.f32 %v5938, 1e-24
        %v5961 = vmax.f32 %v5940, 1e-24
        %v5962 = vmax.f32 %v5942, 1e-24
        %v5963 = vmax.f32 %v5944, 1e-24
        %v5964 = vmax.f32 %v5946, 1e-24
        %v5965 = vmax.f32 %v5948, 1e-24
        %v5966 = vmax.f32 %v5950, 1e-24
        %v5967 = vrsqrt.pop %v5951
        %v5968 = vrsqrt.pop %v5952
        %v5969 = vrsqrt.pop %v5953
        %v5970 = vrsqrt.pop %v5954
        %v5971 = vrsqrt.pop %v5955
        %v5972 = vrsqrt.pop %v5956
        %v5973 = vrsqrt.pop %v5957
        %v5974 = vrsqrt.pop %v5958
        %v5975 = vrsqrt.pop %v5959
        %v5976 = vrsqrt.pop %v5960
        %v5977 = vrsqrt.pop %v5961
        %v5978 = vrsqrt.pop %v5962
        %v5979 = vrsqrt.pop %v5963
        %v5980 = vrsqrt.pop %v5964
        %v5981 = vrsqrt.pop %v5965
        %v5982 = vrsqrt.pop %v5966
        %v5983 = vmul.f32 %v5810, %v5967
        %v5984 = vmul.f32 %v5816, %v5968
        %v5985 = vmul.f32 %v5822, %v5969
        %v5986 = vmul.f32 %v5828, %v5970
        %v5987 = vmul.f32 %v5834, %v5971
        %v5988 = vmul.f32 %v5840, %v5972
        %v5989 = vmul.f32 %v5846, %v5973
        %v5990 = vmul.f32 %v5852, %v5974
        %v5991 = vmul.f32 %v5858, %v5975
        %v5992 = vmul.f32 %v5864, %v5976
        %v5993 = vmul.f32 %v5870, %v5977
        %v5994 = vmul.f32 %v5876, %v5978
        %v5995 = vmul.f32 %v5882, %v5979
        %v5996 = vmul.f32 %v5888, %v5980
        %v5997 = vmul.f32 %v5894, %v5981
        %v5998 = vmul.f32 %v5900, %v5982
        %5999 = vst [vmem:[%s260] sm:$0xff] %v5983
        %6000 = vst [vmem:[%s260 + $0x8] sm:$0xff] %v5984
        %6001 = vst [vmem:[%s260 + $0x10] sm:$0xff] %v5985
        %6002 = vst [vmem:[%s260 + $0x18] sm:$0xff] %v5986
        %6003 = vst [vmem:[%s260 + $0x20] sm:$0xff] %v5987
        %6004 = vst [vmem:[%s260 + $0x28] sm:$0xff] %v5988
        %6005 = vst [vmem:[%s260 + $0x30] sm:$0xff] %v5989
        %6006 = vst [vmem:[%s260 + $0x38] sm:$0xff] %v5990
        %6007 = vst [vmem:[%s260 + $0x40] sm:$0xff] %v5991
        %6008 = vst [vmem:[%s260 + $0x48] sm:$0xff] %v5992
        %6009 = vst [vmem:[%s260 + $0x50] sm:$0xff] %v5993
        %6010 = vst [vmem:[%s260 + $0x58] sm:$0xff] %v5994
        %6011 = vst [vmem:[%s260 + $0x60] sm:$0xff] %v5995
        %6012 = vst [vmem:[%s260 + $0x68] sm:$0xff] %v5996
        %6013 = vst [vmem:[%s260 + $0x70] sm:$0xff] %v5997
        %6014 = vst [vmem:[%s260 + $0x78] sm:$0xff] %v5998
        %s6015 = sand.u32 %s160, 1
        %s6016 = scalar_lea.sflag [#allocation4], %s6015
        %s6017 = sand.u32 %s160, 1
        %s6018 = smul.addr %s6017, 128
        %s6019 = scalar_lea.vmem [#allocation5], %s6018
        // Predicated region
        $region49: #{tpu_custom_call.1} parent=43 // pred_check
          %p6020 = pneg %p170
        $region50: #{tpu_custom_call.1} parent=43 // pred_check_branch
          %6022 = sbr.rel (%p6020) target = $region52
        $region51: #{tpu_custom_call.1} parent=43 // pred_region
          %s6023 = smul.u32 16, %s21
          %s6025 = ssub.s32 2048, 2048
          %6026 = vsyncadd %s6016, %s6025
          %s6027 = smul.addr %s6023, 128
          %s6028 = scalar_lea.hbm %s6, %s6027
          %s6029 = sshll.u32 %s6019, 4
          %s6030 = int_to_ptr.vmem [resolvable:$true] %s6029
          %6035 = dma.vmem_to_hbm [thread:$0]  %s6030, 2048, %s6028, %s6016, 128, 128, 8
        $region52: #{tpu_custom_call.1} parent=43 // pred_fallthru
          _
      $region44: #{tpu_custom_call.1} parent=5 // pred_fallthru
        _
      %p6036 = scmp.le.s32.totalorder 2, %s16
      // Predicated region
      $region53: #{tpu_custom_call.1} parent=5 // pred_check
        %p6037 = pneg %p6036
      $region54: #{tpu_custom_call.1} parent=5 // pred_check_branch
        %6039 = sbr.rel (%p6037) target = $region56
      $region55: #{tpu_custom_call.1} parent=5 // pred_region
        %s6040 = ssub.s32 %s16, 2
        // Predicated region
        $region57: #{tpu_custom_call.1} parent=55 // pred_check
          %p6041 = pneg %p176
        $region58: #{tpu_custom_call.1} parent=55 // pred_check_branch
          %6043 = sbr.rel (%p6041) target = $region60
        $region59: #{tpu_custom_call.1} parent=55 // pred_region
          %s6044 = sand.u32 %s161, 1
          %s6045 = scalar_lea.sflag [#allocation4], %s6044
          %s6046 = sand.u32 %s161, 1
          %s6047 = smul.addr %s6046, 128
          %s6048 = scalar_lea.vmem [#allocation5], %s6047
          %6049 = dma.done %s6045, 2048
        $region60: #{tpu_custom_call.1} parent=55 // pred_fallthru
          _
      $region56: #{tpu_custom_call.1} parent=5 // pred_fallthru
        _
    $region6: #{tpu_custom_call.1} parent=1 // loop_footer
      %s20 = sadd.s32 1, %s16
    $region7: #{tpu_custom_call.1} parent=1 // loop_footer_branch
      %15 = sbr.rel target = $region3
    $region8: #{tpu_custom_call.1} parent=1 // loop_exit
      _
    %6050 = vsyncpa [#allocation3], 1
    %s6051 = scalar_lea.sflag [#allocation3], 1
    %6052 = vsyncpa %s6051, 1
    %6053 = vsyncpa [#allocation4], 1
    %s6054 = scalar_lea.sflag [#allocation4], 1
    %6055 = vsyncpa %s6054, 1

</llo_original>
